<compile_context>
chip_gen: v6e
topology: v6e:2x2x1
jax: 0.10.0
libtpu: 0.0.40
codegen_flags: <defaults>
</compile_context>

<pallas_src>
import functools

import jax
import jax.numpy as jnp
import numpy as np
from jax import lax
from jax.experimental import pallas as pl
from jax.experimental.pallas import tpu as pltpu


# ---------------------------------------------------------------------------
# Small helpers
# ---------------------------------------------------------------------------
def _round_up(v, m):
    return (v + m - 1) // m * m


def _pick_m_tile(M):
    """Row tile: 256 for large M (padded to a multiple of 256), otherwise a
    single 8-aligned full tile.  Keeps per-tile VMEM small enough for v7x."""
    if M >= 256:
        return 256, _round_up(M, 256)
    mp = _round_up(M, 8)
    return mp, mp


def _pick_k_tile(K):
    Kp = _round_up(K, 128)
    for t in (512, 256, 128):
        if Kp % t == 0:
            return t, Kp
    return 128, Kp  # unreachable (Kp is a multiple of 128)


# ---------------------------------------------------------------------------
# Pallas kernels
# ---------------------------------------------------------------------------
def _gemm_bias_kernel(x_ref, w_ref, b_ref, o_ref, acc_ref, *, negative_slope,
                      apply_act):
    """(tm, tn) output tile; accumulate over the innermost K grid axis."""
    @pl.when(pl.program_id(2) == 0)
    def _init():
        acc_ref[...] = jnp.zeros_like(acc_ref)

    acc_ref[...] += jnp.dot(x_ref[...], w_ref[...],
                            preferred_element_type=jnp.float32)

    @pl.when(pl.program_id(2) == pl.num_programs(2) - 1)
    def _finalize():
        acc = acc_ref[...] + b_ref[...]
        if apply_act:
            acc = jnp.where(acc >= 0, acc, negative_slope * acc)
        o_ref[...] = acc.astype(o_ref.dtype)


def _inorm_lrelu_kernel(x_ref, o_ref, *, eps, negative_slope):
    # Block is (1, H*W, C): one sample; spatial on sublanes, channels on lanes.
    x = x_ref[...].astype(jnp.float32)
    mean = jnp.mean(x, axis=1, keepdims=True)
    xc = x - mean
    var = jnp.mean(xc * xc, axis=1, keepdims=True)   # biased, like InstanceNorm2d
    y = xc * lax.rsqrt(var + eps)
    y = jnp.where(y >= 0, y, negative_slope * y)
    o_ref[...] = y.astype(o_ref.dtype)


# ---------------------------------------------------------------------------
# Conv2d = im2col (NHWC) + tiled Pallas GEMM (+ fused bias / LeakyReLU)
# ---------------------------------------------------------------------------
def _im2col_nhwc(x, kh, kw, stride, pad):
    """(N, H, W, C) -> (N*Hout*Wout, kh*kw*C); column order matches weights
    flattened as (kh, kw, Cin, Cout)."""
    N, H, W, C = x.shape
    xp = jnp.pad(x, ((0, 0), (pad, pad), (pad, pad), (0, 0)))
    Hout = (H + 2 * pad - kh) // stride + 1
    Wout = (W + 2 * pad - kw) // stride + 1
    taps = []
    for i in range(kh):
        for j in range(kw):
            taps.append(
                lax.slice(
                    xp,
                    (0, i, j, 0),
                    (N, i + (Hout - 1) * stride + 1,
                     j + (Wout - 1) * stride + 1, C),
                    (1, stride, stride, 1),
                ))                                   # (N, Hout, Wout, C)
    col = jnp.stack(taps, axis=3)                    # (N, Hout, Wout, kh*kw, C)
    col = col.reshape(N * Hout * Wout, kh * kw * C)
    return col, Hout, Wout


def conv2d_pallas(x_nhwc, w, b, stride, pad, *, negative_slope=0.2,
                  apply_act=False):
    """PyTorch Conv2d (cross-correlation) on NHWC activations.
    x_nhwc: (N, H, W, Cin); w: (Cout, Cin, kh, kw); returns (N, Hout, Wout, Cout)."""
    N = x_nhwc.shape[0]
    Cout, Cin, kh, kw = w.shape

    # bf16 im2col (half the HBM bytes for the 16x patch buffer).
    cols, Hout, Wout = _im2col_nhwc(x_nhwc.astype(jnp.bfloat16), kh, kw,
                                    stride, pad)
    M, K = cols.shape

    tm, M_pad = _pick_m_tile(M)
    tk, K_pad = _pick_k_tile(K)
    CP = _round_up(Cout, 128)       # lane-dense output (no masked stores)
    tn = 128

    cols_p = jnp.pad(cols, ((0, M_pad - M), (0, K_pad - K)))
    w2d = w.transpose(2, 3, 1, 0).reshape(kh * kw * Cin, Cout)
    w_p = jnp.pad(w2d, ((0, K_pad - K), (0, CP - Cout))).astype(jnp.bfloat16)
    b_p = jnp.pad(b, (0, CP - Cout)).reshape(1, CP).astype(jnp.float32)

    grid = (M_pad // tm, CP // tn, K_pad // tk)
    kern = functools.partial(_gemm_bias_kernel, negative_slope=negative_slope,
                             apply_act=apply_act)
    out = pl.pallas_call(
        kern,
        grid=grid,
        in_specs=[
            pl.BlockSpec((tm, tk), lambda i, j, k: (i, k)),
            pl.BlockSpec((tk, tn), lambda i, j, k: (k, j)),
            pl.BlockSpec((1, tn), lambda i, j, k: (0, j)),
        ],
        out_specs=pl.BlockSpec((tm, tn), lambda i, j, k: (i, j)),
        out_shape=jax.ShapeDtypeStruct((M_pad, CP), jnp.float32),
        scratch_shapes=[pltpu.VMEM((tm, tn), jnp.float32)],
        compiler_params=pltpu.CompilerParams(
            dimension_semantics=("parallel", "parallel", "arbitrary")),
    )(cols_p, w_p, b_p)

    return out[:M, :Cout].reshape(N, Hout, Wout, Cout)


# ---------------------------------------------------------------------------
# Fused InstanceNorm2d + LeakyReLU (NHWC activations)
# ---------------------------------------------------------------------------
def instance_norm_lrelu_pallas(x_nhwc, *, eps=1e-5, negative_slope=0.2):
    N, H, W, C = x_nhwc.shape
    rows = x_nhwc.reshape(N, H * W, C)
    kern = functools.partial(_inorm_lrelu_kernel, eps=eps,
                             negative_slope=negative_slope)
    out = pl.pallas_call(
        kern,
        grid=(N,),
        in_specs=[pl.BlockSpec((1, H * W, C), lambda n: (n, 0, 0))],
        out_specs=pl.BlockSpec((1, H * W, C), lambda n: (n, 0, 0)),
        out_shape=jax.ShapeDtypeStruct((N, H * W, C), jnp.float32),
        compiler_params=pltpu.CompilerParams(
            dimension_semantics=("parallel",)),
    )(rows)
    return out.reshape(N, H, W, C)


# ---------------------------------------------------------------------------
# NLayerDiscriminator: parameter init + forward
# ---------------------------------------------------------------------------
def init_params(key, input_nc, ndf=8, n_layers=3):
    """Same layer structure as the PyTorch __init__ (InstanceNorm2d => all
    convs carry a bias)."""
    cfg = [(input_nc, ndf, 2)]
    nf_mult = 1
    for n in range(1, n_layers):
        nf_mult_prev = nf_mult
        nf_mult = min(2 ** n, 8)
        cfg.append((ndf * nf_mult_prev, ndf * nf_mult, 2))
    nf_mult_prev = nf_mult
    nf_mult = min(2 ** n_layers, 8)
    cfg.append((ndf * nf_mult_prev, ndf * nf_mult, 1))
    cfg.append((ndf * nf_mult, 1, 1))

    weights, biases, strides = [], [], []
    for cin, cout, stride in cfg:
        key, kw_, kb_ = jax.random.split(key, 3)
        weights.append(jax.random.normal(kw_, (cout, cin, 4, 4), jnp.float32) * 0.05)
        biases.append(jax.random.normal(kb_, (cout,), jnp.float32) * 0.05)
        strides.append(stride)
    return tuple(weights), tuple(biases), tuple(strides)


def nlayer_discriminator_forward(x_nchw, weights, biases, strides):
    """x_nchw: (N, Cin, H, W); returns (N, 1, Hout, Wout) like the PyTorch module."""
    x = jnp.transpose(x_nchw, (0, 2, 3, 1))        # NHWC, kept between layers
    # layer 0: Conv -> LeakyReLU(0.2)  (activation fused into the GEMM epilogue)
    x = conv2d_pallas(x, weights[0], biases[0], strides[0], 1, apply_act=True)
    # middle layers: Conv -> InstanceNorm2d -> LeakyReLU(0.2)
    for li in range(1, len(weights) - 1):
        x = conv2d_pallas(x, weights[li], biases[li], strides[li], 1)
        x = instance_norm_lrelu_pallas(x)
    # final layer: Conv only
    x = conv2d_pallas(x, weights[-1], biases[-1], strides[-1], 1)
    return jnp.transpose(x, (0, 3, 1, 2))          # back to NCHW


forward_jit = jax.jit(nlayer_discriminator_forward, static_argnames=("strides",))


# ---------------------------------------------------------------------------
# Pure-JAX f32 reference (sanity check of the Pallas path)
# ---------------------------------------------------------------------------
def _ref_forward(x, weights, biases, strides):
    def conv(v, w, b, s):
        y = lax.conv_general_dilated(
            v, w, (s, s), [(1, 1), (1, 1)],
            dimension_numbers=("NCHW", "OIHW", "NCHW"))
        return y + b.reshape(1, -1, 1, 1)

    def lrelu(v):
        return jnp.where(v >= 0, v, 0.2 * v)

    def inorm(v):
        m = jnp.mean(v, axis=(2, 3), keepdims=True)
        var = jnp.mean((v - m) ** 2, axis=(2, 3), keepdims=True)
        return (v - m) * lax.rsqrt(var + 1e-5)

    x = lrelu(conv(x, weights[0], biases[0], strides[0]))
    for li in range(1, len(weights) - 1):
        x = lrelu(inorm(conv(x, weights[li], biases[li], strides[li])))
    return conv(x, weights[-1], biases[-1], strides[-1])


if __name__ == "__main__":
    key = jax.random.PRNGKey(0)
    kx, kp = jax.random.split(key)

    # Small shapes consistent with the module: k=4, 3x stride-2 + 2x stride-1
    # needs H, W >= 32.
    N, input_nc, H, W = 2, 3, 32, 32
    ndf, n_layers = 8, 3

    x = jax.random.normal(kx, (N, input_nc, H, W), jnp.float32)
    weights, biases, strides = init_params(kp, input_nc, ndf=ndf,
                                           n_layers=n_layers)

    out = jax.block_until_ready(forward_jit(x, weights, biases, strides=strides))
    ref = jax.block_until_ready(_ref_forward(x, weights, biases, strides))

    assert out.shape == (N, 1, 2, 2), out.shape
    np.testing.assert_allclose(np.asarray(out), np.asarray(ref),
                               rtol=5e-2, atol=5e-2)
    print("KERNEL_OK")
</pallas_src>

<mosaic_0001>
module attributes {stable_mosaic.version = 11 : i64} {
  func.func @_gemm_bias_kernel(%arg0: i32, %arg1: i32, %arg2: i32, %arg3: memref<256x128xbf16, #tpu.memory_space<vmem>>, %arg4: memref<128x128xbf16, #tpu.memory_space<vmem>>, %arg5: memref<1x128xf32, #tpu.memory_space<vmem>>, %arg6: memref<256x128xf32, #tpu.memory_space<vmem>>, %arg7: memref<256x128xf32, #tpu.memory_space<vmem>>) attributes {dimension_semantics = [#tpu.dimension_semantics<parallel>, #tpu.dimension_semantics<parallel>, #tpu.dimension_semantics<arbitrary>], iteration_bounds = array<i64: 2, 1, 1>, scalar_prefetch = 0 : i64, scratch_operands = 1 : i64, tpu.core_type = #tpu.core_type<tc>, window_params = [{transform_indices = @transform_0, window_bounds = array<i64: 256, 128>}, {transform_indices = @transform_1, window_bounds = array<i64: 128, 128>}, {transform_indices = @transform_2, window_bounds = array<i64: 1, 128>}, {transform_indices = @transform_3, window_bounds = array<i64: 256, 128>}]} {
    %c0_i32 = arith.constant 0 : i32
    %0 = arith.cmpi eq, %arg2, %c0_i32 : i32
    %1 = arith.extui %0 : i1 to i32
    %c0_i32_0 = arith.constant 0 : i32
    %2 = arith.cmpi ne, %1, %c0_i32_0 : i32
    scf.if %2 {
      %cst_10 = arith.constant 0.000000e+00 : f32
      %12 = vector.broadcast %cst_10 : f32 to vector<256x128xf32>
      %c0_11 = arith.constant 0 : index
      %c0_12 = arith.constant 0 : index
      %13 = vector.load %arg7[%c0_11, %c0_12] : memref<256x128xf32, #tpu.memory_space<vmem>>, vector<256x128xf32>
      tpu.vector_store %arg7[%c0_11, %c0_12], %12 {strides = array<i32>} : memref<256x128xf32, #tpu.memory_space<vmem>>, vector<256x128xf32>,
    } else {
    }
    %c0 = arith.constant 0 : index
    %c0_1 = arith.constant 0 : index
    %3 = vector.load %arg7[%c0, %c0_1] : memref<256x128xf32, #tpu.memory_space<vmem>>, vector<256x128xf32>
    %c0_2 = arith.constant 0 : index
    %c0_3 = arith.constant 0 : index
    %4 = vector.load %arg3[%c0_2, %c0_3] : memref<256x128xbf16, #tpu.memory_space<vmem>>, vector<256x128xbf16>
    %c0_4 = arith.constant 0 : index
    %c0_5 = arith.constant 0 : index
    %5 = vector.load %arg4[%c0_4, %c0_5] : memref<128x128xbf16, #tpu.memory_space<vmem>>, vector<128x128xbf16>
    %cst = arith.constant dense<0.000000e+00> : vector<256x128xf32>
    %6 = tpu.matmul %4, %5, %cst {dimension_numbers = #tpu.dot_dimension_numbers<[1], [0], [0], [1], [0, 0, 1, 1], [], []>} : vector<256x128xbf16>, vector<128x128xbf16>, vector<256x128xf32> -> vector<256x128xf32>
    %7 = arith.addf %3, %6 : vector<256x128xf32>
    %c0_6 = arith.constant 0 : index
    %c0_7 = arith.constant 0 : index
    %8 = vector.load %arg7[%c0_6, %c0_7] : memref<256x128xf32, #tpu.memory_space<vmem>>, vector<256x128xf32>
    tpu.vector_store %arg7[%c0_6, %c0_7], %7 {strides = array<i32>} : memref<256x128xf32, #tpu.memory_space<vmem>>, vector<256x128xf32>,
    %c0_i32_8 = arith.constant 0 : i32
    %9 = arith.cmpi eq, %arg2, %c0_i32_8 : i32
    %10 = arith.extui %9 : i1 to i32
    %c0_i32_9 = arith.constant 0 : i32
    %11 = arith.cmpi ne, %10, %c0_i32_9 : i32
    scf.if %11 {
      %c0_10 = arith.constant 0 : index
      %c0_11 = arith.constant 0 : index
      %12 = vector.load %arg7[%c0_10, %c0_11] : memref<256x128xf32, #tpu.memory_space<vmem>>, vector<256x128xf32>
      %c0_12 = arith.constant 0 : index
      %c0_13 = arith.constant 0 : index
      %13 = vector.load %arg5[%c0_12, %c0_13] : memref<1x128xf32, #tpu.memory_space<vmem>>, vector<1x128xf32>
      %14 = vector.broadcast %13 : vector<1x128xf32> to vector<256x128xf32>
      %15 = arith.addf %12, %14 : vector<256x128xf32>
      %cst_14 = arith.constant 0.000000e+00 : f32
      %16 = vector.broadcast %cst_14 : f32 to vector<256x128xf32>
      %17 = arith.cmpf oge, %15, %16 : vector<256x128xf32>
      %cst_15 = arith.constant 2.000000e-01 : f32
      %18 = vector.broadcast %cst_15 : f32 to vector<256x128xf32>
      %19 = arith.mulf %18, %15 : vector<256x128xf32>
      %20 = arith.select %17, %15, %19 : vector<256x128xi1>, vector<256x128xf32>
      %c0_16 = arith.constant 0 : index
      %c0_17 = arith.constant 0 : index
      %21 = vector.load %arg6[%c0_16, %c0_17] : memref<256x128xf32, #tpu.memory_space<vmem>>, vector<256x128xf32>
      tpu.vector_store %arg6[%c0_16, %c0_17], %20 {strides = array<i32>} : memref<256x128xf32, #tpu.memory_space<vmem>>, vector<256x128xf32>,
    } else {
    }
    return
  }
  func.func @transform_0(%arg0: i32, %arg1: i32, %arg2: i32) -> (i32, i32) {
    %c0_i32 = arith.constant 0 : i32
    return %arg0, %arg2 : i32, i32
  }
  func.func @transform_1(%arg0: i32, %arg1: i32, %arg2: i32) -> (i32, i32) {
    %c0_i32 = arith.constant 0 : i32
    return %arg2, %arg1 : i32, i32
  }
  func.func @transform_2(%arg0: i32, %arg1: i32, %arg2: i32) -> (i32, i32) {
    %c0_i32 = arith.constant 0 : i32
    %c0_i32_0 = arith.constant 0 : i32
    return %c0_i32, %arg1 : i32, i32
  }
  func.func @transform_3(%arg0: i32, %arg1: i32, %arg2: i32) -> (i32, i32) {
    %c0_i32 = arith.constant 0 : i32
    return %arg0, %arg1 : i32, i32
  }
}

module attributes {stable_mosaic.version = 11 : i64} {
  func.func @_gemm_bias_kernel(%arg0: i32, %arg1: i32, %arg2: i32, %arg3: memref<128x128xbf16, #tpu.memory_space<vmem>>, %arg4: memref<128x128xbf16, #tpu.memory_space<vmem>>, %arg5: memref<1x128xf32, #tpu.memory_space<vmem>>, %arg6: memref<128x128xf32, #tpu.memory_space<vmem>>, %arg7: memref<128x128xf32, #tpu.memory_space<vmem>>) attributes {dimension_semantics = [#tpu.dimension_semantics<parallel>, #tpu.dimension_semantics<parallel>, #tpu.dimension_semantics<arbitrary>], iteration_bounds = array<i64: 1, 1, 1>, scalar_prefetch = 0 : i64, scratch_operands = 1 : i64, tpu.core_type = #tpu.core_type<tc>, window_params = [{transform_indices = @transform_0, window_bounds = array<i64: 128, 128>}, {transform_indices = @transform_1, window_bounds = array<i64: 128, 128>}, {transform_indices = @transform_2, window_bounds = array<i64: 1, 128>}, {transform_indices = @transform_3, window_bounds = array<i64: 128, 128>}]} {
    %c0_i32 = arith.constant 0 : i32
    %0 = arith.cmpi eq, %arg2, %c0_i32 : i32
    %1 = arith.extui %0 : i1 to i32
    %c0_i32_0 = arith.constant 0 : i32
    %2 = arith.cmpi ne, %1, %c0_i32_0 : i32
    scf.if %2 {
      %cst_10 = arith.constant 0.000000e+00 : f32
      %12 = vector.broadcast %cst_10 : f32 to vector<128x128xf32>
      %c0_11 = arith.constant 0 : index
      %c0_12 = arith.constant 0 : index
      %13 = vector.load %arg7[%c0_11, %c0_12] : memref<128x128xf32, #tpu.memory_space<vmem>>, vector<128x128xf32>
      tpu.vector_store %arg7[%c0_11, %c0_12], %12 {strides = array<i32>} : memref<128x128xf32, #tpu.memory_space<vmem>>, vector<128x128xf32>,
    } else {
    }
    %c0 = arith.constant 0 : index
    %c0_1 = arith.constant 0 : index
    %3 = vector.load %arg7[%c0, %c0_1] : memref<128x128xf32, #tpu.memory_space<vmem>>, vector<128x128xf32>
    %c0_2 = arith.constant 0 : index
    %c0_3 = arith.constant 0 : index
    %4 = vector.load %arg3[%c0_2, %c0_3] : memref<128x128xbf16, #tpu.memory_space<vmem>>, vector<128x128xbf16>
    %c0_4 = arith.constant 0 : index
    %c0_5 = arith.constant 0 : index
    %5 = vector.load %arg4[%c0_4, %c0_5] : memref<128x128xbf16, #tpu.memory_space<vmem>>, vector<128x128xbf16>
    %cst = arith.constant dense<0.000000e+00> : vector<128x128xf32>
    %6 = tpu.matmul %4, %5, %cst {dimension_numbers = #tpu.dot_dimension_numbers<[1], [0], [0], [1], [0, 0, 1, 1], [], []>} : vector<128x128xbf16>, vector<128x128xbf16>, vector<128x128xf32> -> vector<128x128xf32>
    %7 = arith.addf %3, %6 : vector<128x128xf32>
    %c0_6 = arith.constant 0 : index
    %c0_7 = arith.constant 0 : index
    %8 = vector.load %arg7[%c0_6, %c0_7] : memref<128x128xf32, #tpu.memory_space<vmem>>, vector<128x128xf32>
    tpu.vector_store %arg7[%c0_6, %c0_7], %7 {strides = array<i32>} : memref<128x128xf32, #tpu.memory_space<vmem>>, vector<128x128xf32>,
    %c0_i32_8 = arith.constant 0 : i32
    %9 = arith.cmpi eq, %arg2, %c0_i32_8 : i32
    %10 = arith.extui %9 : i1 to i32
    %c0_i32_9 = arith.constant 0 : i32
    %11 = arith.cmpi ne, %10, %c0_i32_9 : i32
    scf.if %11 {
      %c0_10 = arith.constant 0 : index
      %c0_11 = arith.constant 0 : index
      %12 = vector.load %arg7[%c0_10, %c0_11] : memref<128x128xf32, #tpu.memory_space<vmem>>, vector<128x128xf32>
      %c0_12 = arith.constant 0 : index
      %c0_13 = arith.constant 0 : index
      %13 = vector.load %arg5[%c0_12, %c0_13] : memref<1x128xf32, #tpu.memory_space<vmem>>, vector<1x128xf32>
      %14 = vector.broadcast %13 : vector<1x128xf32> to vector<128x128xf32>
      %15 = arith.addf %12, %14 : vector<128x128xf32>
      %c0_14 = arith.constant 0 : index
      %c0_15 = arith.constant 0 : index
      %16 = vector.load %arg6[%c0_14, %c0_15] : memref<128x128xf32, #tpu.memory_space<vmem>>, vector<128x128xf32>
      tpu.vector_store %arg6[%c0_14, %c0_15], %15 {strides = array<i32>} : memref<128x128xf32, #tpu.memory_space<vmem>>, vector<128x128xf32>,
    } else {
    }
    return
  }
  func.func @transform_0(%arg0: i32, %arg1: i32, %arg2: i32) -> (i32, i32) {
    %c0_i32 = arith.constant 0 : i32
    return %arg0, %arg2 : i32, i32
  }
  func.func @transform_1(%arg0: i32, %arg1: i32, %arg2: i32) -> (i32, i32) {
    %c0_i32 = arith.constant 0 : i32
    return %arg2, %arg1 : i32, i32
  }
  func.func @transform_2(%arg0: i32, %arg1: i32, %arg2: i32) -> (i32, i32) {
    %c0_i32 = arith.constant 0 : i32
    %c0_i32_0 = arith.constant 0 : i32
    return %c0_i32, %arg1 : i32, i32
  }
  func.func @transform_3(%arg0: i32, %arg1: i32, %arg2: i32) -> (i32, i32) {
    %c0_i32 = arith.constant 0 : i32
    return %arg0, %arg1 : i32, i32
  }
}

module attributes {stable_mosaic.version = 11 : i64} {
  func.func @_inorm_lrelu_kernel(%arg0: i32, %arg1: memref<1x64x16xf32, #tpu.memory_space<vmem>>, %arg2: memref<1x64x16xf32, #tpu.memory_space<vmem>>) attributes {dimension_semantics = [#tpu.dimension_semantics<parallel>], iteration_bounds = array<i64: 2>, scalar_prefetch = 0 : i64, scratch_operands = 0 : i64, tpu.core_type = #tpu.core_type<tc>, window_params = [{transform_indices = @transform_0, window_bounds = array<i64: 1, 64, 16>}, {transform_indices = @transform_1, window_bounds = array<i64: 1, 64, 16>}]} {
    %c0 = arith.constant 0 : index
    %c0_0 = arith.constant 0 : index
    %c0_1 = arith.constant 0 : index
    %0 = vector.load %arg1[%c0, %c0_0, %c0_1] : memref<1x64x16xf32, #tpu.memory_space<vmem>>, vector<1x64x16xf32>
    %cst = arith.constant dense<0.000000e+00> : vector<1x16xf32>
    %1 = vector.multi_reduction <add>, %0, %cst [1] : vector<1x64x16xf32> to vector<1x16xf32>
    %2 = vector.shape_cast %1 : vector<1x16xf32> to vector<1x1x16xf32>
    %cst_2 = arith.constant 6.400000e+01 : f32
    %3 = vector.broadcast %cst_2 : f32 to vector<1x1x16xf32>
    %4 = arith.divf %2, %3 : vector<1x1x16xf32>
    %5 = vector.broadcast %4 : vector<1x1x16xf32> to vector<1x64x16xf32>
    %6 = arith.subf %0, %5 : vector<1x64x16xf32>
    %7 = arith.mulf %6, %6 : vector<1x64x16xf32>
    %cst_3 = arith.constant dense<0.000000e+00> : vector<1x16xf32>
    %8 = vector.multi_reduction <add>, %7, %cst_3 [1] : vector<1x64x16xf32> to vector<1x16xf32>
    %9 = vector.shape_cast %8 : vector<1x16xf32> to vector<1x1x16xf32>
    %cst_4 = arith.constant 6.400000e+01 : f32
    %10 = vector.broadcast %cst_4 : f32 to vector<1x1x16xf32>
    %11 = arith.divf %9, %10 : vector<1x1x16xf32>
    %cst_5 = arith.constant 9.99999974E-6 : f32
    %12 = vector.broadcast %cst_5 : f32 to vector<1x1x16xf32>
    %13 = arith.addf %11, %12 : vector<1x1x16xf32>
    %14 = math.rsqrt %13 : vector<1x1x16xf32>
    %15 = vector.broadcast %14 : vector<1x1x16xf32> to vector<1x64x16xf32>
    %16 = arith.mulf %6, %15 : vector<1x64x16xf32>
    %cst_6 = arith.constant 0.000000e+00 : f32
    %17 = vector.broadcast %cst_6 : f32 to vector<1x64x16xf32>
    %18 = arith.cmpf oge, %16, %17 : vector<1x64x16xf32>
    %cst_7 = arith.constant 2.000000e-01 : f32
    %19 = vector.broadcast %cst_7 : f32 to vector<1x64x16xf32>
    %20 = arith.mulf %19, %16 : vector<1x64x16xf32>
    %21 = arith.select %18, %16, %20 : vector<1x64x16xi1>, vector<1x64x16xf32>
    %c0_8 = arith.constant 0 : index
    %c0_9 = arith.constant 0 : index
    %c0_10 = arith.constant 0 : index
    %22 = vector.load %arg2[%c0_8, %c0_9, %c0_10] : memref<1x64x16xf32, #tpu.memory_space<vmem>>, vector<1x64x16xf32>
    tpu.vector_store %arg2[%c0_8, %c0_9, %c0_10], %21 {strides = array<i32>} : memref<1x64x16xf32, #tpu.memory_space<vmem>>, vector<1x64x16xf32>,
    return
  }
  func.func @transform_0(%arg0: i32) -> (i32, i32, i32) {
    %c0_i32 = arith.constant 0 : i32
    %c0_i32_0 = arith.constant 0 : i32
    %c0_i32_1 = arith.constant 0 : i32
    return %arg0, %c0_i32, %c0_i32_0 : i32, i32, i32
  }
  func.func @transform_1(%arg0: i32) -> (i32, i32, i32) {
    %c0_i32 = arith.constant 0 : i32
    %c0_i32_0 = arith.constant 0 : i32
    %c0_i32_1 = arith.constant 0 : i32
    return %arg0, %c0_i32, %c0_i32_0 : i32, i32, i32
  }
}

module attributes {stable_mosaic.version = 11 : i64} {
  func.func @_gemm_bias_kernel(%arg0: i32, %arg1: i32, %arg2: i32, %arg3: memref<32x256xbf16, #tpu.memory_space<vmem>>, %arg4: memref<256x128xbf16, #tpu.memory_space<vmem>>, %arg5: memref<1x128xf32, #tpu.memory_space<vmem>>, %arg6: memref<32x128xf32, #tpu.memory_space<vmem>>, %arg7: memref<32x128xf32, #tpu.memory_space<vmem>>) attributes {dimension_semantics = [#tpu.dimension_semantics<parallel>, #tpu.dimension_semantics<parallel>, #tpu.dimension_semantics<arbitrary>], iteration_bounds = array<i64: 1, 1, 1>, scalar_prefetch = 0 : i64, scratch_operands = 1 : i64, tpu.core_type = #tpu.core_type<tc>, window_params = [{transform_indices = @transform_0, window_bounds = array<i64: 32, 256>}, {transform_indices = @transform_1, window_bounds = array<i64: 256, 128>}, {transform_indices = @transform_2, window_bounds = array<i64: 1, 128>}, {transform_indices = @transform_3, window_bounds = array<i64: 32, 128>}]} {
    %c0_i32 = arith.constant 0 : i32
    %0 = arith.cmpi eq, %arg2, %c0_i32 : i32
    %1 = arith.extui %0 : i1 to i32
    %c0_i32_0 = arith.constant 0 : i32
    %2 = arith.cmpi ne, %1, %c0_i32_0 : i32
    scf.if %2 {
      %cst_10 = arith.constant 0.000000e+00 : f32
      %12 = vector.broadcast %cst_10 : f32 to vector<32x128xf32>
      %c0_11 = arith.constant 0 : index
      %c0_12 = arith.constant 0 : index
      %13 = vector.load %arg7[%c0_11, %c0_12] : memref<32x128xf32, #tpu.memory_space<vmem>>, vector<32x128xf32>
      tpu.vector_store %arg7[%c0_11, %c0_12], %12 {strides = array<i32>} : memref<32x128xf32, #tpu.memory_space<vmem>>, vector<32x128xf32>,
    } else {
    }
    %c0 = arith.constant 0 : index
    %c0_1 = arith.constant 0 : index
    %3 = vector.load %arg7[%c0, %c0_1] : memref<32x128xf32, #tpu.memory_space<vmem>>, vector<32x128xf32>
    %c0_2 = arith.constant 0 : index
    %c0_3 = arith.constant 0 : index
    %4 = vector.load %arg3[%c0_2, %c0_3] : memref<32x256xbf16, #tpu.memory_space<vmem>>, vector<32x256xbf16>
    %c0_4 = arith.constant 0 : index
    %c0_5 = arith.constant 0 : index
    %5 = vector.load %arg4[%c0_4, %c0_5] : memref<256x128xbf16, #tpu.memory_space<vmem>>, vector<256x128xbf16>
    %cst = arith.constant dense<0.000000e+00> : vector<32x128xf32>
    %6 = tpu.matmul %4, %5, %cst {dimension_numbers = #tpu.dot_dimension_numbers<[1], [0], [0], [1], [0, 0, 1, 1], [], []>} : vector<32x256xbf16>, vector<256x128xbf16>, vector<32x128xf32> -> vector<32x128xf32>
    %7 = arith.addf %3, %6 : vector<32x128xf32>
    %c0_6 = arith.constant 0 : index
    %c0_7 = arith.constant 0 : index
    %8 = vector.load %arg7[%c0_6, %c0_7] : memref<32x128xf32, #tpu.memory_space<vmem>>, vector<32x128xf32>
    tpu.vector_store %arg7[%c0_6, %c0_7], %7 {strides = array<i32>} : memref<32x128xf32, #tpu.memory_space<vmem>>, vector<32x128xf32>,
    %c0_i32_8 = arith.constant 0 : i32
    %9 = arith.cmpi eq, %arg2, %c0_i32_8 : i32
    %10 = arith.extui %9 : i1 to i32
    %c0_i32_9 = arith.constant 0 : i32
    %11 = arith.cmpi ne, %10, %c0_i32_9 : i32
    scf.if %11 {
      %c0_10 = arith.constant 0 : index
      %c0_11 = arith.constant 0 : index
      %12 = vector.load %arg7[%c0_10, %c0_11] : memref<32x128xf32, #tpu.memory_space<vmem>>, vector<32x128xf32>
      %c0_12 = arith.constant 0 : index
      %c0_13 = arith.constant 0 : index
      %13 = vector.load %arg5[%c0_12, %c0_13] : memref<1x128xf32, #tpu.memory_space<vmem>>, vector<1x128xf32>
      %14 = vector.broadcast %13 : vector<1x128xf32> to vector<32x128xf32>
      %15 = arith.addf %12, %14 : vector<32x128xf32>
      %c0_14 = arith.constant 0 : index
      %c0_15 = arith.constant 0 : index
      %16 = vector.load %arg6[%c0_14, %c0_15] : memref<32x128xf32, #tpu.memory_space<vmem>>, vector<32x128xf32>
      tpu.vector_store %arg6[%c0_14, %c0_15], %15 {strides = array<i32>} : memref<32x128xf32, #tpu.memory_space<vmem>>, vector<32x128xf32>,
    } else {
    }
    return
  }
  func.func @transform_0(%arg0: i32, %arg1: i32, %arg2: i32) -> (i32, i32) {
    %c0_i32 = arith.constant 0 : i32
    return %arg0, %arg2 : i32, i32
  }
  func.func @transform_1(%arg0: i32, %arg1: i32, %arg2: i32) -> (i32, i32) {
    %c0_i32 = arith.constant 0 : i32
    return %arg2, %arg1 : i32, i32
  }
  func.func @transform_2(%arg0: i32, %arg1: i32, %arg2: i32) -> (i32, i32) {
    %c0_i32 = arith.constant 0 : i32
    %c0_i32_0 = arith.constant 0 : i32
    return %c0_i32, %arg1 : i32, i32
  }
  func.func @transform_3(%arg0: i32, %arg1: i32, %arg2: i32) -> (i32, i32) {
    %c0_i32 = arith.constant 0 : i32
    return %arg0, %arg1 : i32, i32
  }
}

module attributes {stable_mosaic.version = 11 : i64} {
  func.func @_inorm_lrelu_kernel(%arg0: i32, %arg1: memref<1x16x32xf32, #tpu.memory_space<vmem>>, %arg2: memref<1x16x32xf32, #tpu.memory_space<vmem>>) attributes {dimension_semantics = [#tpu.dimension_semantics<parallel>], iteration_bounds = array<i64: 2>, scalar_prefetch = 0 : i64, scratch_operands = 0 : i64, tpu.core_type = #tpu.core_type<tc>, window_params = [{transform_indices = @transform_0, window_bounds = array<i64: 1, 16, 32>}, {transform_indices = @transform_1, window_bounds = array<i64: 1, 16, 32>}]} {
    %c0 = arith.constant 0 : index
    %c0_0 = arith.constant 0 : index
    %c0_1 = arith.constant 0 : index
    %0 = vector.load %arg1[%c0, %c0_0, %c0_1] : memref<1x16x32xf32, #tpu.memory_space<vmem>>, vector<1x16x32xf32>
    %cst = arith.constant dense<0.000000e+00> : vector<1x32xf32>
    %1 = vector.multi_reduction <add>, %0, %cst [1] : vector<1x16x32xf32> to vector<1x32xf32>
    %2 = vector.shape_cast %1 : vector<1x32xf32> to vector<1x1x32xf32>
    %cst_2 = arith.constant 1.600000e+01 : f32
    %3 = vector.broadcast %cst_2 : f32 to vector<1x1x32xf32>
    %4 = arith.divf %2, %3 : vector<1x1x32xf32>
    %5 = vector.broadcast %4 : vector<1x1x32xf32> to vector<1x16x32xf32>
    %6 = arith.subf %0, %5 : vector<1x16x32xf32>
    %7 = arith.mulf %6, %6 : vector<1x16x32xf32>
    %cst_3 = arith.constant dense<0.000000e+00> : vector<1x32xf32>
    %8 = vector.multi_reduction <add>, %7, %cst_3 [1] : vector<1x16x32xf32> to vector<1x32xf32>
    %9 = vector.shape_cast %8 : vector<1x32xf32> to vector<1x1x32xf32>
    %cst_4 = arith.constant 1.600000e+01 : f32
    %10 = vector.broadcast %cst_4 : f32 to vector<1x1x32xf32>
    %11 = arith.divf %9, %10 : vector<1x1x32xf32>
    %cst_5 = arith.constant 9.99999974E-6 : f32
    %12 = vector.broadcast %cst_5 : f32 to vector<1x1x32xf32>
    %13 = arith.addf %11, %12 : vector<1x1x32xf32>
    %14 = math.rsqrt %13 : vector<1x1x32xf32>
    %15 = vector.broadcast %14 : vector<1x1x32xf32> to vector<1x16x32xf32>
    %16 = arith.mulf %6, %15 : vector<1x16x32xf32>
    %cst_6 = arith.constant 0.000000e+00 : f32
    %17 = vector.broadcast %cst_6 : f32 to vector<1x16x32xf32>
    %18 = arith.cmpf oge, %16, %17 : vector<1x16x32xf32>
    %cst_7 = arith.constant 2.000000e-01 : f32
    %19 = vector.broadcast %cst_7 : f32 to vector<1x16x32xf32>
    %20 = arith.mulf %19, %16 : vector<1x16x32xf32>
    %21 = arith.select %18, %16, %20 : vector<1x16x32xi1>, vector<1x16x32xf32>
    %c0_8 = arith.constant 0 : index
    %c0_9 = arith.constant 0 : index
    %c0_10 = arith.constant 0 : index
    %22 = vector.load %arg2[%c0_8, %c0_9, %c0_10] : memref<1x16x32xf32, #tpu.memory_space<vmem>>, vector<1x16x32xf32>
    tpu.vector_store %arg2[%c0_8, %c0_9, %c0_10], %21 {strides = array<i32>} : memref<1x16x32xf32, #tpu.memory_space<vmem>>, vector<1x16x32xf32>,
    return
  }
  func.func @transform_0(%arg0: i32) -> (i32, i32, i32) {
    %c0_i32 = arith.constant 0 : i32
    %c0_i32_0 = arith.constant 0 : i32
    %c0_i32_1 = arith.constant 0 : i32
    return %arg0, %c0_i32, %c0_i32_0 : i32, i32, i32
  }
  func.func @transform_1(%arg0: i32) -> (i32, i32, i32) {
    %c0_i32 = arith.constant 0 : i32
    %c0_i32_0 = arith.constant 0 : i32
    %c0_i32_1 = arith.constant 0 : i32
    return %arg0, %c0_i32, %c0_i32_0 : i32, i32, i32
  }
}

module attributes {stable_mosaic.version = 11 : i64} {
  func.func @_gemm_bias_kernel(%arg0: i32, %arg1: i32, %arg2: i32, %arg3: memref<24x512xbf16, #tpu.memory_space<vmem>>, %arg4: memref<512x128xbf16, #tpu.memory_space<vmem>>, %arg5: memref<1x128xf32, #tpu.memory_space<vmem>>, %arg6: memref<24x128xf32, #tpu.memory_space<vmem>>, %arg7: memref<24x128xf32, #tpu.memory_space<vmem>>) attributes {dimension_semantics = [#tpu.dimension_semantics<parallel>, #tpu.dimension_semantics<parallel>, #tpu.dimension_semantics<arbitrary>], iteration_bounds = array<i64: 1, 1, 1>, scalar_prefetch = 0 : i64, scratch_operands = 1 : i64, tpu.core_type = #tpu.core_type<tc>, window_params = [{transform_indices = @transform_0, window_bounds = array<i64: 24, 512>}, {transform_indices = @transform_1, window_bounds = array<i64: 512, 128>}, {transform_indices = @transform_2, window_bounds = array<i64: 1, 128>}, {transform_indices = @transform_3, window_bounds = array<i64: 24, 128>}]} {
    %c0_i32 = arith.constant 0 : i32
    %0 = arith.cmpi eq, %arg2, %c0_i32 : i32
    %1 = arith.extui %0 : i1 to i32
    %c0_i32_0 = arith.constant 0 : i32
    %2 = arith.cmpi ne, %1, %c0_i32_0 : i32
    scf.if %2 {
      %cst_10 = arith.constant 0.000000e+00 : f32
      %12 = vector.broadcast %cst_10 : f32 to vector<24x128xf32>
      %c0_11 = arith.constant 0 : index
      %c0_12 = arith.constant 0 : index
      %13 = vector.load %arg7[%c0_11, %c0_12] : memref<24x128xf32, #tpu.memory_space<vmem>>, vector<24x128xf32>
      tpu.vector_store %arg7[%c0_11, %c0_12], %12 {strides = array<i32>} : memref<24x128xf32, #tpu.memory_space<vmem>>, vector<24x128xf32>,
    } else {
    }
    %c0 = arith.constant 0 : index
    %c0_1 = arith.constant 0 : index
    %3 = vector.load %arg7[%c0, %c0_1] : memref<24x128xf32, #tpu.memory_space<vmem>>, vector<24x128xf32>
    %c0_2 = arith.constant 0 : index
    %c0_3 = arith.constant 0 : index
    %4 = vector.load %arg3[%c0_2, %c0_3] : memref<24x512xbf16, #tpu.memory_space<vmem>>, vector<24x512xbf16>
    %c0_4 = arith.constant 0 : index
    %c0_5 = arith.constant 0 : index
    %5 = vector.load %arg4[%c0_4, %c0_5] : memref<512x128xbf16, #tpu.memory_space<vmem>>, vector<512x128xbf16>
    %cst = arith.constant dense<0.000000e+00> : vector<24x128xf32>
    %6 = tpu.matmul %4, %5, %cst {dimension_numbers = #tpu.dot_dimension_numbers<[1], [0], [0], [1], [0, 0, 1, 1], [], []>} : vector<24x512xbf16>, vector<512x128xbf16>, vector<24x128xf32> -> vector<24x128xf32>
    %7 = arith.addf %3, %6 : vector<24x128xf32>
    %c0_6 = arith.constant 0 : index
    %c0_7 = arith.constant 0 : index
    %8 = vector.load %arg7[%c0_6, %c0_7] : memref<24x128xf32, #tpu.memory_space<vmem>>, vector<24x128xf32>
    tpu.vector_store %arg7[%c0_6, %c0_7], %7 {strides = array<i32>} : memref<24x128xf32, #tpu.memory_space<vmem>>, vector<24x128xf32>,
    %c0_i32_8 = arith.constant 0 : i32
    %9 = arith.cmpi eq, %arg2, %c0_i32_8 : i32
    %10 = arith.extui %9 : i1 to i32
    %c0_i32_9 = arith.constant 0 : i32
    %11 = arith.cmpi ne, %10, %c0_i32_9 : i32
    scf.if %11 {
      %c0_10 = arith.constant 0 : index
      %c0_11 = arith.constant 0 : index
      %12 = vector.load %arg7[%c0_10, %c0_11] : memref<24x128xf32, #tpu.memory_space<vmem>>, vector<24x128xf32>
      %c0_12 = arith.constant 0 : index
      %c0_13 = arith.constant 0 : index
      %13 = vector.load %arg5[%c0_12, %c0_13] : memref<1x128xf32, #tpu.memory_space<vmem>>, vector<1x128xf32>
      %14 = vector.broadcast %13 : vector<1x128xf32> to vector<24x128xf32>
      %15 = arith.addf %12, %14 : vector<24x128xf32>
      %c0_14 = arith.constant 0 : index
      %c0_15 = arith.constant 0 : index
      %16 = vector.load %arg6[%c0_14, %c0_15] : memref<24x128xf32, #tpu.memory_space<vmem>>, vector<24x128xf32>
      tpu.vector_store %arg6[%c0_14, %c0_15], %15 {strides = array<i32>} : memref<24x128xf32, #tpu.memory_space<vmem>>, vector<24x128xf32>,
    } else {
    }
    return
  }
  func.func @transform_0(%arg0: i32, %arg1: i32, %arg2: i32) -> (i32, i32) {
    %c0_i32 = arith.constant 0 : i32
    return %arg0, %arg2 : i32, i32
  }
  func.func @transform_1(%arg0: i32, %arg1: i32, %arg2: i32) -> (i32, i32) {
    %c0_i32 = arith.constant 0 : i32
    return %arg2, %arg1 : i32, i32
  }
  func.func @transform_2(%arg0: i32, %arg1: i32, %arg2: i32) -> (i32, i32) {
    %c0_i32 = arith.constant 0 : i32
    %c0_i32_0 = arith.constant 0 : i32
    return %c0_i32, %arg1 : i32, i32
  }
  func.func @transform_3(%arg0: i32, %arg1: i32, %arg2: i32) -> (i32, i32) {
    %c0_i32 = arith.constant 0 : i32
    return %arg0, %arg1 : i32, i32
  }
}

module attributes {stable_mosaic.version = 11 : i64} {
  func.func @_inorm_lrelu_kernel(%arg0: i32, %arg1: memref<1x9x64xf32, #tpu.memory_space<vmem>>, %arg2: memref<1x9x64xf32, #tpu.memory_space<vmem>>) attributes {dimension_semantics = [#tpu.dimension_semantics<parallel>], iteration_bounds = array<i64: 2>, scalar_prefetch = 0 : i64, scratch_operands = 0 : i64, tpu.core_type = #tpu.core_type<tc>, window_params = [{transform_indices = @transform_0, window_bounds = array<i64: 1, 9, 64>}, {transform_indices = @transform_1, window_bounds = array<i64: 1, 9, 64>}]} {
    %c0 = arith.constant 0 : index
    %c0_0 = arith.constant 0 : index
    %c0_1 = arith.constant 0 : index
    %0 = vector.load %arg1[%c0, %c0_0, %c0_1] : memref<1x9x64xf32, #tpu.memory_space<vmem>>, vector<1x9x64xf32>
    %cst = arith.constant dense<0.000000e+00> : vector<1x64xf32>
    %1 = vector.multi_reduction <add>, %0, %cst [1] : vector<1x9x64xf32> to vector<1x64xf32>
    %2 = vector.shape_cast %1 : vector<1x64xf32> to vector<1x1x64xf32>
    %cst_2 = arith.constant 9.000000e+00 : f32
    %3 = vector.broadcast %cst_2 : f32 to vector<1x1x64xf32>
    %4 = arith.divf %2, %3 : vector<1x1x64xf32>
    %5 = vector.broadcast %4 : vector<1x1x64xf32> to vector<1x9x64xf32>
    %6 = arith.subf %0, %5 : vector<1x9x64xf32>
    %7 = arith.mulf %6, %6 : vector<1x9x64xf32>
    %cst_3 = arith.constant dense<0.000000e+00> : vector<1x64xf32>
    %8 = vector.multi_reduction <add>, %7, %cst_3 [1] : vector<1x9x64xf32> to vector<1x64xf32>
    %9 = vector.shape_cast %8 : vector<1x64xf32> to vector<1x1x64xf32>
    %cst_4 = arith.constant 9.000000e+00 : f32
    %10 = vector.broadcast %cst_4 : f32 to vector<1x1x64xf32>
    %11 = arith.divf %9, %10 : vector<1x1x64xf32>
    %cst_5 = arith.constant 9.99999974E-6 : f32
    %12 = vector.broadcast %cst_5 : f32 to vector<1x1x64xf32>
    %13 = arith.addf %11, %12 : vector<1x1x64xf32>
    %14 = math.rsqrt %13 : vector<1x1x64xf32>
    %15 = vector.broadcast %14 : vector<1x1x64xf32> to vector<1x9x64xf32>
    %16 = arith.mulf %6, %15 : vector<1x9x64xf32>
    %cst_6 = arith.constant 0.000000e+00 : f32
    %17 = vector.broadcast %cst_6 : f32 to vector<1x9x64xf32>
    %18 = arith.cmpf oge, %16, %17 : vector<1x9x64xf32>
    %cst_7 = arith.constant 2.000000e-01 : f32
    %19 = vector.broadcast %cst_7 : f32 to vector<1x9x64xf32>
    %20 = arith.mulf %19, %16 : vector<1x9x64xf32>
    %21 = arith.select %18, %16, %20 : vector<1x9x64xi1>, vector<1x9x64xf32>
    %c0_8 = arith.constant 0 : index
    %c0_9 = arith.constant 0 : index
    %c0_10 = arith.constant 0 : index
    %22 = vector.load %arg2[%c0_8, %c0_9, %c0_10] : memref<1x9x64xf32, #tpu.memory_space<vmem>>, vector<1x9x64xf32>
    tpu.vector_store %arg2[%c0_8, %c0_9, %c0_10], %21 {strides = array<i32>} : memref<1x9x64xf32, #tpu.memory_space<vmem>>, vector<1x9x64xf32>,
    return
  }
  func.func @transform_0(%arg0: i32) -> (i32, i32, i32) {
    %c0_i32 = arith.constant 0 : i32
    %c0_i32_0 = arith.constant 0 : i32
    %c0_i32_1 = arith.constant 0 : i32
    return %arg0, %c0_i32, %c0_i32_0 : i32, i32, i32
  }
  func.func @transform_1(%arg0: i32) -> (i32, i32, i32) {
    %c0_i32 = arith.constant 0 : i32
    %c0_i32_0 = arith.constant 0 : i32
    %c0_i32_1 = arith.constant 0 : i32
    return %arg0, %c0_i32, %c0_i32_0 : i32, i32, i32
  }
}

module attributes {stable_mosaic.version = 11 : i64} {
  func.func @_gemm_bias_kernel(%arg0: i32, %arg1: i32, %arg2: i32, %arg3: memref<8x512xbf16, #tpu.memory_space<vmem>>, %arg4: memref<512x128xbf16, #tpu.memory_space<vmem>>, %arg5: memref<1x128xf32, #tpu.memory_space<vmem>>, %arg6: memref<8x128xf32, #tpu.memory_space<vmem>>, %arg7: memref<8x128xf32, #tpu.memory_space<vmem>>) attributes {dimension_semantics = [#tpu.dimension_semantics<parallel>, #tpu.dimension_semantics<parallel>, #tpu.dimension_semantics<arbitrary>], iteration_bounds = array<i64: 1, 1, 2>, scalar_prefetch = 0 : i64, scratch_operands = 1 : i64, tpu.core_type = #tpu.core_type<tc>, window_params = [{transform_indices = @transform_0, window_bounds = array<i64: 8, 512>}, {transform_indices = @transform_1, window_bounds = array<i64: 512, 128>}, {transform_indices = @transform_2, window_bounds = array<i64: 1, 128>}, {transform_indices = @transform_3, window_bounds = array<i64: 8, 128>}]} {
    %c0_i32 = arith.constant 0 : i32
    %0 = arith.cmpi eq, %arg2, %c0_i32 : i32
    %1 = arith.extui %0 : i1 to i32
    %c0_i32_0 = arith.constant 0 : i32
    %2 = arith.cmpi ne, %1, %c0_i32_0 : i32
    scf.if %2 {
      %cst_9 = arith.constant 0.000000e+00 : f32
      %12 = vector.broadcast %cst_9 : f32 to vector<8x128xf32>
      %c0_10 = arith.constant 0 : index
      %c0_11 = arith.constant 0 : index
      %13 = vector.load %arg7[%c0_10, %c0_11] : memref<8x128xf32, #tpu.memory_space<vmem>>, vector<8x128xf32>
      tpu.vector_store %arg7[%c0_10, %c0_11], %12 {strides = array<i32>} : memref<8x128xf32, #tpu.memory_space<vmem>>, vector<8x128xf32>,
    } else {
    }
    %c0 = arith.constant 0 : index
    %c0_1 = arith.constant 0 : index
    %3 = vector.load %arg7[%c0, %c0_1] : memref<8x128xf32, #tpu.memory_space<vmem>>, vector<8x128xf32>
    %c0_2 = arith.constant 0 : index
    %c0_3 = arith.constant 0 : index
    %4 = vector.load %arg3[%c0_2, %c0_3] : memref<8x512xbf16, #tpu.memory_space<vmem>>, vector<8x512xbf16>
    %c0_4 = arith.constant 0 : index
    %c0_5 = arith.constant 0 : index
    %5 = vector.load %arg4[%c0_4, %c0_5] : memref<512x128xbf16, #tpu.memory_space<vmem>>, vector<512x128xbf16>
    %cst = arith.constant dense<0.000000e+00> : vector<8x128xf32>
    %6 = tpu.matmul %4, %5, %cst {dimension_numbers = #tpu.dot_dimension_numbers<[1], [0], [0], [1], [0, 0, 1, 1], [], []>} : vector<8x512xbf16>, vector<512x128xbf16>, vector<8x128xf32> -> vector<8x128xf32>
    %7 = arith.addf %3, %6 : vector<8x128xf32>
    %c0_6 = arith.constant 0 : index
    %c0_7 = arith.constant 0 : index
    %8 = vector.load %arg7[%c0_6, %c0_7] : memref<8x128xf32, #tpu.memory_space<vmem>>, vector<8x128xf32>
    tpu.vector_store %arg7[%c0_6, %c0_7], %7 {strides = array<i32>} : memref<8x128xf32, #tpu.memory_space<vmem>>, vector<8x128xf32>,
    %c1_i32 = arith.constant 1 : i32
    %9 = arith.cmpi eq, %arg2, %c1_i32 : i32
    %10 = arith.extui %9 : i1 to i32
    %c0_i32_8 = arith.constant 0 : i32
    %11 = arith.cmpi ne, %10, %c0_i32_8 : i32
    scf.if %11 {
      %c0_9 = arith.constant 0 : index
      %c0_10 = arith.constant 0 : index
      %12 = vector.load %arg7[%c0_9, %c0_10] : memref<8x128xf32, #tpu.memory_space<vmem>>, vector<8x128xf32>
      %c0_11 = arith.constant 0 : index
      %c0_12 = arith.constant 0 : index
      %13 = vector.load %arg5[%c0_11, %c0_12] : memref<1x128xf32, #tpu.memory_space<vmem>>, vector<1x128xf32>
      %14 = vector.broadcast %13 : vector<1x128xf32> to vector<8x128xf32>
      %15 = arith.addf %12, %14 : vector<8x128xf32>
      %c0_13 = arith.constant 0 : index
      %c0_14 = arith.constant 0 : index
      %16 = vector.load %arg6[%c0_13, %c0_14] : memref<8x128xf32, #tpu.memory_space<vmem>>, vector<8x128xf32>
      tpu.vector_store %arg6[%c0_13, %c0_14], %15 {strides = array<i32>} : memref<8x128xf32, #tpu.memory_space<vmem>>, vector<8x128xf32>,
    } else {
    }
    return
  }
  func.func @transform_0(%arg0: i32, %arg1: i32, %arg2: i32) -> (i32, i32) {
    %c0_i32 = arith.constant 0 : i32
    return %arg0, %arg2 : i32, i32
  }
  func.func @transform_1(%arg0: i32, %arg1: i32, %arg2: i32) -> (i32, i32) {
    %c0_i32 = arith.constant 0 : i32
    return %arg2, %arg1 : i32, i32
  }
  func.func @transform_2(%arg0: i32, %arg1: i32, %arg2: i32) -> (i32, i32) {
    %c0_i32 = arith.constant 0 : i32
    %c0_i32_0 = arith.constant 0 : i32
    return %c0_i32, %arg1 : i32, i32
  }
  func.func @transform_3(%arg0: i32, %arg1: i32, %arg2: i32) -> (i32, i32) {
    %c0_i32 = arith.constant 0 : i32
    return %arg0, %arg1 : i32, i32
  }
}

</mosaic_0001>

<llo_original>
// kernel: nlayer_discriminator_forward.8
$region0: #{nlayer_discriminator_forward.8}
  #allocation0 [shape = 'u32[]', space=smem, size = 0x4, offset = 0x4, fixed_abs, tag = 'smem constant byte address 0x4 - core index']
  #allocation1 [shape = 'u32[144,128]{1,0:T(1,128)}', space=vmem, size = 0x12000, scoped, tag = 'internal scratch']
  #allocation2 [shape = 'f32[256,128]{1,0:T(8,128)}', space=vmem, size = 0x20000, scoped, tag = 'scratch operand']
  %s0 = inlined_call_operand.vmem [shape: bf16[512,128], index: 0, kind: input, shape index: {}]
  %s1 = inlined_call_operand.vmem [shape: bf16[128,128], index: 1, kind: input, shape index: {}]
  %s2 = inlined_call_operand.vmem [shape: f32[1,128], index: 2, kind: input, shape index: {}]
  %s3 = inlined_call_operand.vmem [shape: f32[512,128], index: 3, kind: output, shape index: {}]
  %s4 = sld [smem:[#allocation0]]
  $region53: #{nlayer_discriminator_forward.8} parent=0
    _
  %s6 = ssub.s32 1, %s4
  %s7 = scalar_select 0, %s6, %s4
  loop: start=0, step=1, limit=4
  $region2: #{nlayer_discriminator_forward.8} parent=0 // loop_pre_header
    _
  $region3: #{nlayer_discriminator_forward.8} parent=0 // loop_header
    %s9 = sphi 0, %s13
    %p10 = scmp.ge.s32.totalorder %s9, 4
    %s16 = sphi 0, %s35
    %s17 = sphi 0, %s31
    %s18 = sphi 0, %s27
    %s19 = sphi 0, %s16
    %s20 = sphi 0, %s17
    %s21 = sphi 0, %s18
    %s22 = sphi 0, %s19
    %s23 = sphi 0, %s20
    %s24 = sphi 0, %s21
    %s40 = sphi 0, %s42
    %s43 = sphi 0, %s40
    %s44 = sphi 0, %s43
    %s60 = sphi 0, %s44
    %s68 = sphi 0, %s70
    %s71 = sphi 0, %s68
    %s72 = sphi 0, %s71
    %s88 = sphi 0, %s72
    %s94 = sphi 0, %s96
    %s97 = sphi 0, %s94
    %s98 = sphi 0, %s97
    %s114 = sphi 0, %s98
    %s122 = sphi 0, %s124
    %s125 = sphi 0, %s122
    %s126 = sphi 0, %s125
    %s142 = sphi 0, %s126
  $region4: #{nlayer_discriminator_forward.8} parent=0 // loop_header_branch
    %12 = sbr.rel (%p10) target = $region8
  $region5: #{nlayer_discriminator_forward.8} parent=0 // loop_body
    %s14 = ssub.s32 %s9, 1
    %s15 = ssub.s32 %s9, 2
    %s25 = sadd.s32 1, %s18
    %p26 = scmp.ge.s32.totalorder %s25, 1
    %s27 = scalar_select %p26, 0, %s25
    %s28 = sadd.s32 1, %s17
    %s29 = scalar_select %p26, %s28, %s17
    %p30 = scmp.ge.s32.totalorder %s29, 1
    %s31 = scalar_select %p30, 0, %s29
    %s32 = sadd.s32 1, %s16
    %s33 = scalar_select %p30, %s32, %s16
    %p34 = scmp.ge.s32.totalorder %s33, 2
    %s35 = scalar_select %p34, 0, %s33
    %s36 = ssub.s32 %s16, %s35
    %s37 = ssub.s32 %s18, %s27
    %s38 = sor.u32 %s36, %s37
    %p39 = scmp.eq.s32.totalorder %s38, 0
    %s41 = sadd.s32 %s40, 1
    %s42 = scalar_select %p39, %s40, %s41
    %p45 = pneg %p39
    %p46 = scmp.eq.s32.totalorder %s9, 1
    %p47 = por %p45, %p46
    %p48 = scmp.ne.s32.totalorder %s40, %s43
    %p49 = scmp.eq.s32.totalorder %s9, 0
    %p50 = por %p48, %p49
    %p51 = scmp.ne.s32.totalorder %s40, %s43
    %p52 = scmp.eq.s32.totalorder %s14, 1
    %p53 = por %p51, %p52
    %p54 = scmp.ne.s32.totalorder %s43, %s44
    %p55 = scmp.eq.s32.totalorder %s14, 0
    %p56 = por %p54, %p55
    %p57 = scmp.ne.s32.totalorder %s43, %s44
    %p58 = scmp.eq.s32.totalorder %s15, 1
    %p59 = por %p57, %p58
    %p61 = scmp.ne.s32.totalorder %s44, %s60
    %p62 = scmp.eq.s32.totalorder %s15, 0
    %p63 = por %p61, %p62
    %s64 = ssub.s32 %s18, %s27
    %s65 = ssub.s32 %s17, %s31
    %s66 = sor.u32 %s64, %s65
    %p67 = scmp.eq.s32.totalorder %s66, 0
    %s69 = sadd.s32 %s68, 1
    %s70 = scalar_select %p67, %s68, %s69
    %p73 = pneg %p67
    %p74 = scmp.eq.s32.totalorder %s9, 1
    %p75 = por %p73, %p74
    %p76 = scmp.ne.s32.totalorder %s68, %s71
    %p77 = scmp.eq.s32.totalorder %s9, 0
    %p78 = por %p76, %p77
    %p79 = scmp.ne.s32.totalorder %s68, %s71
    %p80 = scmp.eq.s32.totalorder %s14, 1
    %p81 = por %p79, %p80
    %p82 = scmp.ne.s32.totalorder %s71, %s72
    %p83 = scmp.eq.s32.totalorder %s14, 0
    %p84 = por %p82, %p83
    %p85 = scmp.ne.s32.totalorder %s71, %s72
    %p86 = scmp.eq.s32.totalorder %s15, 1
    %p87 = por %p85, %p86
    %p89 = scmp.ne.s32.totalorder %s72, %s88
    %p90 = scmp.eq.s32.totalorder %s15, 0
    %p91 = por %p89, %p90
    %s92 = ssub.s32 %s17, %s31
    %p93 = scmp.eq.s32.totalorder %s92, 0
    %s95 = sadd.s32 %s94, 1
    %s96 = scalar_select %p93, %s94, %s95
    %p99 = pneg %p93
    %p100 = scmp.eq.s32.totalorder %s9, 1
    %p101 = por %p99, %p100
    %p102 = scmp.ne.s32.totalorder %s94, %s97
    %p103 = scmp.eq.s32.totalorder %s9, 0
    %p104 = por %p102, %p103
    %p105 = scmp.ne.s32.totalorder %s94, %s97
    %p106 = scmp.eq.s32.totalorder %s14, 1
    %p107 = por %p105, %p106
    %p108 = scmp.ne.s32.totalorder %s97, %s98
    %p109 = scmp.eq.s32.totalorder %s14, 0
    %p110 = por %p108, %p109
    %p111 = scmp.ne.s32.totalorder %s97, %s98
    %p112 = scmp.eq.s32.totalorder %s15, 1
    %p113 = por %p111, %p112
    %p115 = scmp.ne.s32.totalorder %s98, %s114
    %p116 = scmp.eq.s32.totalorder %s15, 0
    %p117 = por %p115, %p116
    %s118 = ssub.s32 %s16, %s35
    %s119 = ssub.s32 %s17, %s31
    %s120 = sor.u32 %s118, %s119
    %p121 = scmp.eq.s32.totalorder %s120, 0
    %s123 = sadd.s32 %s122, 1
    %s124 = scalar_select %p121, %s122, %s123
    %p127 = pneg %p121
    %p128 = scmp.eq.s32.totalorder %s9, 1
    %p129 = por %p127, %p128
    %p130 = scmp.ne.s32.totalorder %s122, %s125
    %p131 = scmp.eq.s32.totalorder %s9, 0
    %p132 = por %p130, %p131
    %p133 = scmp.ne.s32.totalorder %s122, %s125
    %p134 = scmp.eq.s32.totalorder %s14, 1
    %p135 = por %p133, %p134
    %p136 = scmp.ne.s32.totalorder %s125, %s126
    %p137 = scmp.eq.s32.totalorder %s14, 0
    %p138 = por %p136, %p137
    %p139 = scmp.ne.s32.totalorder %s125, %s126
    %p140 = scmp.eq.s32.totalorder %s15, 1
    %p141 = por %p139, %p140
    %p143 = scmp.ne.s32.totalorder %s126, %s142
    %p144 = scmp.eq.s32.totalorder %s15, 0
    %p145 = por %p143, %p144
    %p146 = scmp.le.s32.totalorder 1, %s9
    %p147 = scmp.lt.s32.totalorder %s9, 3
    %p148 = pnand %p146, %p147
    %p149 = pneg %p148
    // Predicated region
    $region9: #{nlayer_discriminator_forward.8} parent=5 // pred_check
      _
    $region10: #{nlayer_discriminator_forward.8} parent=5 // pred_check_branch
      %151 = sbr.rel (%p148) target = $region12
    $region11: #{nlayer_discriminator_forward.8} parent=5 // pred_region
      %s152 = ssub.s32 %s9, 1
      // Predicated region
      $region13: #{nlayer_discriminator_forward.8} parent=11 // pred_check
        %p153 = pneg %p84
      $region14: #{nlayer_discriminator_forward.8} parent=11 // pred_check_branch
        %155 = sbr.rel (%p153) target = $region16
      $region15: #{nlayer_discriminator_forward.8} parent=11 // pred_region
        %s156 = smul.u32 16, %s21
        %p157 = scmp.lt.s32.totalorder %s156, 15
        %s158 = scalar_select %p157, %s156, 15
        %p159 = scmp.lt.s32.totalorder %s20, 0
        %s160 = scalar_select %p159, %s20, 0
        %s161 = sadd.s32 %s160, %s158
        %s162 = smul.addr %s161, 4
        %s163 = scalar_lea.vmem %s1, %s162
        %s164 = smul.u32 16, %s21
      $region16: #{nlayer_discriminator_forward.8} parent=11 // pred_fallthru
        _
      // Predicated region
      $region17: #{nlayer_discriminator_forward.8} parent=11 // pred_check
        %p165 = pneg %p110
      $region18: #{nlayer_discriminator_forward.8} parent=11 // pred_check_branch
        %167 = sbr.rel (%p165) target = $region20
      $region19: #{nlayer_discriminator_forward.8} parent=11 // pred_region
        %p168 = scmp.lt.s32.totalorder %s20, 0
        %s169 = scalar_select %p168, %s20, 0
        %s170 = scalar_lea.vmem %s2, %s169
      $region20: #{nlayer_discriminator_forward.8} parent=11 // pred_fallthru
        _
    $region12: #{nlayer_discriminator_forward.8} parent=5 // pred_fallthru
      _
    %p171 = scmp.lt.s32.totalorder %s9, 2
    // Predicated region
    $region21: #{nlayer_discriminator_forward.8} parent=5 // pred_check
      %p172 = pneg %p171
    $region22: #{nlayer_discriminator_forward.8} parent=5 // pred_check_branch
      %174 = sbr.rel (%p172) target = $region24
    $region23: #{nlayer_discriminator_forward.8} parent=5 // pred_region
      // Predicated region
      $region25: #{nlayer_discriminator_forward.8} parent=23 // pred_check
        %p175 = pneg %p50
      $region26: #{nlayer_discriminator_forward.8} parent=23 // pred_check_branch
        %177 = sbr.rel (%p175) target = $region28
      $region27: #{nlayer_discriminator_forward.8} parent=23 // pred_region
        %s178 = smul.u32 32, %s16
        %p179 = scmp.lt.s32.totalorder %s178, 63
        %s180 = scalar_select %p179, %s178, 63
        %p181 = scmp.lt.s32.totalorder %s18, 0
        %s182 = scalar_select %p181, %s18, 0
        %s183 = sadd.s32 %s182, %s180
        %s184 = smul.addr %s183, 4
        %s185 = scalar_lea.vmem %s0, %s184
        %s186 = smul.u32 32, %s16
      $region28: #{nlayer_discriminator_forward.8} parent=23 // pred_fallthru
        _
    $region24: #{nlayer_discriminator_forward.8} parent=5 // pred_fallthru
      _
    %p187 = scmp.le.s32.totalorder 1, %s9
    %p188 = scmp.lt.s32.totalorder %s9, 3
    %p189 = pnand %p187, %p188
    %p190 = pneg %p189
    // Predicated region
    $region29: #{nlayer_discriminator_forward.8} parent=5 // pred_check
      _
    $region30: #{nlayer_discriminator_forward.8} parent=5 // pred_check_branch
      %192 = sbr.rel (%p189) target = $region32
    $region31: #{nlayer_discriminator_forward.8} parent=5 // pred_region
      %s193 = ssub.s32 %s9, 1
      %s194 = smul.u32 32, %s19
      %p195 = scmp.lt.s32.totalorder %s194, 63
      %s196 = scalar_select %p195, %s194, 63
      %p197 = scmp.lt.s32.totalorder %s21, 0
      %s198 = scalar_select %p197, %s21, 0
      %s199 = sadd.s32 %s198, %s196
      %s200 = smul.addr %s199, 4
      %s201 = scalar_lea.vmem %s0, %s200
      %p202 = pneg %p56
      %p203 = pneg %p53
      %s204 = smul.u32 16, %s21
      %p205 = scmp.lt.s32.totalorder %s204, 15
      %s206 = scalar_select %p205, %s204, 15
      %p207 = scmp.lt.s32.totalorder %s20, 0
      %s208 = scalar_select %p207, %s20, 0
      %s209 = sadd.s32 %s208, %s206
      %s210 = smul.addr %s209, 4
      %s211 = scalar_lea.vmem %s1, %s210
      %p212 = pneg %p84
      %p213 = pneg %p81
      %p214 = scmp.lt.s32.totalorder %s20, 0
      %s215 = scalar_select %p214, %s20, 0
      %s216 = scalar_lea.vmem %s2, %s215
      %p217 = pneg %p110
      %p218 = pneg %p107
      %p219 = pneg %p138
      %p220 = pneg %p135
      %s221 = smul.u32 32, %s19
      %p222 = scmp.lt.s32.totalorder %s221, 63
      %s223 = scalar_select %p222, %s221, 63
      %p224 = scmp.lt.s32.totalorder %s20, 0
      %s225 = scalar_select %p224, %s20, 0
      %s226 = sadd.s32 %s225, %s223
      %s227 = smul.addr %s226, 8
      %s228 = scalar_lea.vmem %s3, %s227
      %s229 = smul.u32 32, %s19
      %p230 = scmp.lt.s32.totalorder %s229, 63
      %s231 = scalar_select %p230, %s229, 63
      %p232 = scmp.lt.s32.totalorder %s21, 0
      %s233 = scalar_select %p232, %s21, 0
      %s234 = sadd.s32 %s233, %s231
      %s235 = smul.addr %s234, 4
      %s236 = scalar_lea.vmem %s0, %s235
      %s237 = smul.u32 32, %s19
      %s238 = smul.u32 16, %s21
      %p239 = scmp.lt.s32.totalorder %s238, 15
      %s240 = scalar_select %p239, %s238, 15
      %p241 = scmp.lt.s32.totalorder %s20, 0
      %s242 = scalar_select %p241, %s20, 0
      %s243 = sadd.s32 %s242, %s240
      %s244 = smul.addr %s243, 4
      %s245 = scalar_lea.vmem %s1, %s244
      %s246 = smul.u32 16, %s21
      %p247 = scmp.lt.s32.totalorder %s20, 0
      %s248 = scalar_select %p247, %s20, 0
      %s249 = scalar_lea.vmem %s2, %s248
      %s250 = smul.u32 32, %s19
      %p251 = scmp.lt.s32.totalorder %s250, 63
      %s252 = scalar_select %p251, %s250, 63
      %p253 = scmp.lt.s32.totalorder %s20, 0
      %s254 = scalar_select %p253, %s20, 0
      %s255 = sadd.s32 %s254, %s252
      %s256 = smul.addr %s255, 8
      %s257 = scalar_lea.vmem %s3, %s256
      %s258 = smul.u32 32, %s19
      %p260 = scmp.eq.s32.totalorder %s21, 0
      // Predicated region
      $region33: #{nlayer_discriminator_forward.8} parent=31 // pred_check
        %p261 = pneg %p260
      $region34: #{nlayer_discriminator_forward.8} parent=31 // pred_check_branch
        %263 = sbr.rel (%p261) target = $region36
      $region35: #{nlayer_discriminator_forward.8} parent=31 // pred_region
        %264 = vst [vmem:[#allocation2] sm:$0xff] 0.0
        %265 = vst [vmem:[#allocation2 + $0x8] sm:$0xff] 0.0
        %266 = vst [vmem:[#allocation2 + $0x10] sm:$0xff] 0.0
        %267 = vst [vmem:[#allocation2 + $0x18] sm:$0xff] 0.0
        %268 = vst [vmem:[#allocation2 + $0x20] sm:$0xff] 0.0
        %269 = vst [vmem:[#allocation2 + $0x28] sm:$0xff] 0.0
        %270 = vst [vmem:[#allocation2 + $0x30] sm:$0xff] 0.0
        %271 = vst [vmem:[#allocation2 + $0x38] sm:$0xff] 0.0
        %272 = vst [vmem:[#allocation2 + $0x40] sm:$0xff] 0.0
        %273 = vst [vmem:[#allocation2 + $0x48] sm:$0xff] 0.0
        %274 = vst [vmem:[#allocation2 + $0x50] sm:$0xff] 0.0
        %275 = vst [vmem:[#allocation2 + $0x58] sm:$0xff] 0.0
        %276 = vst [vmem:[#allocation2 + $0x60] sm:$0xff] 0.0
        %277 = vst [vmem:[#allocation2 + $0x68] sm:$0xff] 0.0
        %278 = vst [vmem:[#allocation2 + $0x70] sm:$0xff] 0.0
        %279 = vst [vmem:[#allocation2 + $0x78] sm:$0xff] 0.0
        %280 = vst [vmem:[#allocation2 + $0x80] sm:$0xff] 0.0
        %281 = vst [vmem:[#allocation2 + $0x88] sm:$0xff] 0.0
        %282 = vst [vmem:[#allocation2 + $0x90] sm:$0xff] 0.0
        %283 = vst [vmem:[#allocation2 + $0x98] sm:$0xff] 0.0
        %284 = vst [vmem:[#allocation2 + $0xa0] sm:$0xff] 0.0
        %285 = vst [vmem:[#allocation2 + $0xa8] sm:$0xff] 0.0
        %286 = vst [vmem:[#allocation2 + $0xb0] sm:$0xff] 0.0
        %287 = vst [vmem:[#allocation2 + $0xb8] sm:$0xff] 0.0
        %288 = vst [vmem:[#allocation2 + $0xc0] sm:$0xff] 0.0
        %289 = vst [vmem:[#allocation2 + $0xc8] sm:$0xff] 0.0
        %290 = vst [vmem:[#allocation2 + $0xd0] sm:$0xff] 0.0
        %291 = vst [vmem:[#allocation2 + $0xd8] sm:$0xff] 0.0
        %292 = vst [vmem:[#allocation2 + $0xe0] sm:$0xff] 0.0
        %293 = vst [vmem:[#allocation2 + $0xe8] sm:$0xff] 0.0
        %294 = vst [vmem:[#allocation2 + $0xf0] sm:$0xff] 0.0
        %295 = vst [vmem:[#allocation2 + $0xf8] sm:$0xff] 0.0
      $region36: #{nlayer_discriminator_forward.8} parent=31 // pred_fallthru
        _
      %v296 = vld [vmem:[#allocation2] sm:$0xff]
      %v297 = vld [vmem:[#allocation2 + $0x8] sm:$0xff]
      %v298 = vld [vmem:[#allocation2 + $0x10] sm:$0xff]
      %v299 = vld [vmem:[#allocation2 + $0x18] sm:$0xff]
      %v300 = vld [vmem:[#allocation2 + $0x20] sm:$0xff]
      %v301 = vld [vmem:[#allocation2 + $0x28] sm:$0xff]
      %v302 = vld [vmem:[#allocation2 + $0x30] sm:$0xff]
      %v303 = vld [vmem:[#allocation2 + $0x38] sm:$0xff]
      %v304 = vld [vmem:[#allocation2 + $0x40] sm:$0xff]
      %v305 = vld [vmem:[#allocation2 + $0x48] sm:$0xff]
      %v306 = vld [vmem:[#allocation2 + $0x50] sm:$0xff]
      %v307 = vld [vmem:[#allocation2 + $0x58] sm:$0xff]
      %v308 = vld [vmem:[#allocation2 + $0x60] sm:$0xff]
      %v309 = vld [vmem:[#allocation2 + $0x68] sm:$0xff]
      %v310 = vld [vmem:[#allocation2 + $0x70] sm:$0xff]
      %v311 = vld [vmem:[#allocation2 + $0x78] sm:$0xff]
      %v312 = vld [vmem:[#allocation2 + $0x80] sm:$0xff]
      %v313 = vld [vmem:[#allocation2 + $0x88] sm:$0xff]
      %v314 = vld [vmem:[#allocation2 + $0x90] sm:$0xff]
      %v315 = vld [vmem:[#allocation2 + $0x98] sm:$0xff]
      %v316 = vld [vmem:[#allocation2 + $0xa0] sm:$0xff]
      %v317 = vld [vmem:[#allocation2 + $0xa8] sm:$0xff]
      %v318 = vld [vmem:[#allocation2 + $0xb0] sm:$0xff]
      %v319 = vld [vmem:[#allocation2 + $0xb8] sm:$0xff]
      %v320 = vld [vmem:[#allocation2 + $0xc0] sm:$0xff]
      %v321 = vld [vmem:[#allocation2 + $0xc8] sm:$0xff]
      %v322 = vld [vmem:[#allocation2 + $0xd0] sm:$0xff]
      %v323 = vld [vmem:[#allocation2 + $0xd8] sm:$0xff]
      %v324 = vld [vmem:[#allocation2 + $0xe0] sm:$0xff]
      %v325 = vld [vmem:[#allocation2 + $0xe8] sm:$0xff]
      %v326 = vld [vmem:[#allocation2 + $0xf0] sm:$0xff]
      %v327 = vld [vmem:[#allocation2 + $0xf8] sm:$0xff]
      %v328 = vld [vmem:[%s236] sm:$0xf]
      %v329 = vld [vmem:[%s236 + $0x4] sm:$0xf]
      %v330 = vld [vmem:[%s236 + $0x8] sm:$0xf]
      %v331 = vld [vmem:[%s236 + $0xc] sm:$0xf]
      %v332 = vld [vmem:[%s236 + $0x10] sm:$0xf]
      %v333 = vld [vmem:[%s236 + $0x14] sm:$0xf]
      %v334 = vld [vmem:[%s236 + $0x18] sm:$0xf]
      %v335 = vld [vmem:[%s236 + $0x1c] sm:$0xf]
      %v336 = vld [vmem:[%s236 + $0x20] sm:$0xf]
      %v337 = vld [vmem:[%s236 + $0x24] sm:$0xf]
      %v338 = vld [vmem:[%s236 + $0x28] sm:$0xf]
      %v339 = vld [vmem:[%s236 + $0x2c] sm:$0xf]
      %v340 = vld [vmem:[%s236 + $0x30] sm:$0xf]
      %v341 = vld [vmem:[%s236 + $0x34] sm:$0xf]
      %v342 = vld [vmem:[%s236 + $0x38] sm:$0xf]
      %v343 = vld [vmem:[%s236 + $0x3c] sm:$0xf]
      %v344 = vld [vmem:[%s236 + $0x40] sm:$0xf]
      %v345 = vld [vmem:[%s236 + $0x44] sm:$0xf]
      %v346 = vld [vmem:[%s236 + $0x48] sm:$0xf]
      %v347 = vld [vmem:[%s236 + $0x4c] sm:$0xf]
      %v348 = vld [vmem:[%s236 + $0x50] sm:$0xf]
      %v349 = vld [vmem:[%s236 + $0x54] sm:$0xf]
      %v350 = vld [vmem:[%s236 + $0x58] sm:$0xf]
      %v351 = vld [vmem:[%s236 + $0x5c] sm:$0xf]
      %v352 = vld [vmem:[%s236 + $0x60] sm:$0xf]
      %v353 = vld [vmem:[%s236 + $0x64] sm:$0xf]
      %v354 = vld [vmem:[%s236 + $0x68] sm:$0xf]
      %v355 = vld [vmem:[%s236 + $0x6c] sm:$0xf]
      %v356 = vld [vmem:[%s236 + $0x70] sm:$0xf]
      %v357 = vld [vmem:[%s236 + $0x74] sm:$0xf]
      %v358 = vld [vmem:[%s236 + $0x78] sm:$0xf]
      %v359 = vld [vmem:[%s236 + $0x7c] sm:$0xf]
      %v360 = vld [vmem:[%s245] sm:$0xf]
      %v361 = vld [vmem:[%s245 + $0x4] sm:$0xf]
      %v362 = vld [vmem:[%s245 + $0x8] sm:$0xf]
      %v363 = vld [vmem:[%s245 + $0xc] sm:$0xf]
      %v364 = vld [vmem:[%s245 + $0x10] sm:$0xf]
      %v365 = vld [vmem:[%s245 + $0x14] sm:$0xf]
      %v366 = vld [vmem:[%s245 + $0x18] sm:$0xf]
      %v367 = vld [vmem:[%s245 + $0x1c] sm:$0xf]
      %v368 = vld [vmem:[%s245 + $0x20] sm:$0xf]
      %v369 = vld [vmem:[%s245 + $0x24] sm:$0xf]
      %v370 = vld [vmem:[%s245 + $0x28] sm:$0xf]
      %v371 = vld [vmem:[%s245 + $0x2c] sm:$0xf]
      %v372 = vld [vmem:[%s245 + $0x30] sm:$0xf]
      %v373 = vld [vmem:[%s245 + $0x34] sm:$0xf]
      %v374 = vld [vmem:[%s245 + $0x38] sm:$0xf]
      %v375 = vld [vmem:[%s245 + $0x3c] sm:$0xf]
      %v408 = vunpack.c.l.b16 %v328
      %v409 = vunpack.c.l.b16 %v329
      %v410 = vunpack.c.l.b16 %v330
      %v411 = vunpack.c.l.b16 %v331
      %v412 = vunpack.c.l.b16 %v332
      %v413 = vunpack.c.l.b16 %v333
      %v414 = vunpack.c.l.b16 %v334
      %v415 = vunpack.c.l.b16 %v335
      %v416 = vunpack.c.l.b16 %v336
      %v417 = vunpack.c.l.b16 %v337
      %v418 = vunpack.c.l.b16 %v338
      %v419 = vunpack.c.l.b16 %v339
      %v420 = vunpack.c.l.b16 %v340
      %v421 = vunpack.c.l.b16 %v341
      %v422 = vunpack.c.l.b16 %v342
      %v423 = vunpack.c.l.b16 %v343
      %v424 = vunpack.c.l.b16 %v344
      %v425 = vunpack.c.l.b16 %v345
      %v426 = vunpack.c.l.b16 %v346
      %v427 = vunpack.c.l.b16 %v347
      %v428 = vunpack.c.l.b16 %v348
      %v429 = vunpack.c.l.b16 %v349
      %v430 = vunpack.c.l.b16 %v350
      %v431 = vunpack.c.l.b16 %v351
      %v432 = vunpack.c.l.b16 %v352
      %v433 = vunpack.c.l.b16 %v353
      %v434 = vunpack.c.l.b16 %v354
      %v435 = vunpack.c.l.b16 %v355
      %v436 = vunpack.c.l.b16 %v356
      %v437 = vunpack.c.l.b16 %v357
      %v438 = vunpack.c.l.b16 %v358
      %v439 = vunpack.c.l.b16 %v359
      %v440 = vpack.c.b16 %v409, %v408
      %v441 = vpack.c.b16 %v411, %v410
      %v442 = vpack.c.b16 %v413, %v412
      %v443 = vpack.c.b16 %v415, %v414
      %v444 = vpack.c.b16 %v417, %v416
      %v445 = vpack.c.b16 %v419, %v418
      %v446 = vpack.c.b16 %v421, %v420
      %v447 = vpack.c.b16 %v423, %v422
      %v448 = vpack.c.b16 %v425, %v424
      %v449 = vpack.c.b16 %v427, %v426
      %v450 = vpack.c.b16 %v429, %v428
      %v451 = vpack.c.b16 %v431, %v430
      %v452 = vpack.c.b16 %v433, %v432
      %v453 = vpack.c.b16 %v435, %v434
      %v454 = vpack.c.b16 %v437, %v436
      %v455 = vpack.c.b16 %v439, %v438
      %v488 = vunpack.c.l.b16 %v360
      %v489 = vunpack.c.l.b16 %v361
      %v490 = vunpack.c.l.b16 %v362
      %v491 = vunpack.c.l.b16 %v363
      %v492 = vunpack.c.l.b16 %v364
      %v493 = vunpack.c.l.b16 %v365
      %v494 = vunpack.c.l.b16 %v366
      %v495 = vunpack.c.l.b16 %v367
      %v496 = vunpack.c.l.b16 %v368
      %v497 = vunpack.c.l.b16 %v369
      %v498 = vunpack.c.l.b16 %v370
      %v499 = vunpack.c.l.b16 %v371
      %v500 = vunpack.c.l.b16 %v372
      %v501 = vunpack.c.l.b16 %v373
      %v502 = vunpack.c.l.b16 %v374
      %v503 = vunpack.c.l.b16 %v375
      %v504 = vpack.c.b16 %v489, %v488
      %v505 = vpack.c.b16 %v491, %v490
      %v506 = vpack.c.b16 %v493, %v492
      %v507 = vpack.c.b16 %v495, %v494
      %v508 = vpack.c.b16 %v497, %v496
      %v509 = vpack.c.b16 %v499, %v498
      %v510 = vpack.c.b16 %v501, %v500
      %v511 = vpack.c.b16 %v503, %v502
      %520 = vmatprep.subr.bf16.mxu0 0
      %521 = vmatpush1.bf16.msra.mxu0 %v511
      %522 = vmatprep.subr.bf16.mxu0 0
      %523 = vmatpush1.bf16.msra.mxu0 %v510
      %524 = vmatprep.subr.bf16.mxu0 0
      %525 = vmatpush1.bf16.msra.mxu0 %v509
      %526 = vmatprep.subr.bf16.mxu0 0
      %527 = vmatpush1.bf16.msra.mxu0 %v508
      %528 = vmatprep.subr.bf16.mxu0 0
      %529 = vmatpush1.bf16.msra.mxu0 %v507
      %530 = vmatprep.subr.bf16.mxu0 0
      %531 = vmatpush1.bf16.msra.mxu0 %v506
      %532 = vmatprep.subr.bf16.mxu0 0
      %533 = vmatpush1.bf16.msra.mxu0 %v505
      %534 = vmatprep.subr.bf16.mxu0 0
      %535 = vmatpush1.bf16.msra.mxu0 %v504
      %536 = vmatprep.subr.bf16.mxu0 0
      %537 = vmatpush2.bf16.msra.mxu0 0
      %538 = vmatprep.subr.bf16.mxu0 0
      %539 = vmatpush2.bf16.msra.mxu0 0
      %540 = vmatprep.subr.bf16.mxu0 0
      %541 = vmatpush2.bf16.msra.mxu0 0
      %542 = vmatprep.subr.bf16.mxu0 0
      %543 = vmatpush2.bf16.msra.mxu0 0
      %544 = vmatprep.subr.bf16.mxu0 0
      %545 = vmatpush2.bf16.msra.mxu0 0
      %546 = vmatprep.subr.bf16.mxu0 0
      %547 = vmatpush2.bf16.msra.mxu0 0
      %548 = vmatprep.subr.bf16.mxu0 0
      %549 = vmatpush2.bf16.msra.mxu0 0
      %550 = vmatprep.subr.bf16.mxu0 0
      %551 = vmatpush2.bf16.msra.mxu0 0
      %552 = vmatprep.mubr.bf16.mxu0 0
      %553 = vmatmul.mubr.bf16.gmra.mxu0 %v440
      %v554 = vpop.f32.mrf.mxu0
      %v555 = vadd.f32 0.0, %v554
      %v556 = vpop.f32.mrf.mxu0
      %v557 = vpop.f32.mrf.mxu0
      %v558 = vadd.f32 0.0, %v557
      %v559 = vpop.f32.mrf.mxu0
      %560 = vmatprep.mubr.bf16.mxu0 0
      %561 = vmatmul.mubr.bf16.gmra.mxu0 %v441
      %v562 = vpop.f32.mrf.mxu0
      %v563 = vadd.f32 0.0, %v562
      %v564 = vpop.f32.mrf.mxu0
      %v565 = vpop.f32.mrf.mxu0
      %v566 = vadd.f32 0.0, %v565
      %v567 = vpop.f32.mrf.mxu0
      %568 = vmatprep.mubr.bf16.mxu0 0
      %569 = vmatmul.mubr.bf16.gmra.mxu0 %v442
      %v570 = vpop.f32.mrf.mxu0
      %v571 = vadd.f32 0.0, %v570
      %v572 = vpop.f32.mrf.mxu0
      %v573 = vpop.f32.mrf.mxu0
      %v574 = vadd.f32 0.0, %v573
      %v575 = vpop.f32.mrf.mxu0
      %576 = vmatprep.mubr.bf16.mxu0 0
      %577 = vmatmul.mubr.bf16.gmra.mxu0 %v443
      %v578 = vpop.f32.mrf.mxu0
      %v579 = vadd.f32 0.0, %v578
      %v580 = vpop.f32.mrf.mxu0
      %v581 = vpop.f32.mrf.mxu0
      %v582 = vadd.f32 0.0, %v581
      %v583 = vpop.f32.mrf.mxu0
      %584 = vmatprep.mubr.bf16.mxu0 0
      %585 = vmatmul.mubr.bf16.gmra.mxu0 %v444
      %v586 = vpop.f32.mrf.mxu0
      %v587 = vadd.f32 0.0, %v586
      %v588 = vpop.f32.mrf.mxu0
      %v589 = vpop.f32.mrf.mxu0
      %v590 = vadd.f32 0.0, %v589
      %v591 = vpop.f32.mrf.mxu0
      %592 = vmatprep.mubr.bf16.mxu0 0
      %593 = vmatmul.mubr.bf16.gmra.mxu0 %v445
      %v594 = vpop.f32.mrf.mxu0
      %v595 = vadd.f32 0.0, %v594
      %v596 = vpop.f32.mrf.mxu0
      %v597 = vpop.f32.mrf.mxu0
      %v598 = vadd.f32 0.0, %v597
      %v599 = vpop.f32.mrf.mxu0
      %600 = vmatprep.mubr.bf16.mxu0 0
      %601 = vmatmul.mubr.bf16.gmra.mxu0 %v446
      %v602 = vpop.f32.mrf.mxu0
      %v603 = vadd.f32 0.0, %v602
      %v604 = vpop.f32.mrf.mxu0
      %v605 = vpop.f32.mrf.mxu0
      %v606 = vadd.f32 0.0, %v605
      %v607 = vpop.f32.mrf.mxu0
      %608 = vmatprep.mubr.bf16.mxu0 0
      %609 = vmatmul.mubr.bf16.gmra.mxu0 %v447
      %v610 = vpop.f32.mrf.mxu0
      %v611 = vadd.f32 0.0, %v610
      %v612 = vpop.f32.mrf.mxu0
      %v613 = vpop.f32.mrf.mxu0
      %v614 = vadd.f32 0.0, %v613
      %v615 = vpop.f32.mrf.mxu0
      %616 = vmatprep.mubr.bf16.mxu0 0
      %617 = vmatmul.mubr.bf16.gmra.mxu0 %v448
      %v618 = vpop.f32.mrf.mxu0
      %v619 = vadd.f32 0.0, %v618
      %v620 = vpop.f32.mrf.mxu0
      %v621 = vpop.f32.mrf.mxu0
      %v622 = vadd.f32 0.0, %v621
      %v623 = vpop.f32.mrf.mxu0
      %624 = vmatprep.mubr.bf16.mxu0 0
      %625 = vmatmul.mubr.bf16.gmra.mxu0 %v449
      %v626 = vpop.f32.mrf.mxu0
      %v627 = vadd.f32 0.0, %v626
      %v628 = vpop.f32.mrf.mxu0
      %v629 = vpop.f32.mrf.mxu0
      %v630 = vadd.f32 0.0, %v629
      %v631 = vpop.f32.mrf.mxu0
      %632 = vmatprep.mubr.bf16.mxu0 0
      %633 = vmatmul.mubr.bf16.gmra.mxu0 %v450
      %v634 = vpop.f32.mrf.mxu0
      %v635 = vadd.f32 0.0, %v634
      %v636 = vpop.f32.mrf.mxu0
      %v637 = vpop.f32.mrf.mxu0
      %v638 = vadd.f32 0.0, %v637
      %v639 = vpop.f32.mrf.mxu0
      %640 = vmatprep.mubr.bf16.mxu0 0
      %641 = vmatmul.mubr.bf16.gmra.mxu0 %v451
      %v642 = vpop.f32.mrf.mxu0
      %v643 = vadd.f32 0.0, %v642
      %v644 = vpop.f32.mrf.mxu0
      %v645 = vpop.f32.mrf.mxu0
      %v646 = vadd.f32 0.0, %v645
      %v647 = vpop.f32.mrf.mxu0
      %648 = vmatprep.mubr.bf16.mxu0 0
      %649 = vmatmul.mubr.bf16.gmra.mxu0 %v452
      %v650 = vpop.f32.mrf.mxu0
      %v651 = vadd.f32 0.0, %v650
      %v652 = vpop.f32.mrf.mxu0
      %v653 = vpop.f32.mrf.mxu0
      %v654 = vadd.f32 0.0, %v653
      %v655 = vpop.f32.mrf.mxu0
      %656 = vmatprep.mubr.bf16.mxu0 0
      %657 = vmatmul.mubr.bf16.gmra.mxu0 %v453
      %v658 = vpop.f32.mrf.mxu0
      %v659 = vadd.f32 0.0, %v658
      %v660 = vpop.f32.mrf.mxu0
      %v661 = vpop.f32.mrf.mxu0
      %v662 = vadd.f32 0.0, %v661
      %v663 = vpop.f32.mrf.mxu0
      %664 = vmatprep.mubr.bf16.mxu0 0
      %665 = vmatmul.mubr.bf16.gmra.mxu0 %v454
      %v666 = vpop.f32.mrf.mxu0
      %v667 = vadd.f32 0.0, %v666
      %v668 = vpop.f32.mrf.mxu0
      %v669 = vpop.f32.mrf.mxu0
      %v670 = vadd.f32 0.0, %v669
      %v671 = vpop.f32.mrf.mxu0
      %672 = vmatprep.mubr.bf16.mxu0 0
      %673 = vmatmul.mubr.bf16.gmra.mxu0 %v455
      %v674 = vpop.f32.mrf.mxu0
      %v675 = vadd.f32 0.0, %v674
      %v676 = vpop.f32.mrf.mxu0
      %v677 = vpop.f32.mrf.mxu0
      %v678 = vadd.f32 0.0, %v677
      %v679 = vpop.f32.mrf.mxu0
      %680 = vdwg.mxu0
      %v681 = vadd.f32 %v296, %v555
      %v682 = vadd.f32 %v297, %v558
      %v683 = vadd.f32 %v298, %v563
      %v684 = vadd.f32 %v299, %v566
      %v685 = vadd.f32 %v300, %v571
      %v686 = vadd.f32 %v301, %v574
      %v687 = vadd.f32 %v302, %v579
      %v688 = vadd.f32 %v303, %v582
      %v689 = vadd.f32 %v304, %v587
      %v690 = vadd.f32 %v305, %v590
      %v691 = vadd.f32 %v306, %v595
      %v692 = vadd.f32 %v307, %v598
      %v693 = vadd.f32 %v308, %v603
      %v694 = vadd.f32 %v309, %v606
      %v695 = vadd.f32 %v310, %v611
      %v696 = vadd.f32 %v311, %v614
      %v697 = vadd.f32 %v312, %v619
      %v698 = vadd.f32 %v313, %v622
      %v699 = vadd.f32 %v314, %v627
      %v700 = vadd.f32 %v315, %v630
      %v701 = vadd.f32 %v316, %v635
      %v702 = vadd.f32 %v317, %v638
      %v703 = vadd.f32 %v318, %v643
      %v704 = vadd.f32 %v319, %v646
      %v705 = vadd.f32 %v320, %v651
      %v706 = vadd.f32 %v321, %v654
      %v707 = vadd.f32 %v322, %v659
      %v708 = vadd.f32 %v323, %v662
      %v709 = vadd.f32 %v324, %v667
      %v710 = vadd.f32 %v325, %v670
      %v711 = vadd.f32 %v326, %v675
      %v712 = vadd.f32 %v327, %v678
      %713 = vst [vmem:[#allocation2] sm:$0xff] %v681
      %714 = vst [vmem:[#allocation2 + $0x8] sm:$0xff] %v682
      %715 = vst [vmem:[#allocation2 + $0x10] sm:$0xff] %v683
      %716 = vst [vmem:[#allocation2 + $0x18] sm:$0xff] %v684
      %717 = vst [vmem:[#allocation2 + $0x20] sm:$0xff] %v685
      %718 = vst [vmem:[#allocation2 + $0x28] sm:$0xff] %v686
      %719 = vst [vmem:[#allocation2 + $0x30] sm:$0xff] %v687
      %720 = vst [vmem:[#allocation2 + $0x38] sm:$0xff] %v688
      %721 = vst [vmem:[#allocation2 + $0x40] sm:$0xff] %v689
      %722 = vst [vmem:[#allocation2 + $0x48] sm:$0xff] %v690
      %723 = vst [vmem:[#allocation2 + $0x50] sm:$0xff] %v691
      %724 = vst [vmem:[#allocation2 + $0x58] sm:$0xff] %v692
      %725 = vst [vmem:[#allocation2 + $0x60] sm:$0xff] %v693
      %726 = vst [vmem:[#allocation2 + $0x68] sm:$0xff] %v694
      %727 = vst [vmem:[#allocation2 + $0x70] sm:$0xff] %v695
      %728 = vst [vmem:[#allocation2 + $0x78] sm:$0xff] %v696
      %729 = vst [vmem:[#allocation2 + $0x80] sm:$0xff] %v697
      %730 = vst [vmem:[#allocation2 + $0x88] sm:$0xff] %v698
      %731 = vst [vmem:[#allocation2 + $0x90] sm:$0xff] %v699
      %732 = vst [vmem:[#allocation2 + $0x98] sm:$0xff] %v700
      %733 = vst [vmem:[#allocation2 + $0xa0] sm:$0xff] %v701
      %734 = vst [vmem:[#allocation2 + $0xa8] sm:$0xff] %v702
      %735 = vst [vmem:[#allocation2 + $0xb0] sm:$0xff] %v703
      %736 = vst [vmem:[#allocation2 + $0xb8] sm:$0xff] %v704
      %737 = vst [vmem:[#allocation2 + $0xc0] sm:$0xff] %v705
      %738 = vst [vmem:[#allocation2 + $0xc8] sm:$0xff] %v706
      %739 = vst [vmem:[#allocation2 + $0xd0] sm:$0xff] %v707
      %740 = vst [vmem:[#allocation2 + $0xd8] sm:$0xff] %v708
      %741 = vst [vmem:[#allocation2 + $0xe0] sm:$0xff] %v709
      %742 = vst [vmem:[#allocation2 + $0xe8] sm:$0xff] %v710
      %743 = vst [vmem:[#allocation2 + $0xf0] sm:$0xff] %v711
      %744 = vst [vmem:[#allocation2 + $0xf8] sm:$0xff] %v712
      // Predicated region
      $region37: #{nlayer_discriminator_forward.8} parent=31 // pred_check
        %p745 = pneg %p260
      $region38: #{nlayer_discriminator_forward.8} parent=31 // pred_check_branch
        %747 = sbr.rel (%p745) target = $region40
      $region39: #{nlayer_discriminator_forward.8} parent=31 // pred_region
        %v748 = vld [vmem:[#allocation2] sm:$0xff]
        %v749 = vld [vmem:[#allocation2 + $0x8] sm:$0xff]
        %v750 = vld [vmem:[#allocation2 + $0x10] sm:$0xff]
        %v751 = vld [vmem:[#allocation2 + $0x18] sm:$0xff]
        %v752 = vld [vmem:[#allocation2 + $0x20] sm:$0xff]
        %v753 = vld [vmem:[#allocation2 + $0x28] sm:$0xff]
        %v754 = vld [vmem:[#allocation2 + $0x30] sm:$0xff]
        %v755 = vld [vmem:[#allocation2 + $0x38] sm:$0xff]
        %v756 = vld [vmem:[#allocation2 + $0x40] sm:$0xff]
        %v757 = vld [vmem:[#allocation2 + $0x48] sm:$0xff]
        %v758 = vld [vmem:[#allocation2 + $0x50] sm:$0xff]
        %v759 = vld [vmem:[#allocation2 + $0x58] sm:$0xff]
        %v760 = vld [vmem:[#allocation2 + $0x60] sm:$0xff]
        %v761 = vld [vmem:[#allocation2 + $0x68] sm:$0xff]
        %v762 = vld [vmem:[#allocation2 + $0x70] sm:$0xff]
        %v763 = vld [vmem:[#allocation2 + $0x78] sm:$0xff]
        %v764 = vld [vmem:[#allocation2 + $0x80] sm:$0xff]
        %v765 = vld [vmem:[#allocation2 + $0x88] sm:$0xff]
        %v766 = vld [vmem:[#allocation2 + $0x90] sm:$0xff]
        %v767 = vld [vmem:[#allocation2 + $0x98] sm:$0xff]
        %v768 = vld [vmem:[#allocation2 + $0xa0] sm:$0xff]
        %v769 = vld [vmem:[#allocation2 + $0xa8] sm:$0xff]
        %v770 = vld [vmem:[#allocation2 + $0xb0] sm:$0xff]
        %v771 = vld [vmem:[#allocation2 + $0xb8] sm:$0xff]
        %v772 = vld [vmem:[#allocation2 + $0xc0] sm:$0xff]
        %v773 = vld [vmem:[#allocation2 + $0xc8] sm:$0xff]
        %v774 = vld [vmem:[#allocation2 + $0xd0] sm:$0xff]
        %v775 = vld [vmem:[#allocation2 + $0xd8] sm:$0xff]
        %v776 = vld [vmem:[#allocation2 + $0xe0] sm:$0xff]
        %v777 = vld [vmem:[#allocation2 + $0xe8] sm:$0xff]
        %v778 = vld [vmem:[#allocation2 + $0xf0] sm:$0xff]
        %v779 = vld [vmem:[#allocation2 + $0xf8] sm:$0xff]
        %v780 = vld [vmem:[%s249] sm:$0x1]
        %v782 = vlaneseq
        %v783 = vshrl.u32 %v782, 7
        %v784 = vsub.s32 0, %v783
        %v785 = vrot.slane %v780, %v784
        %v787 = vadd.f32 %v748, %v785
        %v788 = vadd.f32 %v749, %v785
        %v789 = vadd.f32 %v750, %v785
        %v790 = vadd.f32 %v751, %v785
        %v791 = vadd.f32 %v752, %v785
        %v792 = vadd.f32 %v753, %v785
        %v793 = vadd.f32 %v754, %v785
        %v794 = vadd.f32 %v755, %v785
        %v795 = vadd.f32 %v756, %v785
        %v796 = vadd.f32 %v757, %v785
        %v797 = vadd.f32 %v758, %v785
        %v798 = vadd.f32 %v759, %v785
        %v799 = vadd.f32 %v760, %v785
        %v800 = vadd.f32 %v761, %v785
        %v801 = vadd.f32 %v762, %v785
        %v802 = vadd.f32 %v763, %v785
        %v803 = vadd.f32 %v764, %v785
        %v804 = vadd.f32 %v765, %v785
        %v805 = vadd.f32 %v766, %v785
        %v806 = vadd.f32 %v767, %v785
        %v807 = vadd.f32 %v768, %v785
        %v808 = vadd.f32 %v769, %v785
        %v809 = vadd.f32 %v770, %v785
        %v810 = vadd.f32 %v771, %v785
        %v811 = vadd.f32 %v772, %v785
        %v812 = vadd.f32 %v773, %v785
        %v813 = vadd.f32 %v774, %v785
        %v814 = vadd.f32 %v775, %v785
        %v815 = vadd.f32 %v776, %v785
        %v816 = vadd.f32 %v777, %v785
        %v817 = vadd.f32 %v778, %v785
        %v818 = vadd.f32 %v779, %v785
        %vm819 = vcmp.ge.f32.partialorder %v787, 0.0
        %vm820 = vcmp.ge.f32.partialorder %v788, 0.0
        %vm821 = vcmp.ge.f32.partialorder %v789, 0.0
        %vm822 = vcmp.ge.f32.partialorder %v790, 0.0
        %vm823 = vcmp.ge.f32.partialorder %v791, 0.0
        %vm824 = vcmp.ge.f32.partialorder %v792, 0.0
        %vm825 = vcmp.ge.f32.partialorder %v793, 0.0
        %vm826 = vcmp.ge.f32.partialorder %v794, 0.0
        %vm827 = vcmp.ge.f32.partialorder %v795, 0.0
        %vm828 = vcmp.ge.f32.partialorder %v796, 0.0
        %vm829 = vcmp.ge.f32.partialorder %v797, 0.0
        %vm830 = vcmp.ge.f32.partialorder %v798, 0.0
        %vm831 = vcmp.ge.f32.partialorder %v799, 0.0
        %vm832 = vcmp.ge.f32.partialorder %v800, 0.0
        %vm833 = vcmp.ge.f32.partialorder %v801, 0.0
        %vm834 = vcmp.ge.f32.partialorder %v802, 0.0
        %vm835 = vcmp.ge.f32.partialorder %v803, 0.0
        %vm836 = vcmp.ge.f32.partialorder %v804, 0.0
        %vm837 = vcmp.ge.f32.partialorder %v805, 0.0
        %vm838 = vcmp.ge.f32.partialorder %v806, 0.0
        %vm839 = vcmp.ge.f32.partialorder %v807, 0.0
        %vm840 = vcmp.ge.f32.partialorder %v808, 0.0
        %vm841 = vcmp.ge.f32.partialorder %v809, 0.0
        %vm842 = vcmp.ge.f32.partialorder %v810, 0.0
        %vm843 = vcmp.ge.f32.partialorder %v811, 0.0
        %vm844 = vcmp.ge.f32.partialorder %v812, 0.0
        %vm845 = vcmp.ge.f32.partialorder %v813, 0.0
        %vm846 = vcmp.ge.f32.partialorder %v814, 0.0
        %vm847 = vcmp.ge.f32.partialorder %v815, 0.0
        %vm848 = vcmp.ge.f32.partialorder %v816, 0.0
        %vm849 = vcmp.ge.f32.partialorder %v817, 0.0
        %vm850 = vcmp.ge.f32.partialorder %v818, 0.0
        %v851 = vmul.f32 %v787, 0.2
        %v852 = vmul.f32 %v788, 0.2
        %v853 = vmul.f32 %v789, 0.2
        %v854 = vmul.f32 %v790, 0.2
        %v855 = vmul.f32 %v791, 0.2
        %v856 = vmul.f32 %v792, 0.2
        %v857 = vmul.f32 %v793, 0.2
        %v858 = vmul.f32 %v794, 0.2
        %v859 = vmul.f32 %v795, 0.2
        %v860 = vmul.f32 %v796, 0.2
        %v861 = vmul.f32 %v797, 0.2
        %v862 = vmul.f32 %v798, 0.2
        %v863 = vmul.f32 %v799, 0.2
        %v864 = vmul.f32 %v800, 0.2
        %v865 = vmul.f32 %v801, 0.2
        %v866 = vmul.f32 %v802, 0.2
        %v867 = vmul.f32 %v803, 0.2
        %v868 = vmul.f32 %v804, 0.2
        %v869 = vmul.f32 %v805, 0.2
        %v870 = vmul.f32 %v806, 0.2
        %v871 = vmul.f32 %v807, 0.2
        %v872 = vmul.f32 %v808, 0.2
        %v873 = vmul.f32 %v809, 0.2
        %v874 = vmul.f32 %v810, 0.2
        %v875 = vmul.f32 %v811, 0.2
        %v876 = vmul.f32 %v812, 0.2
        %v877 = vmul.f32 %v813, 0.2
        %v878 = vmul.f32 %v814, 0.2
        %v879 = vmul.f32 %v815, 0.2
        %v880 = vmul.f32 %v816, 0.2
        %v881 = vmul.f32 %v817, 0.2
        %v882 = vmul.f32 %v818, 0.2
        %v883 = vsel %vm819, %v787, %v851
        %v884 = vsel %vm820, %v788, %v852
        %v885 = vsel %vm821, %v789, %v853
        %v886 = vsel %vm822, %v790, %v854
        %v887 = vsel %vm823, %v791, %v855
        %v888 = vsel %vm824, %v792, %v856
        %v889 = vsel %vm825, %v793, %v857
        %v890 = vsel %vm826, %v794, %v858
        %v891 = vsel %vm827, %v795, %v859
        %v892 = vsel %vm828, %v796, %v860
        %v893 = vsel %vm829, %v797, %v861
        %v894 = vsel %vm830, %v798, %v862
        %v895 = vsel %vm831, %v799, %v863
        %v896 = vsel %vm832, %v800, %v864
        %v897 = vsel %vm833, %v801, %v865
        %v898 = vsel %vm834, %v802, %v866
        %v899 = vsel %vm835, %v803, %v867
        %v900 = vsel %vm836, %v804, %v868
        %v901 = vsel %vm837, %v805, %v869
        %v902 = vsel %vm838, %v806, %v870
        %v903 = vsel %vm839, %v807, %v871
        %v904 = vsel %vm840, %v808, %v872
        %v905 = vsel %vm841, %v809, %v873
        %v906 = vsel %vm842, %v810, %v874
        %v907 = vsel %vm843, %v811, %v875
        %v908 = vsel %vm844, %v812, %v876
        %v909 = vsel %vm845, %v813, %v877
        %v910 = vsel %vm846, %v814, %v878
        %v911 = vsel %vm847, %v815, %v879
        %v912 = vsel %vm848, %v816, %v880
        %v913 = vsel %vm849, %v817, %v881
        %v914 = vsel %vm850, %v818, %v882
        %915 = vst [vmem:[%s257] sm:$0xff] %v883
        %916 = vst [vmem:[%s257 + $0x8] sm:$0xff] %v884
        %917 = vst [vmem:[%s257 + $0x10] sm:$0xff] %v885
        %918 = vst [vmem:[%s257 + $0x18] sm:$0xff] %v886
        %919 = vst [vmem:[%s257 + $0x20] sm:$0xff] %v887
        %920 = vst [vmem:[%s257 + $0x28] sm:$0xff] %v888
        %921 = vst [vmem:[%s257 + $0x30] sm:$0xff] %v889
        %922 = vst [vmem:[%s257 + $0x38] sm:$0xff] %v890
        %923 = vst [vmem:[%s257 + $0x40] sm:$0xff] %v891
        %924 = vst [vmem:[%s257 + $0x48] sm:$0xff] %v892
        %925 = vst [vmem:[%s257 + $0x50] sm:$0xff] %v893
        %926 = vst [vmem:[%s257 + $0x58] sm:$0xff] %v894
        %927 = vst [vmem:[%s257 + $0x60] sm:$0xff] %v895
        %928 = vst [vmem:[%s257 + $0x68] sm:$0xff] %v896
        %929 = vst [vmem:[%s257 + $0x70] sm:$0xff] %v897
        %930 = vst [vmem:[%s257 + $0x78] sm:$0xff] %v898
        %931 = vst [vmem:[%s257 + $0x80] sm:$0xff] %v899
        %932 = vst [vmem:[%s257 + $0x88] sm:$0xff] %v900
        %933 = vst [vmem:[%s257 + $0x90] sm:$0xff] %v901
        %934 = vst [vmem:[%s257 + $0x98] sm:$0xff] %v902
        %935 = vst [vmem:[%s257 + $0xa0] sm:$0xff] %v903
        %936 = vst [vmem:[%s257 + $0xa8] sm:$0xff] %v904
        %937 = vst [vmem:[%s257 + $0xb0] sm:$0xff] %v905
        %938 = vst [vmem:[%s257 + $0xb8] sm:$0xff] %v906
        %939 = vst [vmem:[%s257 + $0xc0] sm:$0xff] %v907
        %940 = vst [vmem:[%s257 + $0xc8] sm:$0xff] %v908
        %941 = vst [vmem:[%s257 + $0xd0] sm:$0xff] %v909
        %942 = vst [vmem:[%s257 + $0xd8] sm:$0xff] %v910
        %943 = vst [vmem:[%s257 + $0xe0] sm:$0xff] %v911
        %944 = vst [vmem:[%s257 + $0xe8] sm:$0xff] %v912
        %945 = vst [vmem:[%s257 + $0xf0] sm:$0xff] %v913
        %946 = vst [vmem:[%s257 + $0xf8] sm:$0xff] %v914
      $region40: #{nlayer_discriminator_forward.8} parent=31 // pred_fallthru
        _
      %s947 = smul.u32 32, %s19
      %p948 = scmp.lt.s32.totalorder %s947, 63
      %s949 = scalar_select %p948, %s947, 63
      %p950 = scmp.lt.s32.totalorder %s20, 0
      %s951 = scalar_select %p950, %s20, 0
      %s952 = sadd.s32 %s951, %s949
      %s953 = smul.addr %s952, 8
      %s954 = scalar_lea.vmem %s3, %s953
      // Predicated region
      $region41: #{nlayer_discriminator_forward.8} parent=31 // pred_check
        %p955 = pneg %p135
      $region42: #{nlayer_discriminator_forward.8} parent=31 // pred_check_branch
        %957 = sbr.rel (%p955) target = $region44
      $region43: #{nlayer_discriminator_forward.8} parent=31 // pred_region
        %s958 = smul.u32 32, %s19
      $region44: #{nlayer_discriminator_forward.8} parent=31 // pred_fallthru
        _
    $region32: #{nlayer_discriminator_forward.8} parent=5 // pred_fallthru
      _
    %p959 = scmp.le.s32.totalorder 2, %s9
    // Predicated region
    $region45: #{nlayer_discriminator_forward.8} parent=5 // pred_check
      %p960 = pneg %p959
    $region46: #{nlayer_discriminator_forward.8} parent=5 // pred_check_branch
      %962 = sbr.rel (%p960) target = $region48
    $region47: #{nlayer_discriminator_forward.8} parent=5 // pred_region
      %s963 = ssub.s32 %s9, 2
      // Predicated region
      $region49: #{nlayer_discriminator_forward.8} parent=47 // pred_check
        %p964 = pneg %p141
      $region50: #{nlayer_discriminator_forward.8} parent=47 // pred_check_branch
        %966 = sbr.rel (%p964) target = $region52
      $region51: #{nlayer_discriminator_forward.8} parent=47 // pred_region
        %s967 = smul.u32 32, %s22
        %p968 = scmp.lt.s32.totalorder %s967, 63
        %s969 = scalar_select %p968, %s967, 63
        %p970 = scmp.lt.s32.totalorder %s23, 0
        %s971 = scalar_select %p970, %s23, 0
        %s972 = sadd.s32 %s971, %s969
        %s973 = smul.addr %s972, 8
        %s974 = scalar_lea.vmem %s3, %s973
      $region52: #{nlayer_discriminator_forward.8} parent=47 // pred_fallthru
        _
    $region48: #{nlayer_discriminator_forward.8} parent=5 // pred_fallthru
      _
  $region6: #{nlayer_discriminator_forward.8} parent=0 // loop_footer
    %s13 = sadd.s32 1, %s9
  $region7: #{nlayer_discriminator_forward.8} parent=0 // loop_footer_branch
    %8 = sbr.rel target = $region3
  $region8: #{nlayer_discriminator_forward.8} parent=0 // loop_exit
    _

// kernel: nlayer_discriminator_forward.9
$region0: #{nlayer_discriminator_forward.9}
  #allocation0 [shape = 'u32[]', space=smem, size = 0x4, offset = 0x4, fixed_abs, tag = 'smem constant byte address 0x4 - core index']
  #allocation1 [shape = 'u32[144,128]{1,0:T(1,128)}', space=vmem, size = 0x12000, scoped, tag = 'internal scratch']
  #allocation2 [shape = 'f32[128,128]{1,0:T(8,128)}', space=vmem, size = 0x10000, scoped, tag = 'scratch operand']
  %s0 = inlined_call_operand.vmem [shape: bf16[128,128], index: 0, kind: input, shape index: {}]
  %s1 = inlined_call_operand.vmem [shape: bf16[128,128], index: 1, kind: input, shape index: {}]
  %s2 = inlined_call_operand.vmem [shape: f32[1,128], index: 2, kind: input, shape index: {}]
  %s3 = inlined_call_operand.vmem [shape: f32[128,128], index: 3, kind: output, shape index: {}]
  %s4 = sld [smem:[#allocation0]]
  $region30: #{nlayer_discriminator_forward.9} parent=0
    _
  %s6 = ssub.s32 1, %s4
  %s7 = scalar_select 0, %s6, %s4
  // Predicated region
  $region2: #{nlayer_discriminator_forward.9} parent=0 // pred_check
    _
  $region3: #{nlayer_discriminator_forward.9} parent=0 // pred_check_branch
    %9 = sbr.rel (0) target = $region5
  $region4: #{nlayer_discriminator_forward.9} parent=0 // pred_region
    _
  $region5: #{nlayer_discriminator_forward.9} parent=0 // pred_fallthru
    _
  // Predicated region
  $region6: #{nlayer_discriminator_forward.9} parent=0 // pred_check
    _
  $region7: #{nlayer_discriminator_forward.9} parent=0 // pred_check_branch
    %11 = sbr.rel (0) target = $region9
  $region8: #{nlayer_discriminator_forward.9} parent=0 // pred_region
    _
  $region9: #{nlayer_discriminator_forward.9} parent=0 // pred_fallthru
    _
  // Predicated region
  $region10: #{nlayer_discriminator_forward.9} parent=0 // pred_check
    _
  $region11: #{nlayer_discriminator_forward.9} parent=0 // pred_check_branch
    %13 = sbr.rel (0) target = $region13
  $region12: #{nlayer_discriminator_forward.9} parent=0 // pred_region
    _
  $region13: #{nlayer_discriminator_forward.9} parent=0 // pred_fallthru
    _
  %p15 = scmp.eq.s32.totalorder 0, 0
  // Predicated region
  $region14: #{nlayer_discriminator_forward.9} parent=0 // pred_check
    %p16 = pneg %p15
  $region15: #{nlayer_discriminator_forward.9} parent=0 // pred_check_branch
    %18 = sbr.rel (%p16) target = $region17
  $region16: #{nlayer_discriminator_forward.9} parent=0 // pred_region
    %19 = vst [vmem:[#allocation2] sm:$0xff] 0.0
    %20 = vst [vmem:[#allocation2 + $0x8] sm:$0xff] 0.0
    %21 = vst [vmem:[#allocation2 + $0x10] sm:$0xff] 0.0
    %22 = vst [vmem:[#allocation2 + $0x18] sm:$0xff] 0.0
    %23 = vst [vmem:[#allocation2 + $0x20] sm:$0xff] 0.0
    %24 = vst [vmem:[#allocation2 + $0x28] sm:$0xff] 0.0
    %25 = vst [vmem:[#allocation2 + $0x30] sm:$0xff] 0.0
    %26 = vst [vmem:[#allocation2 + $0x38] sm:$0xff] 0.0
    %27 = vst [vmem:[#allocation2 + $0x40] sm:$0xff] 0.0
    %28 = vst [vmem:[#allocation2 + $0x48] sm:$0xff] 0.0
    %29 = vst [vmem:[#allocation2 + $0x50] sm:$0xff] 0.0
    %30 = vst [vmem:[#allocation2 + $0x58] sm:$0xff] 0.0
    %31 = vst [vmem:[#allocation2 + $0x60] sm:$0xff] 0.0
    %32 = vst [vmem:[#allocation2 + $0x68] sm:$0xff] 0.0
    %33 = vst [vmem:[#allocation2 + $0x70] sm:$0xff] 0.0
    %34 = vst [vmem:[#allocation2 + $0x78] sm:$0xff] 0.0
  $region17: #{nlayer_discriminator_forward.9} parent=0 // pred_fallthru
    _
  %v35 = vld [vmem:[#allocation2] sm:$0xff]
  %v36 = vld [vmem:[#allocation2 + $0x8] sm:$0xff]
  %v37 = vld [vmem:[#allocation2 + $0x10] sm:$0xff]
  %v38 = vld [vmem:[#allocation2 + $0x18] sm:$0xff]
  %v39 = vld [vmem:[#allocation2 + $0x20] sm:$0xff]
  %v40 = vld [vmem:[#allocation2 + $0x28] sm:$0xff]
  %v41 = vld [vmem:[#allocation2 + $0x30] sm:$0xff]
  %v42 = vld [vmem:[#allocation2 + $0x38] sm:$0xff]
  %v43 = vld [vmem:[#allocation2 + $0x40] sm:$0xff]
  %v44 = vld [vmem:[#allocation2 + $0x48] sm:$0xff]
  %v45 = vld [vmem:[#allocation2 + $0x50] sm:$0xff]
  %v46 = vld [vmem:[#allocation2 + $0x58] sm:$0xff]
  %v47 = vld [vmem:[#allocation2 + $0x60] sm:$0xff]
  %v48 = vld [vmem:[#allocation2 + $0x68] sm:$0xff]
  %v49 = vld [vmem:[#allocation2 + $0x70] sm:$0xff]
  %v50 = vld [vmem:[#allocation2 + $0x78] sm:$0xff]
  %v51 = vld [vmem:[%s0] sm:$0xf]
  %v52 = vld [vmem:[%s0 + $0x4] sm:$0xf]
  %v53 = vld [vmem:[%s0 + $0x8] sm:$0xf]
  %v54 = vld [vmem:[%s0 + $0xc] sm:$0xf]
  %v55 = vld [vmem:[%s0 + $0x10] sm:$0xf]
  %v56 = vld [vmem:[%s0 + $0x14] sm:$0xf]
  %v57 = vld [vmem:[%s0 + $0x18] sm:$0xf]
  %v58 = vld [vmem:[%s0 + $0x1c] sm:$0xf]
  %v59 = vld [vmem:[%s0 + $0x20] sm:$0xf]
  %v60 = vld [vmem:[%s0 + $0x24] sm:$0xf]
  %v61 = vld [vmem:[%s0 + $0x28] sm:$0xf]
  %v62 = vld [vmem:[%s0 + $0x2c] sm:$0xf]
  %v63 = vld [vmem:[%s0 + $0x30] sm:$0xf]
  %v64 = vld [vmem:[%s0 + $0x34] sm:$0xf]
  %v65 = vld [vmem:[%s0 + $0x38] sm:$0xf]
  %v66 = vld [vmem:[%s0 + $0x3c] sm:$0xf]
  %v67 = vld [vmem:[%s1] sm:$0xf]
  %v68 = vld [vmem:[%s1 + $0x4] sm:$0xf]
  %v69 = vld [vmem:[%s1 + $0x8] sm:$0xf]
  %v70 = vld [vmem:[%s1 + $0xc] sm:$0xf]
  %v71 = vld [vmem:[%s1 + $0x10] sm:$0xf]
  %v72 = vld [vmem:[%s1 + $0x14] sm:$0xf]
  %v73 = vld [vmem:[%s1 + $0x18] sm:$0xf]
  %v74 = vld [vmem:[%s1 + $0x1c] sm:$0xf]
  %v75 = vld [vmem:[%s1 + $0x20] sm:$0xf]
  %v76 = vld [vmem:[%s1 + $0x24] sm:$0xf]
  %v77 = vld [vmem:[%s1 + $0x28] sm:$0xf]
  %v78 = vld [vmem:[%s1 + $0x2c] sm:$0xf]
  %v79 = vld [vmem:[%s1 + $0x30] sm:$0xf]
  %v80 = vld [vmem:[%s1 + $0x34] sm:$0xf]
  %v81 = vld [vmem:[%s1 + $0x38] sm:$0xf]
  %v82 = vld [vmem:[%s1 + $0x3c] sm:$0xf]
  %v99 = vunpack.c.l.b16 %v51
  %v100 = vunpack.c.l.b16 %v52
  %v101 = vunpack.c.l.b16 %v53
  %v102 = vunpack.c.l.b16 %v54
  %v103 = vunpack.c.l.b16 %v55
  %v104 = vunpack.c.l.b16 %v56
  %v105 = vunpack.c.l.b16 %v57
  %v106 = vunpack.c.l.b16 %v58
  %v107 = vunpack.c.l.b16 %v59
  %v108 = vunpack.c.l.b16 %v60
  %v109 = vunpack.c.l.b16 %v61
  %v110 = vunpack.c.l.b16 %v62
  %v111 = vunpack.c.l.b16 %v63
  %v112 = vunpack.c.l.b16 %v64
  %v113 = vunpack.c.l.b16 %v65
  %v114 = vunpack.c.l.b16 %v66
  %v115 = vpack.c.b16 %v100, %v99
  %v116 = vpack.c.b16 %v102, %v101
  %v117 = vpack.c.b16 %v104, %v103
  %v118 = vpack.c.b16 %v106, %v105
  %v119 = vpack.c.b16 %v108, %v107
  %v120 = vpack.c.b16 %v110, %v109
  %v121 = vpack.c.b16 %v112, %v111
  %v122 = vpack.c.b16 %v114, %v113
  %v147 = vunpack.c.l.b16 %v67
  %v148 = vunpack.c.l.b16 %v68
  %v149 = vunpack.c.l.b16 %v69
  %v150 = vunpack.c.l.b16 %v70
  %v151 = vunpack.c.l.b16 %v71
  %v152 = vunpack.c.l.b16 %v72
  %v153 = vunpack.c.l.b16 %v73
  %v154 = vunpack.c.l.b16 %v74
  %v155 = vunpack.c.l.b16 %v75
  %v156 = vunpack.c.l.b16 %v76
  %v157 = vunpack.c.l.b16 %v77
  %v158 = vunpack.c.l.b16 %v78
  %v159 = vunpack.c.l.b16 %v79
  %v160 = vunpack.c.l.b16 %v80
  %v161 = vunpack.c.l.b16 %v81
  %v162 = vunpack.c.l.b16 %v82
  %v163 = vpack.c.b16 %v148, %v147
  %v164 = vpack.c.b16 %v150, %v149
  %v165 = vpack.c.b16 %v152, %v151
  %v166 = vpack.c.b16 %v154, %v153
  %v167 = vpack.c.b16 %v156, %v155
  %v168 = vpack.c.b16 %v158, %v157
  %v169 = vpack.c.b16 %v160, %v159
  %v170 = vpack.c.b16 %v162, %v161
  %179 = vmatprep.subr.bf16.mxu0 0
  %180 = vmatpush1.bf16.msra.mxu0 %v170
  %181 = vmatprep.subr.bf16.mxu0 0
  %182 = vmatpush1.bf16.msra.mxu0 %v169
  %183 = vmatprep.subr.bf16.mxu0 0
  %184 = vmatpush1.bf16.msra.mxu0 %v168
  %185 = vmatprep.subr.bf16.mxu0 0
  %186 = vmatpush1.bf16.msra.mxu0 %v167
  %187 = vmatprep.subr.bf16.mxu0 0
  %188 = vmatpush1.bf16.msra.mxu0 %v166
  %189 = vmatprep.subr.bf16.mxu0 0
  %190 = vmatpush1.bf16.msra.mxu0 %v165
  %191 = vmatprep.subr.bf16.mxu0 0
  %192 = vmatpush1.bf16.msra.mxu0 %v164
  %193 = vmatprep.subr.bf16.mxu0 0
  %194 = vmatpush1.bf16.msra.mxu0 %v163
  %195 = vmatprep.subr.bf16.mxu0 0
  %196 = vmatpush2.bf16.msra.mxu0 0
  %197 = vmatprep.subr.bf16.mxu0 0
  %198 = vmatpush2.bf16.msra.mxu0 0
  %199 = vmatprep.subr.bf16.mxu0 0
  %200 = vmatpush2.bf16.msra.mxu0 0
  %201 = vmatprep.subr.bf16.mxu0 0
  %202 = vmatpush2.bf16.msra.mxu0 0
  %203 = vmatprep.subr.bf16.mxu0 0
  %204 = vmatpush2.bf16.msra.mxu0 0
  %205 = vmatprep.subr.bf16.mxu0 0
  %206 = vmatpush2.bf16.msra.mxu0 0
  %207 = vmatprep.subr.bf16.mxu0 0
  %208 = vmatpush2.bf16.msra.mxu0 0
  %209 = vmatprep.subr.bf16.mxu0 0
  %210 = vmatpush2.bf16.msra.mxu0 0
  %211 = vmatprep.mubr.bf16.mxu0 0
  %212 = vmatmul.mubr.bf16.gmra.mxu0 %v115
  %v213 = vpop.f32.mrf.mxu0
  %v214 = vadd.f32 0.0, %v213
  %v215 = vpop.f32.mrf.mxu0
  %v216 = vpop.f32.mrf.mxu0
  %v217 = vadd.f32 0.0, %v216
  %v218 = vpop.f32.mrf.mxu0
  %219 = vmatprep.mubr.bf16.mxu0 0
  %220 = vmatmul.mubr.bf16.gmra.mxu0 %v116
  %v221 = vpop.f32.mrf.mxu0
  %v222 = vadd.f32 0.0, %v221
  %v223 = vpop.f32.mrf.mxu0
  %v224 = vpop.f32.mrf.mxu0
  %v225 = vadd.f32 0.0, %v224
  %v226 = vpop.f32.mrf.mxu0
  %227 = vmatprep.mubr.bf16.mxu0 0
  %228 = vmatmul.mubr.bf16.gmra.mxu0 %v117
  %v229 = vpop.f32.mrf.mxu0
  %v230 = vadd.f32 0.0, %v229
  %v231 = vpop.f32.mrf.mxu0
  %v232 = vpop.f32.mrf.mxu0
  %v233 = vadd.f32 0.0, %v232
  %v234 = vpop.f32.mrf.mxu0
  %235 = vmatprep.mubr.bf16.mxu0 0
  %236 = vmatmul.mubr.bf16.gmra.mxu0 %v118
  %v237 = vpop.f32.mrf.mxu0
  %v238 = vadd.f32 0.0, %v237
  %v239 = vpop.f32.mrf.mxu0
  %v240 = vpop.f32.mrf.mxu0
  %v241 = vadd.f32 0.0, %v240
  %v242 = vpop.f32.mrf.mxu0
  %243 = vmatprep.mubr.bf16.mxu0 0
  %244 = vmatmul.mubr.bf16.gmra.mxu0 %v119
  %v245 = vpop.f32.mrf.mxu0
  %v246 = vadd.f32 0.0, %v245
  %v247 = vpop.f32.mrf.mxu0
  %v248 = vpop.f32.mrf.mxu0
  %v249 = vadd.f32 0.0, %v248
  %v250 = vpop.f32.mrf.mxu0
  %251 = vmatprep.mubr.bf16.mxu0 0
  %252 = vmatmul.mubr.bf16.gmra.mxu0 %v120
  %v253 = vpop.f32.mrf.mxu0
  %v254 = vadd.f32 0.0, %v253
  %v255 = vpop.f32.mrf.mxu0
  %v256 = vpop.f32.mrf.mxu0
  %v257 = vadd.f32 0.0, %v256
  %v258 = vpop.f32.mrf.mxu0
  %259 = vmatprep.mubr.bf16.mxu0 0
  %260 = vmatmul.mubr.bf16.gmra.mxu0 %v121
  %v261 = vpop.f32.mrf.mxu0
  %v262 = vadd.f32 0.0, %v261
  %v263 = vpop.f32.mrf.mxu0
  %v264 = vpop.f32.mrf.mxu0
  %v265 = vadd.f32 0.0, %v264
  %v266 = vpop.f32.mrf.mxu0
  %267 = vmatprep.mubr.bf16.mxu0 0
  %268 = vmatmul.mubr.bf16.gmra.mxu0 %v122
  %v269 = vpop.f32.mrf.mxu0
  %v270 = vadd.f32 0.0, %v269
  %v271 = vpop.f32.mrf.mxu0
  %v272 = vpop.f32.mrf.mxu0
  %v273 = vadd.f32 0.0, %v272
  %v274 = vpop.f32.mrf.mxu0
  %275 = vdwg.mxu0
  %v276 = vadd.f32 %v35, %v214
  %v277 = vadd.f32 %v36, %v217
  %v278 = vadd.f32 %v37, %v222
  %v279 = vadd.f32 %v38, %v225
  %v280 = vadd.f32 %v39, %v230
  %v281 = vadd.f32 %v40, %v233
  %v282 = vadd.f32 %v41, %v238
  %v283 = vadd.f32 %v42, %v241
  %v284 = vadd.f32 %v43, %v246
  %v285 = vadd.f32 %v44, %v249
  %v286 = vadd.f32 %v45, %v254
  %v287 = vadd.f32 %v46, %v257
  %v288 = vadd.f32 %v47, %v262
  %v289 = vadd.f32 %v48, %v265
  %v290 = vadd.f32 %v49, %v270
  %v291 = vadd.f32 %v50, %v273
  %292 = vst [vmem:[#allocation2] sm:$0xff] %v276
  %293 = vst [vmem:[#allocation2 + $0x8] sm:$0xff] %v277
  %294 = vst [vmem:[#allocation2 + $0x10] sm:$0xff] %v278
  %295 = vst [vmem:[#allocation2 + $0x18] sm:$0xff] %v279
  %296 = vst [vmem:[#allocation2 + $0x20] sm:$0xff] %v280
  %297 = vst [vmem:[#allocation2 + $0x28] sm:$0xff] %v281
  %298 = vst [vmem:[#allocation2 + $0x30] sm:$0xff] %v282
  %299 = vst [vmem:[#allocation2 + $0x38] sm:$0xff] %v283
  %300 = vst [vmem:[#allocation2 + $0x40] sm:$0xff] %v284
  %301 = vst [vmem:[#allocation2 + $0x48] sm:$0xff] %v285
  %302 = vst [vmem:[#allocation2 + $0x50] sm:$0xff] %v286
  %303 = vst [vmem:[#allocation2 + $0x58] sm:$0xff] %v287
  %304 = vst [vmem:[#allocation2 + $0x60] sm:$0xff] %v288
  %305 = vst [vmem:[#allocation2 + $0x68] sm:$0xff] %v289
  %306 = vst [vmem:[#allocation2 + $0x70] sm:$0xff] %v290
  %307 = vst [vmem:[#allocation2 + $0x78] sm:$0xff] %v291
  // Predicated region
  $region18: #{nlayer_discriminator_forward.9} parent=0 // pred_check
    %p308 = pneg %p15
  $region19: #{nlayer_discriminator_forward.9} parent=0 // pred_check_branch
    %310 = sbr.rel (%p308) target = $region21
  $region20: #{nlayer_discriminator_forward.9} parent=0 // pred_region
    %v311 = vld [vmem:[#allocation2] sm:$0xff]
    %v312 = vld [vmem:[#allocation2 + $0x8] sm:$0xff]
    %v313 = vld [vmem:[#allocation2 + $0x10] sm:$0xff]
    %v314 = vld [vmem:[#allocation2 + $0x18] sm:$0xff]
    %v315 = vld [vmem:[#allocation2 + $0x20] sm:$0xff]
    %v316 = vld [vmem:[#allocation2 + $0x28] sm:$0xff]
    %v317 = vld [vmem:[#allocation2 + $0x30] sm:$0xff]
    %v318 = vld [vmem:[#allocation2 + $0x38] sm:$0xff]
    %v319 = vld [vmem:[#allocation2 + $0x40] sm:$0xff]
    %v320 = vld [vmem:[#allocation2 + $0x48] sm:$0xff]
    %v321 = vld [vmem:[#allocation2 + $0x50] sm:$0xff]
    %v322 = vld [vmem:[#allocation2 + $0x58] sm:$0xff]
    %v323 = vld [vmem:[#allocation2 + $0x60] sm:$0xff]
    %v324 = vld [vmem:[#allocation2 + $0x68] sm:$0xff]
    %v325 = vld [vmem:[#allocation2 + $0x70] sm:$0xff]
    %v326 = vld [vmem:[#allocation2 + $0x78] sm:$0xff]
    %v327 = vld [vmem:[%s2] sm:$0x1]
    %v329 = vlaneseq
    %v330 = vshrl.u32 %v329, 7
    %v331 = vsub.s32 0, %v330
    %v332 = vrot.slane %v327, %v331
    %v334 = vadd.f32 %v311, %v332
    %v335 = vadd.f32 %v312, %v332
    %v336 = vadd.f32 %v313, %v332
    %v337 = vadd.f32 %v314, %v332
    %v338 = vadd.f32 %v315, %v332
    %v339 = vadd.f32 %v316, %v332
    %v340 = vadd.f32 %v317, %v332
    %v341 = vadd.f32 %v318, %v332
    %v342 = vadd.f32 %v319, %v332
    %v343 = vadd.f32 %v320, %v332
    %v344 = vadd.f32 %v321, %v332
    %v345 = vadd.f32 %v322, %v332
    %v346 = vadd.f32 %v323, %v332
    %v347 = vadd.f32 %v324, %v332
    %v348 = vadd.f32 %v325, %v332
    %v349 = vadd.f32 %v326, %v332
    %350 = vst [vmem:[%s3] sm:$0xff] %v334
    %351 = vst [vmem:[%s3 + $0x8] sm:$0xff] %v335
    %352 = vst [vmem:[%s3 + $0x10] sm:$0xff] %v336
    %353 = vst [vmem:[%s3 + $0x18] sm:$0xff] %v337
    %354 = vst [vmem:[%s3 + $0x20] sm:$0xff] %v338
    %355 = vst [vmem:[%s3 + $0x28] sm:$0xff] %v339
    %356 = vst [vmem:[%s3 + $0x30] sm:$0xff] %v340
    %357 = vst [vmem:[%s3 + $0x38] sm:$0xff] %v341
    %358 = vst [vmem:[%s3 + $0x40] sm:$0xff] %v342
    %359 = vst [vmem:[%s3 + $0x48] sm:$0xff] %v343
    %360 = vst [vmem:[%s3 + $0x50] sm:$0xff] %v344
    %361 = vst [vmem:[%s3 + $0x58] sm:$0xff] %v345
    %362 = vst [vmem:[%s3 + $0x60] sm:$0xff] %v346
    %363 = vst [vmem:[%s3 + $0x68] sm:$0xff] %v347
    %364 = vst [vmem:[%s3 + $0x70] sm:$0xff] %v348
    %365 = vst [vmem:[%s3 + $0x78] sm:$0xff] %v349
  $region21: #{nlayer_discriminator_forward.9} parent=0 // pred_fallthru
    _
  // Predicated region
  $region22: #{nlayer_discriminator_forward.9} parent=0 // pred_check
    _
  $region23: #{nlayer_discriminator_forward.9} parent=0 // pred_check_branch
    %367 = sbr.rel (0) target = $region25
  $region24: #{nlayer_discriminator_forward.9} parent=0 // pred_region
    _
  $region25: #{nlayer_discriminator_forward.9} parent=0 // pred_fallthru
    _
  // Predicated region
  $region26: #{nlayer_discriminator_forward.9} parent=0 // pred_check
    _
  $region27: #{nlayer_discriminator_forward.9} parent=0 // pred_check_branch
    %369 = sbr.rel (0) target = $region29
  $region28: #{nlayer_discriminator_forward.9} parent=0 // pred_region
    _
  $region29: #{nlayer_discriminator_forward.9} parent=0 // pred_fallthru
    _

// kernel: nlayer_discriminator_forward.10
$region0: #{nlayer_discriminator_forward.10}
  #allocation0 [shape = 'u32[]', space=smem, size = 0x4, offset = 0x4, fixed_abs, tag = 'smem constant byte address 0x4 - core index']
  #allocation1 [shape = 'u32[144,128]{1,0:T(1,128)}', space=vmem, size = 0x12000, scoped, tag = 'internal scratch']
  %s0 = inlined_call_operand.vmem [shape: f32[2,64,16], index: 0, kind: input, shape index: {}]
  %s1 = inlined_call_operand.vmem [shape: f32[2,64,16], index: 1, kind: output, shape index: {}]
  %s2 = sld [smem:[#allocation0]]
  $region37: #{nlayer_discriminator_forward.10} parent=0
    _
  %s4 = ssub.s32 1, %s2
  %s5 = scalar_select 0, %s4, %s2
  loop: start=0, step=1, limit=4
  $region2: #{nlayer_discriminator_forward.10} parent=0 // loop_pre_header
    _
  $region3: #{nlayer_discriminator_forward.10} parent=0 // loop_header
    %s7 = sphi 0, %s11
    %p8 = scmp.ge.s32.totalorder %s7, 4
    %s17 = sphi 0, %s19
    %s20 = sphi 0, %s17
    %s21 = sphi 0, %s20
    %s37 = sphi 0, %s21
    %s43 = sphi 0, %s45
    %s46 = sphi 0, %s43
    %s47 = sphi 0, %s46
    %s63 = sphi 0, %s47
  $region4: #{nlayer_discriminator_forward.10} parent=0 // loop_header_branch
    %10 = sbr.rel (%p8) target = $region8
  $region5: #{nlayer_discriminator_forward.10} parent=0 // loop_body
    %s12 = ssub.s32 %s7, 1
    %s13 = ssub.s32 %s7, 2
    %s14 = sadd.s32 %s7, 1
    %s15 = ssub.s32 %s7, %s14
    %p16 = scmp.eq.s32.totalorder %s15, 0
    %s18 = sadd.s32 %s17, 1
    %s19 = scalar_select %p16, %s17, %s18
    %p22 = pneg %p16
    %p23 = scmp.eq.s32.totalorder %s7, 1
    %p24 = por %p22, %p23
    %p25 = scmp.ne.s32.totalorder %s17, %s20
    %p26 = scmp.eq.s32.totalorder %s7, 0
    %p27 = por %p25, %p26
    %p28 = scmp.ne.s32.totalorder %s17, %s20
    %p29 = scmp.eq.s32.totalorder %s12, 1
    %p30 = por %p28, %p29
    %p31 = scmp.ne.s32.totalorder %s20, %s21
    %p32 = scmp.eq.s32.totalorder %s12, 0
    %p33 = por %p31, %p32
    %p34 = scmp.ne.s32.totalorder %s20, %s21
    %p35 = scmp.eq.s32.totalorder %s13, 1
    %p36 = por %p34, %p35
    %p38 = scmp.ne.s32.totalorder %s21, %s37
    %p39 = scmp.eq.s32.totalorder %s13, 0
    %p40 = por %p38, %p39
    %s41 = ssub.s32 %s7, %s14
    %p42 = scmp.eq.s32.totalorder %s41, 0
    %s44 = sadd.s32 %s43, 1
    %s45 = scalar_select %p42, %s43, %s44
    %p48 = pneg %p42
    %p49 = scmp.eq.s32.totalorder %s7, 1
    %p50 = por %p48, %p49
    %p51 = scmp.ne.s32.totalorder %s43, %s46
    %p52 = scmp.eq.s32.totalorder %s7, 0
    %p53 = por %p51, %p52
    %p54 = scmp.ne.s32.totalorder %s43, %s46
    %p55 = scmp.eq.s32.totalorder %s12, 1
    %p56 = por %p54, %p55
    %p57 = scmp.ne.s32.totalorder %s46, %s47
    %p58 = scmp.eq.s32.totalorder %s12, 0
    %p59 = por %p57, %p58
    %p60 = scmp.ne.s32.totalorder %s46, %s47
    %p61 = scmp.eq.s32.totalorder %s13, 1
    %p62 = por %p60, %p61
    %p64 = scmp.ne.s32.totalorder %s47, %s63
    %p65 = scmp.eq.s32.totalorder %s13, 0
    %p66 = por %p64, %p65
    %p67 = scmp.le.s32.totalorder 1, %s7
    %p68 = scmp.lt.s32.totalorder %s7, 3
    %p69 = pnand %p67, %p68
    %p70 = pneg %p69
    // Predicated region
    $region9: #{nlayer_discriminator_forward.10} parent=5 // pred_check
      _
    $region10: #{nlayer_discriminator_forward.10} parent=5 // pred_check_branch
      %72 = sbr.rel (%p69) target = $region12
    $region11: #{nlayer_discriminator_forward.10} parent=5 // pred_region
      %s73 = ssub.s32 %s7, 1
    $region12: #{nlayer_discriminator_forward.10} parent=5 // pred_fallthru
      _
    %p74 = scmp.lt.s32.totalorder %s7, 2
    // Predicated region
    $region13: #{nlayer_discriminator_forward.10} parent=5 // pred_check
      %p75 = pneg %p74
    $region14: #{nlayer_discriminator_forward.10} parent=5 // pred_check_branch
      %77 = sbr.rel (%p75) target = $region16
    $region15: #{nlayer_discriminator_forward.10} parent=5 // pred_region
      // Predicated region
      $region17: #{nlayer_discriminator_forward.10} parent=15 // pred_check
        %p78 = pneg %p27
      $region18: #{nlayer_discriminator_forward.10} parent=15 // pred_check_branch
        %80 = sbr.rel (%p78) target = $region20
      $region19: #{nlayer_discriminator_forward.10} parent=15 // pred_region
        %p81 = scmp.lt.s32.totalorder %s7, 1
        %s82 = scalar_select %p81, %s7, 1
        %s83 = smul.addr %s82, 8
        %s84 = smul.addr %s83, 8
        %s85 = scalar_lea.vmem %s0, %s84
      $region20: #{nlayer_discriminator_forward.10} parent=15 // pred_fallthru
        _
    $region16: #{nlayer_discriminator_forward.10} parent=5 // pred_fallthru
      _
    %p86 = scmp.le.s32.totalorder 1, %s7
    %p87 = scmp.lt.s32.totalorder %s7, 3
    %p88 = pnand %p86, %p87
    %p89 = pneg %p88
    // Predicated region
    $region21: #{nlayer_discriminator_forward.10} parent=5 // pred_check
      _
    $region22: #{nlayer_discriminator_forward.10} parent=5 // pred_check_branch
      %91 = sbr.rel (%p88) target = $region24
    $region23: #{nlayer_discriminator_forward.10} parent=5 // pred_region
      %s92 = ssub.s32 %s7, 1
      %p93 = scmp.lt.s32.totalorder %s12, 1
      %s94 = scalar_select %p93, %s12, 1
      %s95 = smul.addr %s94, 8
      %s96 = smul.addr %s95, 8
      %s97 = scalar_lea.vmem %s0, %s96
      %p98 = pneg %p33
      %p99 = pneg %p30
      %p100 = pneg %p59
      %p101 = pneg %p56
      %p102 = scmp.lt.s32.totalorder %s12, 1
      %s103 = scalar_select %p102, %s12, 1
      %s104 = smul.addr %s103, 8
      %s105 = smul.addr %s104, 8
      %s106 = scalar_lea.vmem %s1, %s105
      %p107 = scmp.lt.s32.totalorder %s12, 1
      %s108 = scalar_select %p107, %s12, 1
      %s109 = smul.addr %s108, 8
      %s110 = smul.addr %s109, 8
      %s111 = scalar_lea.vmem %s0, %s110
      %p112 = scmp.lt.s32.totalorder %s12, 1
      %s113 = scalar_select %p112, %s12, 1
      %s114 = smul.addr %s113, 8
      %s115 = smul.addr %s114, 8
      %s116 = scalar_lea.vmem %s1, %s115
      %v117 = vld [vmem:[%s111] sm:$0xff]
      %v118 = vld [vmem:[%s111 + $0x8] sm:$0xff]
      %v119 = vld [vmem:[%s111 + $0x10] sm:$0xff]
      %v120 = vld [vmem:[%s111 + $0x18] sm:$0xff]
      %v121 = vld [vmem:[%s111 + $0x20] sm:$0xff]
      %v122 = vld [vmem:[%s111 + $0x28] sm:$0xff]
      %v123 = vld [vmem:[%s111 + $0x30] sm:$0xff]
      %v124 = vld [vmem:[%s111 + $0x38] sm:$0xff]
      %vm125 = vcmask 130048
      %v126 = vsel %vm125, %v117, 0.0
      %v127 = vsel %vm125, %v118, 0.0
      %v128 = vadd.f32 %v126, %v127
      %v129 = vsel %vm125, %v119, 0.0
      %v130 = vadd.f32 %v128, %v129
      %v131 = vsel %vm125, %v120, 0.0
      %v132 = vadd.f32 %v130, %v131
      %v133 = vsel %vm125, %v121, 0.0
      %v134 = vadd.f32 %v132, %v133
      %v135 = vsel %vm125, %v122, 0.0
      %v136 = vadd.f32 %v134, %v135
      %v137 = vsel %vm125, %v123, 0.0
      %v138 = vadd.f32 %v136, %v137
      %v139 = vsel %vm125, %v124, 0.0
      %v140 = vadd.f32 %v138, %v139
      %v141 = vrot.slane %v140, 4
      %v142 = vadd.f32 %v140, %v141
      %v143 = vrot.slane %v142, 2
      %v144 = vadd.f32 %v142, %v143
      %v145 = vrot.slane %v144, 1
      %v146 = vadd.f32 %v144, %v145
      %v147 = vrcp.pop 64.0
      %v148 = vmul.f32 %v146, %v147
      %v149 = vsub.f32 %v117, %v148
      %v150 = vsub.f32 %v118, %v148
      %v151 = vsub.f32 %v119, %v148
      %v152 = vsub.f32 %v120, %v148
      %v153 = vsub.f32 %v121, %v148
      %v154 = vsub.f32 %v122, %v148
      %v155 = vsub.f32 %v123, %v148
      %v156 = vsub.f32 %v124, %v148
      %v157 = vmul.f32 %v149, %v149
      %v158 = vmul.f32 %v150, %v150
      %v159 = vmul.f32 %v151, %v151
      %v160 = vmul.f32 %v152, %v152
      %v161 = vmul.f32 %v153, %v153
      %v162 = vmul.f32 %v154, %v154
      %v163 = vmul.f32 %v155, %v155
      %v164 = vmul.f32 %v156, %v156
      %v165 = vsel %vm125, %v157, 0.0
      %v166 = vsel %vm125, %v158, 0.0
      %v167 = vadd.f32 %v165, %v166
      %v168 = vsel %vm125, %v159, 0.0
      %v169 = vadd.f32 %v167, %v168
      %v170 = vsel %vm125, %v160, 0.0
      %v171 = vadd.f32 %v169, %v170
      %v172 = vsel %vm125, %v161, 0.0
      %v173 = vadd.f32 %v171, %v172
      %v174 = vsel %vm125, %v162, 0.0
      %v175 = vadd.f32 %v173, %v174
      %v176 = vsel %vm125, %v163, 0.0
      %v177 = vadd.f32 %v175, %v176
      %v178 = vsel %vm125, %v164, 0.0
      %v179 = vadd.f32 %v177, %v178
      %v180 = vrot.slane %v179, 4
      %v181 = vadd.f32 %v179, %v180
      %v182 = vrot.slane %v181, 2
      %v183 = vadd.f32 %v181, %v182
      %v184 = vrot.slane %v183, 1
      %v185 = vadd.f32 %v183, %v184
      %v186 = vmul.f32 %v185, %v147
      %v187 = vadd.f32 %v186, 1e-05
      %v188 = vrsqrt.pop %v187
      %v189 = vmul.f32 %v149, %v188
      %v190 = vmul.f32 %v150, %v188
      %v191 = vmul.f32 %v151, %v188
      %v192 = vmul.f32 %v152, %v188
      %v193 = vmul.f32 %v153, %v188
      %v194 = vmul.f32 %v154, %v188
      %v195 = vmul.f32 %v155, %v188
      %v196 = vmul.f32 %v156, %v188
      %vm197 = vcmp.ge.f32.partialorder %v189, 0.0
      %vm198 = vcmp.ge.f32.partialorder %v190, 0.0
      %vm199 = vcmp.ge.f32.partialorder %v191, 0.0
      %vm200 = vcmp.ge.f32.partialorder %v192, 0.0
      %vm201 = vcmp.ge.f32.partialorder %v193, 0.0
      %vm202 = vcmp.ge.f32.partialorder %v194, 0.0
      %vm203 = vcmp.ge.f32.partialorder %v195, 0.0
      %vm204 = vcmp.ge.f32.partialorder %v196, 0.0
      %v205 = vmul.f32 %v189, 0.2
      %v206 = vmul.f32 %v190, 0.2
      %v207 = vmul.f32 %v191, 0.2
      %v208 = vmul.f32 %v192, 0.2
      %v209 = vmul.f32 %v193, 0.2
      %v210 = vmul.f32 %v194, 0.2
      %v211 = vmul.f32 %v195, 0.2
      %v212 = vmul.f32 %v196, 0.2
      %v213 = vsel %vm197, %v189, %v205
      %v214 = vsel %vm198, %v190, %v206
      %v215 = vsel %vm199, %v191, %v207
      %v216 = vsel %vm200, %v192, %v208
      %v217 = vsel %vm201, %v193, %v209
      %v218 = vsel %vm202, %v194, %v210
      %v219 = vsel %vm203, %v195, %v211
      %v220 = vsel %vm204, %v196, %v212
      %221 = vst.msk [vmem:[%s116] sm:$0xff] %vm125, %v213
      %222 = vst.msk [vmem:[%s116 + $0x8] sm:$0xff] %vm125, %v214
      %223 = vst.msk [vmem:[%s116 + $0x10] sm:$0xff] %vm125, %v215
      %224 = vst.msk [vmem:[%s116 + $0x18] sm:$0xff] %vm125, %v216
      %225 = vst.msk [vmem:[%s116 + $0x20] sm:$0xff] %vm125, %v217
      %226 = vst.msk [vmem:[%s116 + $0x28] sm:$0xff] %vm125, %v218
      %227 = vst.msk [vmem:[%s116 + $0x30] sm:$0xff] %vm125, %v219
      %228 = vst.msk [vmem:[%s116 + $0x38] sm:$0xff] %vm125, %v220
      %p229 = scmp.lt.s32.totalorder %s12, 1
      %s230 = scalar_select %p229, %s12, 1
      %s231 = smul.addr %s230, 8
      %s232 = smul.addr %s231, 8
      %s233 = scalar_lea.vmem %s1, %s232
      // Predicated region
      $region25: #{nlayer_discriminator_forward.10} parent=23 // pred_check
        %p234 = pneg %p56
      $region26: #{nlayer_discriminator_forward.10} parent=23 // pred_check_branch
        %236 = sbr.rel (%p234) target = $region28
      $region27: #{nlayer_discriminator_forward.10} parent=23 // pred_region
        _
      $region28: #{nlayer_discriminator_forward.10} parent=23 // pred_fallthru
        _
    $region24: #{nlayer_discriminator_forward.10} parent=5 // pred_fallthru
      _
    %p237 = scmp.le.s32.totalorder 2, %s7
    // Predicated region
    $region29: #{nlayer_discriminator_forward.10} parent=5 // pred_check
      %p238 = pneg %p237
    $region30: #{nlayer_discriminator_forward.10} parent=5 // pred_check_branch
      %240 = sbr.rel (%p238) target = $region32
    $region31: #{nlayer_discriminator_forward.10} parent=5 // pred_region
      %s241 = ssub.s32 %s7, 2
      // Predicated region
      $region33: #{nlayer_discriminator_forward.10} parent=31 // pred_check
        %p242 = pneg %p62
      $region34: #{nlayer_discriminator_forward.10} parent=31 // pred_check_branch
        %244 = sbr.rel (%p242) target = $region36
      $region35: #{nlayer_discriminator_forward.10} parent=31 // pred_region
        %p245 = scmp.lt.s32.totalorder %s13, 1
        %s246 = scalar_select %p245, %s13, 1
        %s247 = smul.addr %s246, 8
        %s248 = smul.addr %s247, 8
        %s249 = scalar_lea.vmem %s1, %s248
      $region36: #{nlayer_discriminator_forward.10} parent=31 // pred_fallthru
        _
    $region32: #{nlayer_discriminator_forward.10} parent=5 // pred_fallthru
      _
  $region6: #{nlayer_discriminator_forward.10} parent=0 // loop_footer
    %s11 = sadd.s32 1, %s7
  $region7: #{nlayer_discriminator_forward.10} parent=0 // loop_footer_branch
    %6 = sbr.rel target = $region3
  $region8: #{nlayer_discriminator_forward.10} parent=0 // loop_exit
    _

// kernel: nlayer_discriminator_forward.12
$region0: #{nlayer_discriminator_forward.12}
  #allocation0 [shape = 'u32[]', space=smem, size = 0x4, offset = 0x4, fixed_abs, tag = 'smem constant byte address 0x4 - core index']
  #allocation1 [shape = 'u32[144,128]{1,0:T(1,128)}', space=vmem, size = 0x12000, scoped, tag = 'internal scratch']
  %s0 = inlined_call_operand.vmem [shape: f32[2,16,32], index: 0, kind: input, shape index: {}]
  %s1 = inlined_call_operand.vmem [shape: f32[2,16,32], index: 1, kind: output, shape index: {}]
  %s2 = sld [smem:[#allocation0]]
  $region37: #{nlayer_discriminator_forward.12} parent=0
    _
  %s4 = ssub.s32 1, %s2
  %s5 = scalar_select 0, %s4, %s2
  loop: start=0, step=1, limit=4
  $region2: #{nlayer_discriminator_forward.12} parent=0 // loop_pre_header
    _
  $region3: #{nlayer_discriminator_forward.12} parent=0 // loop_header
    %s7 = sphi 0, %s11
    %p8 = scmp.ge.s32.totalorder %s7, 4
    %s17 = sphi 0, %s19
    %s20 = sphi 0, %s17
    %s21 = sphi 0, %s20
    %s37 = sphi 0, %s21
    %s43 = sphi 0, %s45
    %s46 = sphi 0, %s43
    %s47 = sphi 0, %s46
    %s63 = sphi 0, %s47
  $region4: #{nlayer_discriminator_forward.12} parent=0 // loop_header_branch
    %10 = sbr.rel (%p8) target = $region8
  $region5: #{nlayer_discriminator_forward.12} parent=0 // loop_body
    %s12 = ssub.s32 %s7, 1
    %s13 = ssub.s32 %s7, 2
    %s14 = sadd.s32 %s7, 1
    %s15 = ssub.s32 %s7, %s14
    %p16 = scmp.eq.s32.totalorder %s15, 0
    %s18 = sadd.s32 %s17, 1
    %s19 = scalar_select %p16, %s17, %s18
    %p22 = pneg %p16
    %p23 = scmp.eq.s32.totalorder %s7, 1
    %p24 = por %p22, %p23
    %p25 = scmp.ne.s32.totalorder %s17, %s20
    %p26 = scmp.eq.s32.totalorder %s7, 0
    %p27 = por %p25, %p26
    %p28 = scmp.ne.s32.totalorder %s17, %s20
    %p29 = scmp.eq.s32.totalorder %s12, 1
    %p30 = por %p28, %p29
    %p31 = scmp.ne.s32.totalorder %s20, %s21
    %p32 = scmp.eq.s32.totalorder %s12, 0
    %p33 = por %p31, %p32
    %p34 = scmp.ne.s32.totalorder %s20, %s21
    %p35 = scmp.eq.s32.totalorder %s13, 1
    %p36 = por %p34, %p35
    %p38 = scmp.ne.s32.totalorder %s21, %s37
    %p39 = scmp.eq.s32.totalorder %s13, 0
    %p40 = por %p38, %p39
    %s41 = ssub.s32 %s7, %s14
    %p42 = scmp.eq.s32.totalorder %s41, 0
    %s44 = sadd.s32 %s43, 1
    %s45 = scalar_select %p42, %s43, %s44
    %p48 = pneg %p42
    %p49 = scmp.eq.s32.totalorder %s7, 1
    %p50 = por %p48, %p49
    %p51 = scmp.ne.s32.totalorder %s43, %s46
    %p52 = scmp.eq.s32.totalorder %s7, 0
    %p53 = por %p51, %p52
    %p54 = scmp.ne.s32.totalorder %s43, %s46
    %p55 = scmp.eq.s32.totalorder %s12, 1
    %p56 = por %p54, %p55
    %p57 = scmp.ne.s32.totalorder %s46, %s47
    %p58 = scmp.eq.s32.totalorder %s12, 0
    %p59 = por %p57, %p58
    %p60 = scmp.ne.s32.totalorder %s46, %s47
    %p61 = scmp.eq.s32.totalorder %s13, 1
    %p62 = por %p60, %p61
    %p64 = scmp.ne.s32.totalorder %s47, %s63
    %p65 = scmp.eq.s32.totalorder %s13, 0
    %p66 = por %p64, %p65
    %p67 = scmp.le.s32.totalorder 1, %s7
    %p68 = scmp.lt.s32.totalorder %s7, 3
    %p69 = pnand %p67, %p68
    %p70 = pneg %p69
    // Predicated region
    $region9: #{nlayer_discriminator_forward.12} parent=5 // pred_check
      _
    $region10: #{nlayer_discriminator_forward.12} parent=5 // pred_check_branch
      %72 = sbr.rel (%p69) target = $region12
    $region11: #{nlayer_discriminator_forward.12} parent=5 // pred_region
      %s73 = ssub.s32 %s7, 1
    $region12: #{nlayer_discriminator_forward.12} parent=5 // pred_fallthru
      _
    %p74 = scmp.lt.s32.totalorder %s7, 2
    // Predicated region
    $region13: #{nlayer_discriminator_forward.12} parent=5 // pred_check
      %p75 = pneg %p74
    $region14: #{nlayer_discriminator_forward.12} parent=5 // pred_check_branch
      %77 = sbr.rel (%p75) target = $region16
    $region15: #{nlayer_discriminator_forward.12} parent=5 // pred_region
      // Predicated region
      $region17: #{nlayer_discriminator_forward.12} parent=15 // pred_check
        %p78 = pneg %p27
      $region18: #{nlayer_discriminator_forward.12} parent=15 // pred_check_branch
        %80 = sbr.rel (%p78) target = $region20
      $region19: #{nlayer_discriminator_forward.12} parent=15 // pred_region
        %p81 = scmp.lt.s32.totalorder %s7, 1
        %s82 = scalar_select %p81, %s7, 1
        %s83 = smul.addr %s82, 2
        %s84 = smul.addr %s83, 8
        %s85 = scalar_lea.vmem %s0, %s84
      $region20: #{nlayer_discriminator_forward.12} parent=15 // pred_fallthru
        _
    $region16: #{nlayer_discriminator_forward.12} parent=5 // pred_fallthru
      _
    %p86 = scmp.le.s32.totalorder 1, %s7
    %p87 = scmp.lt.s32.totalorder %s7, 3
    %p88 = pnand %p86, %p87
    %p89 = pneg %p88
    // Predicated region
    $region21: #{nlayer_discriminator_forward.12} parent=5 // pred_check
      _
    $region22: #{nlayer_discriminator_forward.12} parent=5 // pred_check_branch
      %91 = sbr.rel (%p88) target = $region24
    $region23: #{nlayer_discriminator_forward.12} parent=5 // pred_region
      %s92 = ssub.s32 %s7, 1
      %p93 = scmp.lt.s32.totalorder %s12, 1
      %s94 = scalar_select %p93, %s12, 1
      %s95 = smul.addr %s94, 2
      %s96 = smul.addr %s95, 8
      %s97 = scalar_lea.vmem %s0, %s96
      %p98 = pneg %p33
      %p99 = pneg %p30
      %p100 = pneg %p59
      %p101 = pneg %p56
      %p102 = scmp.lt.s32.totalorder %s12, 1
      %s103 = scalar_select %p102, %s12, 1
      %s104 = smul.addr %s103, 2
      %s105 = smul.addr %s104, 8
      %s106 = scalar_lea.vmem %s1, %s105
      %p107 = scmp.lt.s32.totalorder %s12, 1
      %s108 = scalar_select %p107, %s12, 1
      %s109 = smul.addr %s108, 2
      %s110 = smul.addr %s109, 8
      %s111 = scalar_lea.vmem %s0, %s110
      %p112 = scmp.lt.s32.totalorder %s12, 1
      %s113 = scalar_select %p112, %s12, 1
      %s114 = smul.addr %s113, 2
      %s115 = smul.addr %s114, 8
      %s116 = scalar_lea.vmem %s1, %s115
      %v117 = vld [vmem:[%s111] sm:$0xff]
      %v118 = vld [vmem:[%s111 + $0x8] sm:$0xff]
      %vm119 = vcmask 261120
      %v120 = vsel %vm119, %v117, 0.0
      %v121 = vsel %vm119, %v118, 0.0
      %v122 = vadd.f32 %v120, %v121
      %v123 = vrot.slane %v122, 4
      %v124 = vadd.f32 %v122, %v123
      %v125 = vrot.slane %v124, 2
      %v126 = vadd.f32 %v124, %v125
      %v127 = vrot.slane %v126, 1
      %v128 = vadd.f32 %v126, %v127
      %v129 = vrcp.pop 16.0
      %v130 = vmul.f32 %v128, %v129
      %v131 = vsub.f32 %v117, %v130
      %v132 = vsub.f32 %v118, %v130
      %v133 = vmul.f32 %v131, %v131
      %v134 = vmul.f32 %v132, %v132
      %v135 = vsel %vm119, %v133, 0.0
      %v136 = vsel %vm119, %v134, 0.0
      %v137 = vadd.f32 %v135, %v136
      %v138 = vrot.slane %v137, 4
      %v139 = vadd.f32 %v137, %v138
      %v140 = vrot.slane %v139, 2
      %v141 = vadd.f32 %v139, %v140
      %v142 = vrot.slane %v141, 1
      %v143 = vadd.f32 %v141, %v142
      %v144 = vmul.f32 %v143, %v129
      %v145 = vadd.f32 %v144, 1e-05
      %v146 = vrsqrt.pop %v145
      %v147 = vmul.f32 %v131, %v146
      %v148 = vmul.f32 %v132, %v146
      %vm149 = vcmp.ge.f32.partialorder %v147, 0.0
      %vm150 = vcmp.ge.f32.partialorder %v148, 0.0
      %v151 = vmul.f32 %v147, 0.2
      %v152 = vmul.f32 %v148, 0.2
      %v153 = vsel %vm149, %v147, %v151
      %v154 = vsel %vm150, %v148, %v152
      %155 = vst.msk [vmem:[%s116] sm:$0xff] %vm119, %v153
      %156 = vst.msk [vmem:[%s116 + $0x8] sm:$0xff] %vm119, %v154
      %p157 = scmp.lt.s32.totalorder %s12, 1
      %s158 = scalar_select %p157, %s12, 1
      %s159 = smul.addr %s158, 2
      %s160 = smul.addr %s159, 8
      %s161 = scalar_lea.vmem %s1, %s160
      // Predicated region
      $region25: #{nlayer_discriminator_forward.12} parent=23 // pred_check
        %p162 = pneg %p56
      $region26: #{nlayer_discriminator_forward.12} parent=23 // pred_check_branch
        %164 = sbr.rel (%p162) target = $region28
      $region27: #{nlayer_discriminator_forward.12} parent=23 // pred_region
        _
      $region28: #{nlayer_discriminator_forward.12} parent=23 // pred_fallthru
        _
    $region24: #{nlayer_discriminator_forward.12} parent=5 // pred_fallthru
      _
    %p165 = scmp.le.s32.totalorder 2, %s7
    // Predicated region
    $region29: #{nlayer_discriminator_forward.12} parent=5 // pred_check
      %p166 = pneg %p165
    $region30: #{nlayer_discriminator_forward.12} parent=5 // pred_check_branch
      %168 = sbr.rel (%p166) target = $region32
    $region31: #{nlayer_discriminator_forward.12} parent=5 // pred_region
      %s169 = ssub.s32 %s7, 2
      // Predicated region
      $region33: #{nlayer_discriminator_forward.12} parent=31 // pred_check
        %p170 = pneg %p62
      $region34: #{nlayer_discriminator_forward.12} parent=31 // pred_check_branch
        %172 = sbr.rel (%p170) target = $region36
      $region35: #{nlayer_discriminator_forward.12} parent=31 // pred_region
        %p173 = scmp.lt.s32.totalorder %s13, 1
        %s174 = scalar_select %p173, %s13, 1
        %s175 = smul.addr %s174, 2
        %s176 = smul.addr %s175, 8
        %s177 = scalar_lea.vmem %s1, %s176
      $region36: #{nlayer_discriminator_forward.12} parent=31 // pred_fallthru
        _
    $region32: #{nlayer_discriminator_forward.12} parent=5 // pred_fallthru
      _
  $region6: #{nlayer_discriminator_forward.12} parent=0 // loop_footer
    %s11 = sadd.s32 1, %s7
  $region7: #{nlayer_discriminator_forward.12} parent=0 // loop_footer_branch
    %6 = sbr.rel target = $region3
  $region8: #{nlayer_discriminator_forward.12} parent=0 // loop_exit
    _

// kernel: nlayer_discriminator_forward.11
$region0: #{nlayer_discriminator_forward.11}
  #allocation0 [shape = 'u32[]', space=smem, size = 0x4, offset = 0x4, fixed_abs, tag = 'smem constant byte address 0x4 - core index']
  #allocation1 [shape = 'u32[144,128]{1,0:T(1,128)}', space=vmem, size = 0x12000, scoped, tag = 'internal scratch']
  #allocation2 [shape = 'f32[32,128]{1,0:T(8,128)}', space=vmem, size = 0x4000, scoped, tag = 'scratch operand']
  %s0 = inlined_call_operand.vmem [shape: bf16[32,256], index: 0, kind: input, shape index: {}]
  %s1 = inlined_call_operand.vmem [shape: bf16[256,128], index: 1, kind: input, shape index: {}]
  %s2 = inlined_call_operand.vmem [shape: f32[1,128], index: 2, kind: input, shape index: {}]
  %s3 = inlined_call_operand.vmem [shape: f32[32,128], index: 3, kind: output, shape index: {}]
  %s4 = sld [smem:[#allocation0]]
  $region30: #{nlayer_discriminator_forward.11} parent=0
    _
  %s6 = ssub.s32 1, %s4
  %s7 = scalar_select 0, %s6, %s4
  // Predicated region
  $region2: #{nlayer_discriminator_forward.11} parent=0 // pred_check
    _
  $region3: #{nlayer_discriminator_forward.11} parent=0 // pred_check_branch
    %9 = sbr.rel (0) target = $region5
  $region4: #{nlayer_discriminator_forward.11} parent=0 // pred_region
    _
  $region5: #{nlayer_discriminator_forward.11} parent=0 // pred_fallthru
    _
  // Predicated region
  $region6: #{nlayer_discriminator_forward.11} parent=0 // pred_check
    _
  $region7: #{nlayer_discriminator_forward.11} parent=0 // pred_check_branch
    %11 = sbr.rel (0) target = $region9
  $region8: #{nlayer_discriminator_forward.11} parent=0 // pred_region
    _
  $region9: #{nlayer_discriminator_forward.11} parent=0 // pred_fallthru
    _
  // Predicated region
  $region10: #{nlayer_discriminator_forward.11} parent=0 // pred_check
    _
  $region11: #{nlayer_discriminator_forward.11} parent=0 // pred_check_branch
    %13 = sbr.rel (0) target = $region13
  $region12: #{nlayer_discriminator_forward.11} parent=0 // pred_region
    _
  $region13: #{nlayer_discriminator_forward.11} parent=0 // pred_fallthru
    _
  %p15 = scmp.eq.s32.totalorder 0, 0
  // Predicated region
  $region14: #{nlayer_discriminator_forward.11} parent=0 // pred_check
    %p16 = pneg %p15
  $region15: #{nlayer_discriminator_forward.11} parent=0 // pred_check_branch
    %18 = sbr.rel (%p16) target = $region17
  $region16: #{nlayer_discriminator_forward.11} parent=0 // pred_region
    %19 = vst [vmem:[#allocation2] sm:$0xff] 0.0
    %20 = vst [vmem:[#allocation2 + $0x8] sm:$0xff] 0.0
    %21 = vst [vmem:[#allocation2 + $0x10] sm:$0xff] 0.0
    %22 = vst [vmem:[#allocation2 + $0x18] sm:$0xff] 0.0
  $region17: #{nlayer_discriminator_forward.11} parent=0 // pred_fallthru
    _
  %v23 = vld [vmem:[#allocation2] sm:$0xff]
  %v24 = vld [vmem:[#allocation2 + $0x8] sm:$0xff]
  %v25 = vld [vmem:[#allocation2 + $0x10] sm:$0xff]
  %v26 = vld [vmem:[#allocation2 + $0x18] sm:$0xff]
  %v27 = vld [vmem:[%s0] sm:$0xff]
  %v28 = vld [vmem:[%s0 + $0x8] sm:$0xff]
  %v29 = vld [vmem:[%s0 + $0x10] sm:$0xff]
  %v30 = vld [vmem:[%s0 + $0x18] sm:$0xff]
  %v31 = vld [vmem:[%s1] sm:$0xf]
  %v32 = vld [vmem:[%s1 + $0x4] sm:$0xf]
  %v33 = vld [vmem:[%s1 + $0x8] sm:$0xf]
  %v34 = vld [vmem:[%s1 + $0xc] sm:$0xf]
  %v35 = vld [vmem:[%s1 + $0x10] sm:$0xf]
  %v36 = vld [vmem:[%s1 + $0x14] sm:$0xf]
  %v37 = vld [vmem:[%s1 + $0x18] sm:$0xf]
  %v38 = vld [vmem:[%s1 + $0x1c] sm:$0xf]
  %v39 = vld [vmem:[%s1 + $0x20] sm:$0xf]
  %v40 = vld [vmem:[%s1 + $0x24] sm:$0xf]
  %v41 = vld [vmem:[%s1 + $0x28] sm:$0xf]
  %v42 = vld [vmem:[%s1 + $0x2c] sm:$0xf]
  %v43 = vld [vmem:[%s1 + $0x30] sm:$0xf]
  %v44 = vld [vmem:[%s1 + $0x34] sm:$0xf]
  %v45 = vld [vmem:[%s1 + $0x38] sm:$0xf]
  %v46 = vld [vmem:[%s1 + $0x3c] sm:$0xf]
  %v47 = vld [vmem:[%s1 + $0x40] sm:$0xf]
  %v48 = vld [vmem:[%s1 + $0x44] sm:$0xf]
  %v49 = vld [vmem:[%s1 + $0x48] sm:$0xf]
  %v50 = vld [vmem:[%s1 + $0x4c] sm:$0xf]
  %v51 = vld [vmem:[%s1 + $0x50] sm:$0xf]
  %v52 = vld [vmem:[%s1 + $0x54] sm:$0xf]
  %v53 = vld [vmem:[%s1 + $0x58] sm:$0xf]
  %v54 = vld [vmem:[%s1 + $0x5c] sm:$0xf]
  %v55 = vld [vmem:[%s1 + $0x60] sm:$0xf]
  %v56 = vld [vmem:[%s1 + $0x64] sm:$0xf]
  %v57 = vld [vmem:[%s1 + $0x68] sm:$0xf]
  %v58 = vld [vmem:[%s1 + $0x6c] sm:$0xf]
  %v59 = vld [vmem:[%s1 + $0x70] sm:$0xf]
  %v60 = vld [vmem:[%s1 + $0x74] sm:$0xf]
  %v61 = vld [vmem:[%s1 + $0x78] sm:$0xf]
  %v62 = vld [vmem:[%s1 + $0x7c] sm:$0xf]
  %v67 = vunpack.c.l.b16 %v27
  %v68 = vunpack.c.h.b16 %v27
  %v69 = vunpack.c.l.b16 %v28
  %v70 = vunpack.c.h.b16 %v28
  %v71 = vunpack.c.l.b16 %v29
  %v72 = vunpack.c.h.b16 %v29
  %v73 = vunpack.c.l.b16 %v30
  %v74 = vunpack.c.h.b16 %v30
  %v75 = vpack.c.b16 %v69, %v67
  %v76 = vpack.c.b16 %v70, %v68
  %v77 = vpack.c.b16 %v73, %v71
  %v78 = vpack.c.b16 %v74, %v72
  %v115 = vunpack.c.l.b16 %v31
  %v116 = vunpack.c.l.b16 %v32
  %v117 = vunpack.c.l.b16 %v33
  %v118 = vunpack.c.l.b16 %v34
  %v119 = vunpack.c.l.b16 %v35
  %v120 = vunpack.c.l.b16 %v36
  %v121 = vunpack.c.l.b16 %v37
  %v122 = vunpack.c.l.b16 %v38
  %v123 = vunpack.c.l.b16 %v39
  %v124 = vunpack.c.l.b16 %v40
  %v125 = vunpack.c.l.b16 %v41
  %v126 = vunpack.c.l.b16 %v42
  %v127 = vunpack.c.l.b16 %v43
  %v128 = vunpack.c.l.b16 %v44
  %v129 = vunpack.c.l.b16 %v45
  %v130 = vunpack.c.l.b16 %v46
  %v131 = vunpack.c.l.b16 %v47
  %v132 = vunpack.c.l.b16 %v48
  %v133 = vunpack.c.l.b16 %v49
  %v134 = vunpack.c.l.b16 %v50
  %v135 = vunpack.c.l.b16 %v51
  %v136 = vunpack.c.l.b16 %v52
  %v137 = vunpack.c.l.b16 %v53
  %v138 = vunpack.c.l.b16 %v54
  %v139 = vunpack.c.l.b16 %v55
  %v140 = vunpack.c.l.b16 %v56
  %v141 = vunpack.c.l.b16 %v57
  %v142 = vunpack.c.l.b16 %v58
  %v143 = vunpack.c.l.b16 %v59
  %v144 = vunpack.c.l.b16 %v60
  %v145 = vunpack.c.l.b16 %v61
  %v146 = vunpack.c.l.b16 %v62
  %v147 = vpack.c.b16 %v116, %v115
  %v148 = vpack.c.b16 %v118, %v117
  %v149 = vpack.c.b16 %v120, %v119
  %v150 = vpack.c.b16 %v122, %v121
  %v151 = vpack.c.b16 %v124, %v123
  %v152 = vpack.c.b16 %v126, %v125
  %v153 = vpack.c.b16 %v128, %v127
  %v154 = vpack.c.b16 %v130, %v129
  %v155 = vpack.c.b16 %v132, %v131
  %v156 = vpack.c.b16 %v134, %v133
  %v157 = vpack.c.b16 %v136, %v135
  %v158 = vpack.c.b16 %v138, %v137
  %v159 = vpack.c.b16 %v140, %v139
  %v160 = vpack.c.b16 %v142, %v141
  %v161 = vpack.c.b16 %v144, %v143
  %v162 = vpack.c.b16 %v146, %v145
  %179 = vmatprep.subr.bf16.mxu0 0
  %180 = vmatpush1.bf16.msra.mxu0 %v154
  %181 = vmatprep.subr.bf16.mxu0 0
  %182 = vmatpush1.bf16.msra.mxu0 %v153
  %183 = vmatprep.subr.bf16.mxu0 0
  %184 = vmatpush1.bf16.msra.mxu0 %v152
  %185 = vmatprep.subr.bf16.mxu0 0
  %186 = vmatpush1.bf16.msra.mxu0 %v151
  %187 = vmatprep.subr.bf16.mxu0 0
  %188 = vmatpush1.bf16.msra.mxu0 %v150
  %189 = vmatprep.subr.bf16.mxu0 0
  %190 = vmatpush1.bf16.msra.mxu0 %v149
  %191 = vmatprep.subr.bf16.mxu0 0
  %192 = vmatpush1.bf16.msra.mxu0 %v148
  %193 = vmatprep.subr.bf16.mxu0 0
  %194 = vmatpush1.bf16.msra.mxu0 %v147
  %195 = vmatprep.subr.bf16.mxu0 0
  %196 = vmatpush2.bf16.msra.mxu0 %v162
  %197 = vmatprep.subr.bf16.mxu0 0
  %198 = vmatpush2.bf16.msra.mxu0 %v161
  %199 = vmatprep.subr.bf16.mxu0 0
  %200 = vmatpush2.bf16.msra.mxu0 %v160
  %201 = vmatprep.subr.bf16.mxu0 0
  %202 = vmatpush2.bf16.msra.mxu0 %v159
  %203 = vmatprep.subr.bf16.mxu0 0
  %204 = vmatpush2.bf16.msra.mxu0 %v158
  %205 = vmatprep.subr.bf16.mxu0 0
  %206 = vmatpush2.bf16.msra.mxu0 %v157
  %207 = vmatprep.subr.bf16.mxu0 0
  %208 = vmatpush2.bf16.msra.mxu0 %v156
  %209 = vmatprep.subr.bf16.mxu0 0
  %210 = vmatpush2.bf16.msra.mxu0 %v155
  %211 = vmatprep.mubr.bf16.mxu0 %v76
  %212 = vmatmul.mubr.bf16.gmra.mxu0 %v75
  %v213 = vpop.f32.mrf.mxu0
  %v214 = vadd.f32 0.0, %v213
  %v215 = vpop.f32.mrf.mxu0
  %v216 = vpop.f32.mrf.mxu0
  %v217 = vadd.f32 0.0, %v216
  %v218 = vpop.f32.mrf.mxu0
  %219 = vmatprep.mubr.bf16.mxu0 %v78
  %220 = vmatmul.mubr.bf16.gmra.mxu0 %v77
  %v221 = vpop.f32.mrf.mxu0
  %v222 = vadd.f32 0.0, %v221
  %v223 = vpop.f32.mrf.mxu0
  %v224 = vpop.f32.mrf.mxu0
  %v225 = vadd.f32 0.0, %v224
  %v226 = vpop.f32.mrf.mxu0
  %227 = vdwg.mxu0
  %v228 = vadd.f32 %v23, %v214
  %v229 = vadd.f32 %v24, %v217
  %v230 = vadd.f32 %v25, %v222
  %v231 = vadd.f32 %v26, %v225
  %232 = vst [vmem:[#allocation2] sm:$0xff] %v228
  %233 = vst [vmem:[#allocation2 + $0x8] sm:$0xff] %v229
  %234 = vst [vmem:[#allocation2 + $0x10] sm:$0xff] %v230
  %235 = vst [vmem:[#allocation2 + $0x18] sm:$0xff] %v231
  // Predicated region
  $region18: #{nlayer_discriminator_forward.11} parent=0 // pred_check
    %p236 = pneg %p15
  $region19: #{nlayer_discriminator_forward.11} parent=0 // pred_check_branch
    %238 = sbr.rel (%p236) target = $region21
  $region20: #{nlayer_discriminator_forward.11} parent=0 // pred_region
    %v239 = vld [vmem:[#allocation2] sm:$0xff]
    %v240 = vld [vmem:[#allocation2 + $0x8] sm:$0xff]
    %v241 = vld [vmem:[#allocation2 + $0x10] sm:$0xff]
    %v242 = vld [vmem:[#allocation2 + $0x18] sm:$0xff]
    %v243 = vld [vmem:[%s2] sm:$0x1]
    %v245 = vlaneseq
    %v246 = vshrl.u32 %v245, 7
    %v247 = vsub.s32 0, %v246
    %v248 = vrot.slane %v243, %v247
    %v250 = vadd.f32 %v239, %v248
    %v251 = vadd.f32 %v240, %v248
    %v252 = vadd.f32 %v241, %v248
    %v253 = vadd.f32 %v242, %v248
    %254 = vst [vmem:[%s3] sm:$0xff] %v250
    %255 = vst [vmem:[%s3 + $0x8] sm:$0xff] %v251
    %256 = vst [vmem:[%s3 + $0x10] sm:$0xff] %v252
    %257 = vst [vmem:[%s3 + $0x18] sm:$0xff] %v253
  $region21: #{nlayer_discriminator_forward.11} parent=0 // pred_fallthru
    _
  // Predicated region
  $region22: #{nlayer_discriminator_forward.11} parent=0 // pred_check
    _
  $region23: #{nlayer_discriminator_forward.11} parent=0 // pred_check_branch
    %259 = sbr.rel (0) target = $region25
  $region24: #{nlayer_discriminator_forward.11} parent=0 // pred_region
    _
  $region25: #{nlayer_discriminator_forward.11} parent=0 // pred_fallthru
    _
  // Predicated region
  $region26: #{nlayer_discriminator_forward.11} parent=0 // pred_check
    _
  $region27: #{nlayer_discriminator_forward.11} parent=0 // pred_check_branch
    %261 = sbr.rel (0) target = $region29
  $region28: #{nlayer_discriminator_forward.11} parent=0 // pred_region
    _
  $region29: #{nlayer_discriminator_forward.11} parent=0 // pred_fallthru
    _

// kernel: nlayer_discriminator_forward.13
$region0: #{nlayer_discriminator_forward.13}
  #allocation0 [shape = 'u32[]', space=smem, size = 0x4, offset = 0x4, fixed_abs, tag = 'smem constant byte address 0x4 - core index']
  #allocation1 [shape = 'u32[144,128]{1,0:T(1,128)}', space=vmem, size = 0x12000, scoped, tag = 'internal scratch']
  #allocation2 [shape = 'f32[24,128]{1,0:T(8,128)}', space=vmem, size = 0x3000, scoped, tag = 'scratch operand']
  %s0 = inlined_call_operand.vmem [shape: bf16[24,512], index: 0, kind: input, shape index: {}]
  %s1 = inlined_call_operand.vmem [shape: bf16[512,128], index: 1, kind: input, shape index: {}]
  %s2 = inlined_call_operand.vmem [shape: f32[1,128], index: 2, kind: input, shape index: {}]
  %s3 = inlined_call_operand.vmem [shape: f32[24,128], index: 3, kind: output, shape index: {}]
  %s4 = sld [smem:[#allocation0]]
  $region30: #{nlayer_discriminator_forward.13} parent=0
    _
  %s6 = ssub.s32 1, %s4
  %s7 = scalar_select 0, %s6, %s4
  // Predicated region
  $region2: #{nlayer_discriminator_forward.13} parent=0 // pred_check
    _
  $region3: #{nlayer_discriminator_forward.13} parent=0 // pred_check_branch
    %9 = sbr.rel (0) target = $region5
  $region4: #{nlayer_discriminator_forward.13} parent=0 // pred_region
    _
  $region5: #{nlayer_discriminator_forward.13} parent=0 // pred_fallthru
    _
  // Predicated region
  $region6: #{nlayer_discriminator_forward.13} parent=0 // pred_check
    _
  $region7: #{nlayer_discriminator_forward.13} parent=0 // pred_check_branch
    %11 = sbr.rel (0) target = $region9
  $region8: #{nlayer_discriminator_forward.13} parent=0 // pred_region
    _
  $region9: #{nlayer_discriminator_forward.13} parent=0 // pred_fallthru
    _
  // Predicated region
  $region10: #{nlayer_discriminator_forward.13} parent=0 // pred_check
    _
  $region11: #{nlayer_discriminator_forward.13} parent=0 // pred_check_branch
    %13 = sbr.rel (0) target = $region13
  $region12: #{nlayer_discriminator_forward.13} parent=0 // pred_region
    _
  $region13: #{nlayer_discriminator_forward.13} parent=0 // pred_fallthru
    _
  %p15 = scmp.eq.s32.totalorder 0, 0
  // Predicated region
  $region14: #{nlayer_discriminator_forward.13} parent=0 // pred_check
    %p16 = pneg %p15
  $region15: #{nlayer_discriminator_forward.13} parent=0 // pred_check_branch
    %18 = sbr.rel (%p16) target = $region17
  $region16: #{nlayer_discriminator_forward.13} parent=0 // pred_region
    %19 = vst [vmem:[#allocation2] sm:$0xff] 0.0
    %20 = vst [vmem:[#allocation2 + $0x8] sm:$0xff] 0.0
    %21 = vst [vmem:[#allocation2 + $0x10] sm:$0xff] 0.0
  $region17: #{nlayer_discriminator_forward.13} parent=0 // pred_fallthru
    _
  %v22 = vld [vmem:[#allocation2] sm:$0xff]
  %v23 = vld [vmem:[#allocation2 + $0x8] sm:$0xff]
  %v24 = vld [vmem:[#allocation2 + $0x10] sm:$0xff]
  %v25 = vld [vmem:[%s0] sm:$0xff]
  %v26 = vld [vmem:[%s0 + $0x8] sm:$0xff]
  %v27 = vld [vmem:[%s0 + $0x10] sm:$0xff]
  %v28 = vld [vmem:[%s0 + $0x18] sm:$0xff]
  %v29 = vld [vmem:[%s0 + $0x20] sm:$0xff]
  %v30 = vld [vmem:[%s0 + $0x28] sm:$0xff]
  %v31 = vld [vmem:[%s1] sm:$0xf]
  %v32 = vld [vmem:[%s1 + $0x4] sm:$0xf]
  %v33 = vld [vmem:[%s1 + $0x8] sm:$0xf]
  %v34 = vld [vmem:[%s1 + $0xc] sm:$0xf]
  %v35 = vld [vmem:[%s1 + $0x10] sm:$0xf]
  %v36 = vld [vmem:[%s1 + $0x14] sm:$0xf]
  %v37 = vld [vmem:[%s1 + $0x18] sm:$0xf]
  %v38 = vld [vmem:[%s1 + $0x1c] sm:$0xf]
  %v39 = vld [vmem:[%s1 + $0x20] sm:$0xf]
  %v40 = vld [vmem:[%s1 + $0x24] sm:$0xf]
  %v41 = vld [vmem:[%s1 + $0x28] sm:$0xf]
  %v42 = vld [vmem:[%s1 + $0x2c] sm:$0xf]
  %v43 = vld [vmem:[%s1 + $0x30] sm:$0xf]
  %v44 = vld [vmem:[%s1 + $0x34] sm:$0xf]
  %v45 = vld [vmem:[%s1 + $0x38] sm:$0xf]
  %v46 = vld [vmem:[%s1 + $0x3c] sm:$0xf]
  %v47 = vld [vmem:[%s1 + $0x40] sm:$0xf]
  %v48 = vld [vmem:[%s1 + $0x44] sm:$0xf]
  %v49 = vld [vmem:[%s1 + $0x48] sm:$0xf]
  %v50 = vld [vmem:[%s1 + $0x4c] sm:$0xf]
  %v51 = vld [vmem:[%s1 + $0x50] sm:$0xf]
  %v52 = vld [vmem:[%s1 + $0x54] sm:$0xf]
  %v53 = vld [vmem:[%s1 + $0x58] sm:$0xf]
  %v54 = vld [vmem:[%s1 + $0x5c] sm:$0xf]
  %v55 = vld [vmem:[%s1 + $0x60] sm:$0xf]
  %v56 = vld [vmem:[%s1 + $0x64] sm:$0xf]
  %v57 = vld [vmem:[%s1 + $0x68] sm:$0xf]
  %v58 = vld [vmem:[%s1 + $0x6c] sm:$0xf]
  %v59 = vld [vmem:[%s1 + $0x70] sm:$0xf]
  %v60 = vld [vmem:[%s1 + $0x74] sm:$0xf]
  %v61 = vld [vmem:[%s1 + $0x78] sm:$0xf]
  %v62 = vld [vmem:[%s1 + $0x7c] sm:$0xf]
  %v63 = vld [vmem:[%s1 + $0x80] sm:$0xf]
  %v64 = vld [vmem:[%s1 + $0x84] sm:$0xf]
  %v65 = vld [vmem:[%s1 + $0x88] sm:$0xf]
  %v66 = vld [vmem:[%s1 + $0x8c] sm:$0xf]
  %v67 = vld [vmem:[%s1 + $0x90] sm:$0xf]
  %v68 = vld [vmem:[%s1 + $0x94] sm:$0xf]
  %v69 = vld [vmem:[%s1 + $0x98] sm:$0xf]
  %v70 = vld [vmem:[%s1 + $0x9c] sm:$0xf]
  %v71 = vld [vmem:[%s1 + $0xa0] sm:$0xf]
  %v72 = vld [vmem:[%s1 + $0xa4] sm:$0xf]
  %v73 = vld [vmem:[%s1 + $0xa8] sm:$0xf]
  %v74 = vld [vmem:[%s1 + $0xac] sm:$0xf]
  %v75 = vld [vmem:[%s1 + $0xb0] sm:$0xf]
  %v76 = vld [vmem:[%s1 + $0xb4] sm:$0xf]
  %v77 = vld [vmem:[%s1 + $0xb8] sm:$0xf]
  %v78 = vld [vmem:[%s1 + $0xbc] sm:$0xf]
  %v79 = vld [vmem:[%s1 + $0xc0] sm:$0xf]
  %v80 = vld [vmem:[%s1 + $0xc4] sm:$0xf]
  %v81 = vld [vmem:[%s1 + $0xc8] sm:$0xf]
  %v82 = vld [vmem:[%s1 + $0xcc] sm:$0xf]
  %v83 = vld [vmem:[%s1 + $0xd0] sm:$0xf]
  %v84 = vld [vmem:[%s1 + $0xd4] sm:$0xf]
  %v85 = vld [vmem:[%s1 + $0xd8] sm:$0xf]
  %v86 = vld [vmem:[%s1 + $0xdc] sm:$0xf]
  %v87 = vld [vmem:[%s1 + $0xe0] sm:$0xf]
  %v88 = vld [vmem:[%s1 + $0xe4] sm:$0xf]
  %v89 = vld [vmem:[%s1 + $0xe8] sm:$0xf]
  %v90 = vld [vmem:[%s1 + $0xec] sm:$0xf]
  %v91 = vld [vmem:[%s1 + $0xf0] sm:$0xf]
  %v92 = vld [vmem:[%s1 + $0xf4] sm:$0xf]
  %v93 = vld [vmem:[%s1 + $0xf8] sm:$0xf]
  %v94 = vld [vmem:[%s1 + $0xfc] sm:$0xf]
  %v101 = vunpack.c.l.b16 %v25
  %v102 = vunpack.c.h.b16 %v25
  %v103 = vunpack.c.l.b16 %v26
  %v104 = vunpack.c.h.b16 %v26
  %v105 = vunpack.c.l.b16 %v27
  %v106 = vunpack.c.h.b16 %v27
  %v107 = vunpack.c.l.b16 %v28
  %v108 = vunpack.c.h.b16 %v28
  %v109 = vunpack.c.l.b16 %v29
  %v110 = vunpack.c.h.b16 %v29
  %v111 = vunpack.c.l.b16 %v30
  %v112 = vunpack.c.h.b16 %v30
  %v113 = vpack.c.b16 %v105, %v101
  %v114 = vpack.c.b16 %v106, %v102
  %v115 = vpack.c.b16 %v107, %v103
  %v116 = vpack.c.b16 %v108, %v104
  %v117 = vpack.c.b16 %v109, %v109
  %v118 = vpack.c.b16 %v110, %v110
  %v119 = vpack.c.b16 %v111, %v111
  %v120 = vpack.c.b16 %v112, %v112
  %v193 = vunpack.c.l.b16 %v31
  %v194 = vunpack.c.l.b16 %v32
  %v195 = vunpack.c.l.b16 %v33
  %v196 = vunpack.c.l.b16 %v34
  %v197 = vunpack.c.l.b16 %v35
  %v198 = vunpack.c.l.b16 %v36
  %v199 = vunpack.c.l.b16 %v37
  %v200 = vunpack.c.l.b16 %v38
  %v201 = vunpack.c.l.b16 %v39
  %v202 = vunpack.c.l.b16 %v40
  %v203 = vunpack.c.l.b16 %v41
  %v204 = vunpack.c.l.b16 %v42
  %v205 = vunpack.c.l.b16 %v43
  %v206 = vunpack.c.l.b16 %v44
  %v207 = vunpack.c.l.b16 %v45
  %v208 = vunpack.c.l.b16 %v46
  %v209 = vunpack.c.l.b16 %v47
  %v210 = vunpack.c.l.b16 %v48
  %v211 = vunpack.c.l.b16 %v49
  %v212 = vunpack.c.l.b16 %v50
  %v213 = vunpack.c.l.b16 %v51
  %v214 = vunpack.c.l.b16 %v52
  %v215 = vunpack.c.l.b16 %v53
  %v216 = vunpack.c.l.b16 %v54
  %v217 = vunpack.c.l.b16 %v55
  %v218 = vunpack.c.l.b16 %v56
  %v219 = vunpack.c.l.b16 %v57
  %v220 = vunpack.c.l.b16 %v58
  %v221 = vunpack.c.l.b16 %v59
  %v222 = vunpack.c.l.b16 %v60
  %v223 = vunpack.c.l.b16 %v61
  %v224 = vunpack.c.l.b16 %v62
  %v225 = vunpack.c.l.b16 %v63
  %v226 = vunpack.c.l.b16 %v64
  %v227 = vunpack.c.l.b16 %v65
  %v228 = vunpack.c.l.b16 %v66
  %v229 = vunpack.c.l.b16 %v67
  %v230 = vunpack.c.l.b16 %v68
  %v231 = vunpack.c.l.b16 %v69
  %v232 = vunpack.c.l.b16 %v70
  %v233 = vunpack.c.l.b16 %v71
  %v234 = vunpack.c.l.b16 %v72
  %v235 = vunpack.c.l.b16 %v73
  %v236 = vunpack.c.l.b16 %v74
  %v237 = vunpack.c.l.b16 %v75
  %v238 = vunpack.c.l.b16 %v76
  %v239 = vunpack.c.l.b16 %v77
  %v240 = vunpack.c.l.b16 %v78
  %v241 = vunpack.c.l.b16 %v79
  %v242 = vunpack.c.l.b16 %v80
  %v243 = vunpack.c.l.b16 %v81
  %v244 = vunpack.c.l.b16 %v82
  %v245 = vunpack.c.l.b16 %v83
  %v246 = vunpack.c.l.b16 %v84
  %v247 = vunpack.c.l.b16 %v85
  %v248 = vunpack.c.l.b16 %v86
  %v249 = vunpack.c.l.b16 %v87
  %v250 = vunpack.c.l.b16 %v88
  %v251 = vunpack.c.l.b16 %v89
  %v252 = vunpack.c.l.b16 %v90
  %v253 = vunpack.c.l.b16 %v91
  %v254 = vunpack.c.l.b16 %v92
  %v255 = vunpack.c.l.b16 %v93
  %v256 = vunpack.c.l.b16 %v94
  %v257 = vpack.c.b16 %v194, %v193
  %v258 = vpack.c.b16 %v196, %v195
  %v259 = vpack.c.b16 %v198, %v197
  %v260 = vpack.c.b16 %v200, %v199
  %v261 = vpack.c.b16 %v202, %v201
  %v262 = vpack.c.b16 %v204, %v203
  %v263 = vpack.c.b16 %v206, %v205
  %v264 = vpack.c.b16 %v208, %v207
  %v265 = vpack.c.b16 %v210, %v209
  %v266 = vpack.c.b16 %v212, %v211
  %v267 = vpack.c.b16 %v214, %v213
  %v268 = vpack.c.b16 %v216, %v215
  %v269 = vpack.c.b16 %v218, %v217
  %v270 = vpack.c.b16 %v220, %v219
  %v271 = vpack.c.b16 %v222, %v221
  %v272 = vpack.c.b16 %v224, %v223
  %v273 = vpack.c.b16 %v226, %v225
  %v274 = vpack.c.b16 %v228, %v227
  %v275 = vpack.c.b16 %v230, %v229
  %v276 = vpack.c.b16 %v232, %v231
  %v277 = vpack.c.b16 %v234, %v233
  %v278 = vpack.c.b16 %v236, %v235
  %v279 = vpack.c.b16 %v238, %v237
  %v280 = vpack.c.b16 %v240, %v239
  %v281 = vpack.c.b16 %v242, %v241
  %v282 = vpack.c.b16 %v244, %v243
  %v283 = vpack.c.b16 %v246, %v245
  %v284 = vpack.c.b16 %v248, %v247
  %v285 = vpack.c.b16 %v250, %v249
  %v286 = vpack.c.b16 %v252, %v251
  %v287 = vpack.c.b16 %v254, %v253
  %v288 = vpack.c.b16 %v256, %v255
  %321 = vmatprep.subr.bf16.mxu0 0
  %322 = vmatpush1.bf16.msra.mxu0 %v264
  %323 = vmatprep.subr.bf16.mxu0 0
  %324 = vmatpush1.bf16.msra.mxu0 %v263
  %325 = vmatprep.subr.bf16.mxu0 0
  %326 = vmatpush1.bf16.msra.mxu0 %v262
  %327 = vmatprep.subr.bf16.mxu0 0
  %328 = vmatpush1.bf16.msra.mxu0 %v261
  %329 = vmatprep.subr.bf16.mxu0 0
  %330 = vmatpush1.bf16.msra.mxu0 %v260
  %331 = vmatprep.subr.bf16.mxu0 0
  %332 = vmatpush1.bf16.msra.mxu0 %v259
  %333 = vmatprep.subr.bf16.mxu0 0
  %334 = vmatpush1.bf16.msra.mxu0 %v258
  %335 = vmatprep.subr.bf16.mxu0 0
  %336 = vmatpush1.bf16.msra.mxu0 %v257
  %337 = vmatprep.subr.bf16.mxu0 0
  %338 = vmatpush2.bf16.msra.mxu0 %v272
  %339 = vmatprep.subr.bf16.mxu0 0
  %340 = vmatpush2.bf16.msra.mxu0 %v271
  %341 = vmatprep.subr.bf16.mxu0 0
  %342 = vmatpush2.bf16.msra.mxu0 %v270
  %343 = vmatprep.subr.bf16.mxu0 0
  %344 = vmatpush2.bf16.msra.mxu0 %v269
  %345 = vmatprep.subr.bf16.mxu0 0
  %346 = vmatpush2.bf16.msra.mxu0 %v268
  %347 = vmatprep.subr.bf16.mxu0 0
  %348 = vmatpush2.bf16.msra.mxu0 %v267
  %349 = vmatprep.subr.bf16.mxu0 0
  %350 = vmatpush2.bf16.msra.mxu0 %v266
  %351 = vmatprep.subr.bf16.mxu0 0
  %352 = vmatpush2.bf16.msra.mxu0 %v265
  %353 = vmatprep.mubr.bf16.mxu0 %v114
  %354 = vmatmul.mubr.bf16.gmra.mxu0 %v113
  %v355 = vpop.f32.mrf.mxu0
  %v356 = vadd.f32 0.0, %v355
  %v357 = vpop.f32.mrf.mxu0
  %v358 = vpop.f32.mrf.mxu0
  %v359 = vadd.f32 0.0, %v358
  %v360 = vpop.f32.mrf.mxu0
  %361 = vmatprep.mubr.bf16.mxu0 %v118
  %362 = vmatmul.mubr.bf16.gmra.mxu0 %v117
  %v363 = vpop.f32.mrf.mxu0
  %v364 = vadd.f32 0.0, %v363
  %v365 = vpop.f32.mrf.mxu0
  %v366 = vpop.f32.mrf.mxu0
  %v367 = vpop.f32.mrf.mxu0
  %368 = vdwg.mxu0
  %369 = vmatprep.subr.bf16.mxu0 0
  %370 = vmatpush1.bf16.msra.mxu0 %v280
  %371 = vmatprep.subr.bf16.mxu0 0
  %372 = vmatpush1.bf16.msra.mxu0 %v279
  %373 = vmatprep.subr.bf16.mxu0 0
  %374 = vmatpush1.bf16.msra.mxu0 %v278
  %375 = vmatprep.subr.bf16.mxu0 0
  %376 = vmatpush1.bf16.msra.mxu0 %v277
  %377 = vmatprep.subr.bf16.mxu0 0
  %378 = vmatpush1.bf16.msra.mxu0 %v276
  %379 = vmatprep.subr.bf16.mxu0 0
  %380 = vmatpush1.bf16.msra.mxu0 %v275
  %381 = vmatprep.subr.bf16.mxu0 0
  %382 = vmatpush1.bf16.msra.mxu0 %v274
  %383 = vmatprep.subr.bf16.mxu0 0
  %384 = vmatpush1.bf16.msra.mxu0 %v273
  %385 = vmatprep.subr.bf16.mxu0 0
  %386 = vmatpush2.bf16.msra.mxu0 %v288
  %387 = vmatprep.subr.bf16.mxu0 0
  %388 = vmatpush2.bf16.msra.mxu0 %v287
  %389 = vmatprep.subr.bf16.mxu0 0
  %390 = vmatpush2.bf16.msra.mxu0 %v286
  %391 = vmatprep.subr.bf16.mxu0 0
  %392 = vmatpush2.bf16.msra.mxu0 %v285
  %393 = vmatprep.subr.bf16.mxu0 0
  %394 = vmatpush2.bf16.msra.mxu0 %v284
  %395 = vmatprep.subr.bf16.mxu0 0
  %396 = vmatpush2.bf16.msra.mxu0 %v283
  %397 = vmatprep.subr.bf16.mxu0 0
  %398 = vmatpush2.bf16.msra.mxu0 %v282
  %399 = vmatprep.subr.bf16.mxu0 0
  %400 = vmatpush2.bf16.msra.mxu0 %v281
  %401 = vmatprep.mubr.bf16.mxu0 %v116
  %402 = vmatmul.mubr.bf16.gmra.mxu0 %v115
  %v403 = vpop.f32.mrf.mxu0
  %v404 = vadd.f32 %v356, %v403
  %v405 = vpop.f32.mrf.mxu0
  %v406 = vpop.f32.mrf.mxu0
  %v407 = vadd.f32 %v359, %v406
  %v408 = vpop.f32.mrf.mxu0
  %409 = vmatprep.mubr.bf16.mxu0 %v120
  %410 = vmatmul.mubr.bf16.gmra.mxu0 %v119
  %v411 = vpop.f32.mrf.mxu0
  %v412 = vadd.f32 %v364, %v411
  %v413 = vpop.f32.mrf.mxu0
  %v414 = vpop.f32.mrf.mxu0
  %v415 = vpop.f32.mrf.mxu0
  %416 = vdwg.mxu0
  %v417 = vadd.f32 %v22, %v404
  %v418 = vadd.f32 %v23, %v407
  %v419 = vadd.f32 %v24, %v412
  %420 = vst [vmem:[#allocation2] sm:$0xff] %v417
  %421 = vst [vmem:[#allocation2 + $0x8] sm:$0xff] %v418
  %422 = vst [vmem:[#allocation2 + $0x10] sm:$0xff] %v419
  // Predicated region
  $region18: #{nlayer_discriminator_forward.13} parent=0 // pred_check
    %p423 = pneg %p15
  $region19: #{nlayer_discriminator_forward.13} parent=0 // pred_check_branch
    %425 = sbr.rel (%p423) target = $region21
  $region20: #{nlayer_discriminator_forward.13} parent=0 // pred_region
    %v426 = vld [vmem:[#allocation2] sm:$0xff]
    %v427 = vld [vmem:[#allocation2 + $0x8] sm:$0xff]
    %v428 = vld [vmem:[#allocation2 + $0x10] sm:$0xff]
    %v429 = vld [vmem:[%s2] sm:$0x1]
    %v431 = vlaneseq
    %v432 = vshrl.u32 %v431, 7
    %v433 = vsub.s32 0, %v432
    %v434 = vrot.slane %v429, %v433
    %v436 = vadd.f32 %v426, %v434
    %v437 = vadd.f32 %v427, %v434
    %v438 = vadd.f32 %v428, %v434
    %439 = vst [vmem:[%s3] sm:$0xff] %v436
    %440 = vst [vmem:[%s3 + $0x8] sm:$0xff] %v437
    %441 = vst [vmem:[%s3 + $0x10] sm:$0xff] %v438
  $region21: #{nlayer_discriminator_forward.13} parent=0 // pred_fallthru
    _
  // Predicated region
  $region22: #{nlayer_discriminator_forward.13} parent=0 // pred_check
    _
  $region23: #{nlayer_discriminator_forward.13} parent=0 // pred_check_branch
    %443 = sbr.rel (0) target = $region25
  $region24: #{nlayer_discriminator_forward.13} parent=0 // pred_region
    _
  $region25: #{nlayer_discriminator_forward.13} parent=0 // pred_fallthru
    _
  // Predicated region
  $region26: #{nlayer_discriminator_forward.13} parent=0 // pred_check
    _
  $region27: #{nlayer_discriminator_forward.13} parent=0 // pred_check_branch
    %445 = sbr.rel (0) target = $region29
  $region28: #{nlayer_discriminator_forward.13} parent=0 // pred_region
    _
  $region29: #{nlayer_discriminator_forward.13} parent=0 // pred_fallthru
    _

// kernel: nlayer_discriminator_forward.14
$region0: #{nlayer_discriminator_forward.14}
  #allocation0 [shape = 'u32[]', space=smem, size = 0x4, offset = 0x4, fixed_abs, tag = 'smem constant byte address 0x4 - core index']
  #allocation1 [shape = 'u32[144,128]{1,0:T(1,128)}', space=vmem, size = 0x12000, scoped, tag = 'internal scratch']
  %s0 = inlined_call_operand.vmem [shape: f32[2,9,64], index: 0, kind: input, shape index: {}]
  %s1 = inlined_call_operand.vmem [shape: f32[2,9,64], index: 1, kind: output, shape index: {}]
  %s2 = sld [smem:[#allocation0]]
  $region37: #{nlayer_discriminator_forward.14} parent=0
    _
  %s4 = ssub.s32 1, %s2
  %s5 = scalar_select 0, %s4, %s2
  loop: start=0, step=1, limit=4
  $region2: #{nlayer_discriminator_forward.14} parent=0 // loop_pre_header
    _
  $region3: #{nlayer_discriminator_forward.14} parent=0 // loop_header
    %s7 = sphi 0, %s11
    %p8 = scmp.ge.s32.totalorder %s7, 4
    %s17 = sphi 0, %s19
    %s20 = sphi 0, %s17
    %s21 = sphi 0, %s20
    %s37 = sphi 0, %s21
    %s43 = sphi 0, %s45
    %s46 = sphi 0, %s43
    %s47 = sphi 0, %s46
    %s63 = sphi 0, %s47
  $region4: #{nlayer_discriminator_forward.14} parent=0 // loop_header_branch
    %10 = sbr.rel (%p8) target = $region8
  $region5: #{nlayer_discriminator_forward.14} parent=0 // loop_body
    %s12 = ssub.s32 %s7, 1
    %s13 = ssub.s32 %s7, 2
    %s14 = sadd.s32 %s7, 1
    %s15 = ssub.s32 %s7, %s14
    %p16 = scmp.eq.s32.totalorder %s15, 0
    %s18 = sadd.s32 %s17, 1
    %s19 = scalar_select %p16, %s17, %s18
    %p22 = pneg %p16
    %p23 = scmp.eq.s32.totalorder %s7, 1
    %p24 = por %p22, %p23
    %p25 = scmp.ne.s32.totalorder %s17, %s20
    %p26 = scmp.eq.s32.totalorder %s7, 0
    %p27 = por %p25, %p26
    %p28 = scmp.ne.s32.totalorder %s17, %s20
    %p29 = scmp.eq.s32.totalorder %s12, 1
    %p30 = por %p28, %p29
    %p31 = scmp.ne.s32.totalorder %s20, %s21
    %p32 = scmp.eq.s32.totalorder %s12, 0
    %p33 = por %p31, %p32
    %p34 = scmp.ne.s32.totalorder %s20, %s21
    %p35 = scmp.eq.s32.totalorder %s13, 1
    %p36 = por %p34, %p35
    %p38 = scmp.ne.s32.totalorder %s21, %s37
    %p39 = scmp.eq.s32.totalorder %s13, 0
    %p40 = por %p38, %p39
    %s41 = ssub.s32 %s7, %s14
    %p42 = scmp.eq.s32.totalorder %s41, 0
    %s44 = sadd.s32 %s43, 1
    %s45 = scalar_select %p42, %s43, %s44
    %p48 = pneg %p42
    %p49 = scmp.eq.s32.totalorder %s7, 1
    %p50 = por %p48, %p49
    %p51 = scmp.ne.s32.totalorder %s43, %s46
    %p52 = scmp.eq.s32.totalorder %s7, 0
    %p53 = por %p51, %p52
    %p54 = scmp.ne.s32.totalorder %s43, %s46
    %p55 = scmp.eq.s32.totalorder %s12, 1
    %p56 = por %p54, %p55
    %p57 = scmp.ne.s32.totalorder %s46, %s47
    %p58 = scmp.eq.s32.totalorder %s12, 0
    %p59 = por %p57, %p58
    %p60 = scmp.ne.s32.totalorder %s46, %s47
    %p61 = scmp.eq.s32.totalorder %s13, 1
    %p62 = por %p60, %p61
    %p64 = scmp.ne.s32.totalorder %s47, %s63
    %p65 = scmp.eq.s32.totalorder %s13, 0
    %p66 = por %p64, %p65
    %p67 = scmp.le.s32.totalorder 1, %s7
    %p68 = scmp.lt.s32.totalorder %s7, 3
    %p69 = pnand %p67, %p68
    %p70 = pneg %p69
    // Predicated region
    $region9: #{nlayer_discriminator_forward.14} parent=5 // pred_check
      _
    $region10: #{nlayer_discriminator_forward.14} parent=5 // pred_check_branch
      %72 = sbr.rel (%p69) target = $region12
    $region11: #{nlayer_discriminator_forward.14} parent=5 // pred_region
      %s73 = ssub.s32 %s7, 1
    $region12: #{nlayer_discriminator_forward.14} parent=5 // pred_fallthru
      _
    %p74 = scmp.lt.s32.totalorder %s7, 2
    // Predicated region
    $region13: #{nlayer_discriminator_forward.14} parent=5 // pred_check
      %p75 = pneg %p74
    $region14: #{nlayer_discriminator_forward.14} parent=5 // pred_check_branch
      %77 = sbr.rel (%p75) target = $region16
    $region15: #{nlayer_discriminator_forward.14} parent=5 // pred_region
      // Predicated region
      $region17: #{nlayer_discriminator_forward.14} parent=15 // pred_check
        %p78 = pneg %p27
      $region18: #{nlayer_discriminator_forward.14} parent=15 // pred_check_branch
        %80 = sbr.rel (%p78) target = $region20
      $region19: #{nlayer_discriminator_forward.14} parent=15 // pred_region
        %p81 = scmp.lt.s32.totalorder %s7, 1
        %s82 = scalar_select %p81, %s7, 1
        %s83 = smul.addr %s82, 2
        %s84 = smul.addr %s83, 8
        %s85 = scalar_lea.vmem %s0, %s84
      $region20: #{nlayer_discriminator_forward.14} parent=15 // pred_fallthru
        _
    $region16: #{nlayer_discriminator_forward.14} parent=5 // pred_fallthru
      _
    %p86 = scmp.le.s32.totalorder 1, %s7
    %p87 = scmp.lt.s32.totalorder %s7, 3
    %p88 = pnand %p86, %p87
    %p89 = pneg %p88
    // Predicated region
    $region21: #{nlayer_discriminator_forward.14} parent=5 // pred_check
      _
    $region22: #{nlayer_discriminator_forward.14} parent=5 // pred_check_branch
      %91 = sbr.rel (%p88) target = $region24
    $region23: #{nlayer_discriminator_forward.14} parent=5 // pred_region
      %s92 = ssub.s32 %s7, 1
      %p93 = scmp.lt.s32.totalorder %s12, 1
      %s94 = scalar_select %p93, %s12, 1
      %s95 = smul.addr %s94, 2
      %s96 = smul.addr %s95, 8
      %s97 = scalar_lea.vmem %s0, %s96
      %p98 = pneg %p33
      %p99 = pneg %p30
      %p100 = pneg %p59
      %p101 = pneg %p56
      %p102 = scmp.lt.s32.totalorder %s12, 1
      %s103 = scalar_select %p102, %s12, 1
      %s104 = smul.addr %s103, 2
      %s105 = smul.addr %s104, 8
      %s106 = scalar_lea.vmem %s1, %s105
      %p107 = scmp.lt.s32.totalorder %s12, 1
      %s108 = scalar_select %p107, %s12, 1
      %s109 = smul.addr %s108, 2
      %s110 = smul.addr %s109, 8
      %s111 = scalar_lea.vmem %s0, %s110
      %p112 = scmp.lt.s32.totalorder %s12, 1
      %s113 = scalar_select %p112, %s12, 1
      %s114 = smul.addr %s113, 2
      %s115 = smul.addr %s114, 8
      %s116 = scalar_lea.vmem %s1, %s115
      %v117 = vld [vmem:[%s111] sm:$0xff]
      %v118 = vld [vmem:[%s111 + $0x8] sm:$0x1]
      %vm119 = vcmask 523264
      %v120 = vsel %vm119, %v117, 0.0
      %vm121 = vcmask 516096
      %v122 = vsel %vm121, %v118, 0.0
      %v123 = vadd.f32 %v120, %v122
      %v124 = vrot.slane %v123, 4
      %v125 = vadd.f32 %v123, %v124
      %v126 = vrot.slane %v125, 2
      %v127 = vadd.f32 %v125, %v126
      %v128 = vrot.slane %v127, 1
      %v129 = vadd.f32 %v127, %v128
      %v130 = vrcp.pop 9.0
      %v131 = vmul.f32 %v129, %v130
      %v132 = vsub.f32 %v117, %v131
      %v133 = vsub.f32 %v118, %v131
      %v134 = vmul.f32 %v132, %v132
      %v135 = vmul.f32 %v133, %v133
      %v136 = vsel %vm119, %v134, 0.0
      %v137 = vsel %vm121, %v135, 0.0
      %v138 = vadd.f32 %v136, %v137
      %v139 = vrot.slane %v138, 4
      %v140 = vadd.f32 %v138, %v139
      %v141 = vrot.slane %v140, 2
      %v142 = vadd.f32 %v140, %v141
      %v143 = vrot.slane %v142, 1
      %v144 = vadd.f32 %v142, %v143
      %v145 = vmul.f32 %v144, %v130
      %v146 = vadd.f32 %v145, 1e-05
      %v147 = vrsqrt.pop %v146
      %v148 = vmul.f32 %v132, %v147
      %v149 = vmul.f32 %v133, %v147
      %vm150 = vcmp.ge.f32.partialorder %v148, 0.0
      %vm151 = vcmp.ge.f32.partialorder %v149, 0.0
      %v152 = vmul.f32 %v148, 0.2
      %v153 = vmul.f32 %v149, 0.2
      %v154 = vsel %vm150, %v148, %v152
      %v155 = vsel %vm151, %v149, %v153
      %156 = vst.msk [vmem:[%s116] sm:$0xff] %vm119, %v154
      %157 = vst.msk [vmem:[%s116 + $0x8] sm:$0x1] %vm121, %v155
      %p158 = scmp.lt.s32.totalorder %s12, 1
      %s159 = scalar_select %p158, %s12, 1
      %s160 = smul.addr %s159, 2
      %s161 = smul.addr %s160, 8
      %s162 = scalar_lea.vmem %s1, %s161
      // Predicated region
      $region25: #{nlayer_discriminator_forward.14} parent=23 // pred_check
        %p163 = pneg %p56
      $region26: #{nlayer_discriminator_forward.14} parent=23 // pred_check_branch
        %165 = sbr.rel (%p163) target = $region28
      $region27: #{nlayer_discriminator_forward.14} parent=23 // pred_region
        _
      $region28: #{nlayer_discriminator_forward.14} parent=23 // pred_fallthru
        _
    $region24: #{nlayer_discriminator_forward.14} parent=5 // pred_fallthru
      _
    %p166 = scmp.le.s32.totalorder 2, %s7
    // Predicated region
    $region29: #{nlayer_discriminator_forward.14} parent=5 // pred_check
      %p167 = pneg %p166
    $region30: #{nlayer_discriminator_forward.14} parent=5 // pred_check_branch
      %169 = sbr.rel (%p167) target = $region32
    $region31: #{nlayer_discriminator_forward.14} parent=5 // pred_region
      %s170 = ssub.s32 %s7, 2
      // Predicated region
      $region33: #{nlayer_discriminator_forward.14} parent=31 // pred_check
        %p171 = pneg %p62
      $region34: #{nlayer_discriminator_forward.14} parent=31 // pred_check_branch
        %173 = sbr.rel (%p171) target = $region36
      $region35: #{nlayer_discriminator_forward.14} parent=31 // pred_region
        %p174 = scmp.lt.s32.totalorder %s13, 1
        %s175 = scalar_select %p174, %s13, 1
        %s176 = smul.addr %s175, 2
        %s177 = smul.addr %s176, 8
        %s178 = scalar_lea.vmem %s1, %s177
      $region36: #{nlayer_discriminator_forward.14} parent=31 // pred_fallthru
        _
    $region32: #{nlayer_discriminator_forward.14} parent=5 // pred_fallthru
      _
  $region6: #{nlayer_discriminator_forward.14} parent=0 // loop_footer
    %s11 = sadd.s32 1, %s7
  $region7: #{nlayer_discriminator_forward.14} parent=0 // loop_footer_branch
    %6 = sbr.rel target = $region3
  $region8: #{nlayer_discriminator_forward.14} parent=0 // loop_exit
    _

// kernel: nlayer_discriminator_forward.15
$region0: #{nlayer_discriminator_forward.15}
  #allocation0 [shape = 'u32[]', space=smem, size = 0x4, offset = 0x4, fixed_abs, tag = 'smem constant byte address 0x4 - core index']
  #allocation1 [shape = 'u32[144,128]{1,0:T(1,128)}', space=vmem, size = 0x12000, scoped, tag = 'internal scratch']
  #allocation2 [shape = 'f32[8,128]{1,0:T(8,128)}', space=vmem, size = 0x1000, scoped, tag = 'scratch operand']
  %s0 = inlined_call_operand.vmem [shape: bf16[8,1024], index: 0, kind: input, shape index: {}]
  %s1 = inlined_call_operand.vmem [shape: bf16[1024,128], index: 1, kind: input, shape index: {}]
  %s2 = inlined_call_operand.vmem [shape: f32[1,128], index: 2, kind: input, shape index: {}]
  %s3 = inlined_call_operand.vmem [shape: f32[8,128], index: 3, kind: output, shape index: {}]
  %s4 = sld [smem:[#allocation0]]
  $region53: #{nlayer_discriminator_forward.15} parent=0
    _
  %s6 = ssub.s32 1, %s4
  %s7 = scalar_select 0, %s6, %s4
  loop: start=0, step=1, limit=4
  $region2: #{nlayer_discriminator_forward.15} parent=0 // loop_pre_header
    _
  $region3: #{nlayer_discriminator_forward.15} parent=0 // loop_header
    %s9 = sphi 0, %s13
    %p10 = scmp.ge.s32.totalorder %s9, 4
    %s16 = sphi 0, %s35
    %s17 = sphi 0, %s31
    %s18 = sphi 0, %s27
    %s19 = sphi 0, %s16
    %s20 = sphi 0, %s17
    %s21 = sphi 0, %s18
    %s22 = sphi 0, %s19
    %s23 = sphi 0, %s20
    %s24 = sphi 0, %s21
    %s40 = sphi 0, %s42
    %s43 = sphi 0, %s40
    %s44 = sphi 0, %s43
    %s60 = sphi 0, %s44
    %s68 = sphi 0, %s70
    %s71 = sphi 0, %s68
    %s72 = sphi 0, %s71
    %s88 = sphi 0, %s72
    %s94 = sphi 0, %s96
    %s97 = sphi 0, %s94
    %s98 = sphi 0, %s97
    %s114 = sphi 0, %s98
    %s122 = sphi 0, %s124
    %s125 = sphi 0, %s122
    %s126 = sphi 0, %s125
    %s142 = sphi 0, %s126
  $region4: #{nlayer_discriminator_forward.15} parent=0 // loop_header_branch
    %12 = sbr.rel (%p10) target = $region8
  $region5: #{nlayer_discriminator_forward.15} parent=0 // loop_body
    %s14 = ssub.s32 %s9, 1
    %s15 = ssub.s32 %s9, 2
    %s25 = sadd.s32 1, %s18
    %p26 = scmp.ge.s32.totalorder %s25, 2
    %s27 = scalar_select %p26, 0, %s25
    %s28 = sadd.s32 1, %s17
    %s29 = scalar_select %p26, %s28, %s17
    %p30 = scmp.ge.s32.totalorder %s29, 1
    %s31 = scalar_select %p30, 0, %s29
    %s32 = sadd.s32 1, %s16
    %s33 = scalar_select %p30, %s32, %s16
    %p34 = scmp.ge.s32.totalorder %s33, 1
    %s35 = scalar_select %p34, 0, %s33
    %s36 = ssub.s32 %s16, %s35
    %s37 = ssub.s32 %s18, %s27
    %s38 = sor.u32 %s36, %s37
    %p39 = scmp.eq.s32.totalorder %s38, 0
    %s41 = sadd.s32 %s40, 1
    %s42 = scalar_select %p39, %s40, %s41
    %p45 = pneg %p39
    %p46 = scmp.eq.s32.totalorder %s9, 1
    %p47 = por %p45, %p46
    %p48 = scmp.ne.s32.totalorder %s40, %s43
    %p49 = scmp.eq.s32.totalorder %s9, 0
    %p50 = por %p48, %p49
    %p51 = scmp.ne.s32.totalorder %s40, %s43
    %p52 = scmp.eq.s32.totalorder %s14, 1
    %p53 = por %p51, %p52
    %p54 = scmp.ne.s32.totalorder %s43, %s44
    %p55 = scmp.eq.s32.totalorder %s14, 0
    %p56 = por %p54, %p55
    %p57 = scmp.ne.s32.totalorder %s43, %s44
    %p58 = scmp.eq.s32.totalorder %s15, 1
    %p59 = por %p57, %p58
    %p61 = scmp.ne.s32.totalorder %s44, %s60
    %p62 = scmp.eq.s32.totalorder %s15, 0
    %p63 = por %p61, %p62
    %s64 = ssub.s32 %s18, %s27
    %s65 = ssub.s32 %s17, %s31
    %s66 = sor.u32 %s64, %s65
    %p67 = scmp.eq.s32.totalorder %s66, 0
    %s69 = sadd.s32 %s68, 1
    %s70 = scalar_select %p67, %s68, %s69
    %p73 = pneg %p67
    %p74 = scmp.eq.s32.totalorder %s9, 1
    %p75 = por %p73, %p74
    %p76 = scmp.ne.s32.totalorder %s68, %s71
    %p77 = scmp.eq.s32.totalorder %s9, 0
    %p78 = por %p76, %p77
    %p79 = scmp.ne.s32.totalorder %s68, %s71
    %p80 = scmp.eq.s32.totalorder %s14, 1
    %p81 = por %p79, %p80
    %p82 = scmp.ne.s32.totalorder %s71, %s72
    %p83 = scmp.eq.s32.totalorder %s14, 0
    %p84 = por %p82, %p83
    %p85 = scmp.ne.s32.totalorder %s71, %s72
    %p86 = scmp.eq.s32.totalorder %s15, 1
    %p87 = por %p85, %p86
    %p89 = scmp.ne.s32.totalorder %s72, %s88
    %p90 = scmp.eq.s32.totalorder %s15, 0
    %p91 = por %p89, %p90
    %s92 = ssub.s32 %s17, %s31
    %p93 = scmp.eq.s32.totalorder %s92, 0
    %s95 = sadd.s32 %s94, 1
    %s96 = scalar_select %p93, %s94, %s95
    %p99 = pneg %p93
    %p100 = scmp.eq.s32.totalorder %s9, 1
    %p101 = por %p99, %p100
    %p102 = scmp.ne.s32.totalorder %s94, %s97
    %p103 = scmp.eq.s32.totalorder %s9, 0
    %p104 = por %p102, %p103
    %p105 = scmp.ne.s32.totalorder %s94, %s97
    %p106 = scmp.eq.s32.totalorder %s14, 1
    %p107 = por %p105, %p106
    %p108 = scmp.ne.s32.totalorder %s97, %s98
    %p109 = scmp.eq.s32.totalorder %s14, 0
    %p110 = por %p108, %p109
    %p111 = scmp.ne.s32.totalorder %s97, %s98
    %p112 = scmp.eq.s32.totalorder %s15, 1
    %p113 = por %p111, %p112
    %p115 = scmp.ne.s32.totalorder %s98, %s114
    %p116 = scmp.eq.s32.totalorder %s15, 0
    %p117 = por %p115, %p116
    %s118 = ssub.s32 %s16, %s35
    %s119 = ssub.s32 %s17, %s31
    %s120 = sor.u32 %s118, %s119
    %p121 = scmp.eq.s32.totalorder %s120, 0
    %s123 = sadd.s32 %s122, 1
    %s124 = scalar_select %p121, %s122, %s123
    %p127 = pneg %p121
    %p128 = scmp.eq.s32.totalorder %s9, 1
    %p129 = por %p127, %p128
    %p130 = scmp.ne.s32.totalorder %s122, %s125
    %p131 = scmp.eq.s32.totalorder %s9, 0
    %p132 = por %p130, %p131
    %p133 = scmp.ne.s32.totalorder %s122, %s125
    %p134 = scmp.eq.s32.totalorder %s14, 1
    %p135 = por %p133, %p134
    %p136 = scmp.ne.s32.totalorder %s125, %s126
    %p137 = scmp.eq.s32.totalorder %s14, 0
    %p138 = por %p136, %p137
    %p139 = scmp.ne.s32.totalorder %s125, %s126
    %p140 = scmp.eq.s32.totalorder %s15, 1
    %p141 = por %p139, %p140
    %p143 = scmp.ne.s32.totalorder %s126, %s142
    %p144 = scmp.eq.s32.totalorder %s15, 0
    %p145 = por %p143, %p144
    %p146 = scmp.le.s32.totalorder 1, %s9
    %p147 = scmp.lt.s32.totalorder %s9, 3
    %p148 = pnand %p146, %p147
    %p149 = pneg %p148
    // Predicated region
    $region9: #{nlayer_discriminator_forward.15} parent=5 // pred_check
      _
    $region10: #{nlayer_discriminator_forward.15} parent=5 // pred_check_branch
      %151 = sbr.rel (%p148) target = $region12
    $region11: #{nlayer_discriminator_forward.15} parent=5 // pred_region
      %s152 = ssub.s32 %s9, 1
      // Predicated region
      $region13: #{nlayer_discriminator_forward.15} parent=11 // pred_check
        %p153 = pneg %p110
      $region14: #{nlayer_discriminator_forward.15} parent=11 // pred_check_branch
        %155 = sbr.rel (%p153) target = $region16
      $region15: #{nlayer_discriminator_forward.15} parent=11 // pred_region
        %p156 = scmp.lt.s32.totalorder %s20, 0
        %s157 = scalar_select %p156, %s20, 0
        %s158 = scalar_lea.vmem %s2, %s157
      $region16: #{nlayer_discriminator_forward.15} parent=11 // pred_fallthru
        _
    $region12: #{nlayer_discriminator_forward.15} parent=5 // pred_fallthru
      _
    %p159 = scmp.lt.s32.totalorder %s9, 2
    // Predicated region
    $region17: #{nlayer_discriminator_forward.15} parent=5 // pred_check
      %p160 = pneg %p159
    $region18: #{nlayer_discriminator_forward.15} parent=5 // pred_check_branch
      %162 = sbr.rel (%p160) target = $region20
    $region19: #{nlayer_discriminator_forward.15} parent=5 // pred_region
      // Predicated region
      $region21: #{nlayer_discriminator_forward.15} parent=19 // pred_check
        %p163 = pneg %p50
      $region22: #{nlayer_discriminator_forward.15} parent=19 // pred_check_branch
        %165 = sbr.rel (%p163) target = $region24
      $region23: #{nlayer_discriminator_forward.15} parent=19 // pred_region
        %s166 = smul.u32 4, %s18
        %p167 = scmp.lt.s32.totalorder %s16, 0
        %s168 = scalar_select %p167, %s16, 0
        %p169 = scmp.lt.s32.totalorder %s166, 7
        %s170 = scalar_select %p169, %s166, 7
        %s171 = smul.addr %s168, 8
        %s172 = sadd.s32 %s170, %s171
        %s173 = smul.addr %s172, 4
        %s174 = scalar_lea.vmem %s0, %s173
        %s175 = smul.u32 4, %s18
      $region24: #{nlayer_discriminator_forward.15} parent=19 // pred_fallthru
        _
      // Predicated region
      $region25: #{nlayer_discriminator_forward.15} parent=19 // pred_check
        %p176 = pneg %p78
      $region26: #{nlayer_discriminator_forward.15} parent=19 // pred_check_branch
        %178 = sbr.rel (%p176) target = $region28
      $region27: #{nlayer_discriminator_forward.15} parent=19 // pred_region
        %s179 = smul.u32 64, %s18
        %p180 = scmp.lt.s32.totalorder %s179, 127
        %s181 = scalar_select %p180, %s179, 127
        %p182 = scmp.lt.s32.totalorder %s17, 0
        %s183 = scalar_select %p182, %s17, 0
        %s184 = sadd.s32 %s183, %s181
        %s185 = smul.addr %s184, 4
        %s186 = scalar_lea.vmem %s1, %s185
        %s187 = smul.u32 64, %s18
      $region28: #{nlayer_discriminator_forward.15} parent=19 // pred_fallthru
        _
    $region20: #{nlayer_discriminator_forward.15} parent=5 // pred_fallthru
      _
    %p188 = scmp.le.s32.totalorder 1, %s9
    %p189 = scmp.lt.s32.totalorder %s9, 3
    %p190 = pnand %p188, %p189
    %p191 = pneg %p190
    // Predicated region
    $region29: #{nlayer_discriminator_forward.15} parent=5 // pred_check
      _
    $region30: #{nlayer_discriminator_forward.15} parent=5 // pred_check_branch
      %193 = sbr.rel (%p190) target = $region32
    $region31: #{nlayer_discriminator_forward.15} parent=5 // pred_region
      %s194 = ssub.s32 %s9, 1
      %s195 = smul.u32 4, %s21
      %p196 = scmp.lt.s32.totalorder %s19, 0
      %s197 = scalar_select %p196, %s19, 0
      %p198 = scmp.lt.s32.totalorder %s195, 7
      %s199 = scalar_select %p198, %s195, 7
      %s200 = smul.addr %s197, 8
      %s201 = sadd.s32 %s199, %s200
      %s202 = smul.addr %s201, 4
      %s203 = scalar_lea.vmem %s0, %s202
      %p204 = pneg %p56
      %p205 = pneg %p53
      %s206 = smul.u32 64, %s21
      %p207 = scmp.lt.s32.totalorder %s206, 127
      %s208 = scalar_select %p207, %s206, 127
      %p209 = scmp.lt.s32.totalorder %s20, 0
      %s210 = scalar_select %p209, %s20, 0
      %s211 = sadd.s32 %s210, %s208
      %s212 = smul.addr %s211, 4
      %s213 = scalar_lea.vmem %s1, %s212
      %p214 = pneg %p84
      %p215 = pneg %p81
      %p216 = scmp.lt.s32.totalorder %s20, 0
      %s217 = scalar_select %p216, %s20, 0
      %s218 = scalar_lea.vmem %s2, %s217
      %p219 = pneg %p110
      %p220 = pneg %p107
      %p221 = pneg %p138
      %p222 = pneg %p135
      %p223 = scmp.lt.s32.totalorder %s19, 0
      %s224 = scalar_select %p223, %s19, 0
      %p225 = scmp.lt.s32.totalorder %s20, 0
      %s226 = scalar_select %p225, %s20, 0
      %s227 = sadd.s32 %s226, %s224
      %s228 = smul.addr %s227, 8
      %s229 = scalar_lea.vmem %s3, %s228
      %s230 = smul.u32 4, %s21
      %p231 = scmp.lt.s32.totalorder %s19, 0
      %s232 = scalar_select %p231, %s19, 0
      %p233 = scmp.lt.s32.totalorder %s230, 7
      %s234 = scalar_select %p233, %s230, 7
      %s235 = smul.addr %s232, 8
      %s236 = sadd.s32 %s234, %s235
      %s237 = smul.addr %s236, 4
      %s238 = scalar_lea.vmem %s0, %s237
      %s239 = smul.u32 4, %s21
      %s240 = smul.u32 64, %s21
      %p241 = scmp.lt.s32.totalorder %s240, 127
      %s242 = scalar_select %p241, %s240, 127
      %p243 = scmp.lt.s32.totalorder %s20, 0
      %s244 = scalar_select %p243, %s20, 0
      %s245 = sadd.s32 %s244, %s242
      %s246 = smul.addr %s245, 4
      %s247 = scalar_lea.vmem %s1, %s246
      %s248 = smul.u32 64, %s21
      %p249 = scmp.lt.s32.totalorder %s20, 0
      %s250 = scalar_select %p249, %s20, 0
      %s251 = scalar_lea.vmem %s2, %s250
      %p252 = scmp.lt.s32.totalorder %s19, 0
      %s253 = scalar_select %p252, %s19, 0
      %p254 = scmp.lt.s32.totalorder %s20, 0
      %s255 = scalar_select %p254, %s20, 0
      %s256 = sadd.s32 %s255, %s253
      %s257 = smul.addr %s256, 8
      %s258 = scalar_lea.vmem %s3, %s257
      %p260 = scmp.eq.s32.totalorder %s21, 0
      // Predicated region
      $region33: #{nlayer_discriminator_forward.15} parent=31 // pred_check
        %p261 = pneg %p260
      $region34: #{nlayer_discriminator_forward.15} parent=31 // pred_check_branch
        %263 = sbr.rel (%p261) target = $region36
      $region35: #{nlayer_discriminator_forward.15} parent=31 // pred_region
        %264 = vst [vmem:[#allocation2] sm:$0xff] 0.0
      $region36: #{nlayer_discriminator_forward.15} parent=31 // pred_fallthru
        _
      %v265 = vld [vmem:[#allocation2] sm:$0xff]
      %v266 = vld [vmem:[%s238] sm:$0xff]
      %v267 = vld [vmem:[%s238 + $0x8] sm:$0xff]
      %v268 = vld [vmem:[%s247] sm:$0xf]
      %v269 = vld [vmem:[%s247 + $0x4] sm:$0xf]
      %v270 = vld [vmem:[%s247 + $0x8] sm:$0xf]
      %v271 = vld [vmem:[%s247 + $0xc] sm:$0xf]
      %v272 = vld [vmem:[%s247 + $0x10] sm:$0xf]
      %v273 = vld [vmem:[%s247 + $0x14] sm:$0xf]
      %v274 = vld [vmem:[%s247 + $0x18] sm:$0xf]
      %v275 = vld [vmem:[%s247 + $0x1c] sm:$0xf]
      %v276 = vld [vmem:[%s247 + $0x20] sm:$0xf]
      %v277 = vld [vmem:[%s247 + $0x24] sm:$0xf]
      %v278 = vld [vmem:[%s247 + $0x28] sm:$0xf]
      %v279 = vld [vmem:[%s247 + $0x2c] sm:$0xf]
      %v280 = vld [vmem:[%s247 + $0x30] sm:$0xf]
      %v281 = vld [vmem:[%s247 + $0x34] sm:$0xf]
      %v282 = vld [vmem:[%s247 + $0x38] sm:$0xf]
      %v283 = vld [vmem:[%s247 + $0x3c] sm:$0xf]
      %v284 = vld [vmem:[%s247 + $0x40] sm:$0xf]
      %v285 = vld [vmem:[%s247 + $0x44] sm:$0xf]
      %v286 = vld [vmem:[%s247 + $0x48] sm:$0xf]
      %v287 = vld [vmem:[%s247 + $0x4c] sm:$0xf]
      %v288 = vld [vmem:[%s247 + $0x50] sm:$0xf]
      %v289 = vld [vmem:[%s247 + $0x54] sm:$0xf]
      %v290 = vld [vmem:[%s247 + $0x58] sm:$0xf]
      %v291 = vld [vmem:[%s247 + $0x5c] sm:$0xf]
      %v292 = vld [vmem:[%s247 + $0x60] sm:$0xf]
      %v293 = vld [vmem:[%s247 + $0x64] sm:$0xf]
      %v294 = vld [vmem:[%s247 + $0x68] sm:$0xf]
      %v295 = vld [vmem:[%s247 + $0x6c] sm:$0xf]
      %v296 = vld [vmem:[%s247 + $0x70] sm:$0xf]
      %v297 = vld [vmem:[%s247 + $0x74] sm:$0xf]
      %v298 = vld [vmem:[%s247 + $0x78] sm:$0xf]
      %v299 = vld [vmem:[%s247 + $0x7c] sm:$0xf]
      %v300 = vld [vmem:[%s247 + $0x80] sm:$0xf]
      %v301 = vld [vmem:[%s247 + $0x84] sm:$0xf]
      %v302 = vld [vmem:[%s247 + $0x88] sm:$0xf]
      %v303 = vld [vmem:[%s247 + $0x8c] sm:$0xf]
      %v304 = vld [vmem:[%s247 + $0x90] sm:$0xf]
      %v305 = vld [vmem:[%s247 + $0x94] sm:$0xf]
      %v306 = vld [vmem:[%s247 + $0x98] sm:$0xf]
      %v307 = vld [vmem:[%s247 + $0x9c] sm:$0xf]
      %v308 = vld [vmem:[%s247 + $0xa0] sm:$0xf]
      %v309 = vld [vmem:[%s247 + $0xa4] sm:$0xf]
      %v310 = vld [vmem:[%s247 + $0xa8] sm:$0xf]
      %v311 = vld [vmem:[%s247 + $0xac] sm:$0xf]
      %v312 = vld [vmem:[%s247 + $0xb0] sm:$0xf]
      %v313 = vld [vmem:[%s247 + $0xb4] sm:$0xf]
      %v314 = vld [vmem:[%s247 + $0xb8] sm:$0xf]
      %v315 = vld [vmem:[%s247 + $0xbc] sm:$0xf]
      %v316 = vld [vmem:[%s247 + $0xc0] sm:$0xf]
      %v317 = vld [vmem:[%s247 + $0xc4] sm:$0xf]
      %v318 = vld [vmem:[%s247 + $0xc8] sm:$0xf]
      %v319 = vld [vmem:[%s247 + $0xcc] sm:$0xf]
      %v320 = vld [vmem:[%s247 + $0xd0] sm:$0xf]
      %v321 = vld [vmem:[%s247 + $0xd4] sm:$0xf]
      %v322 = vld [vmem:[%s247 + $0xd8] sm:$0xf]
      %v323 = vld [vmem:[%s247 + $0xdc] sm:$0xf]
      %v324 = vld [vmem:[%s247 + $0xe0] sm:$0xf]
      %v325 = vld [vmem:[%s247 + $0xe4] sm:$0xf]
      %v326 = vld [vmem:[%s247 + $0xe8] sm:$0xf]
      %v327 = vld [vmem:[%s247 + $0xec] sm:$0xf]
      %v328 = vld [vmem:[%s247 + $0xf0] sm:$0xf]
      %v329 = vld [vmem:[%s247 + $0xf4] sm:$0xf]
      %v330 = vld [vmem:[%s247 + $0xf8] sm:$0xf]
      %v331 = vld [vmem:[%s247 + $0xfc] sm:$0xf]
      %v334 = vunpack.c.l.b16 %v266
      %v335 = vunpack.c.h.b16 %v266
      %v336 = vunpack.c.l.b16 %v267
      %v337 = vunpack.c.h.b16 %v267
      %v338 = vpack.c.b16 %v334, %v334
      %v339 = vpack.c.b16 %v335, %v335
      %v340 = vpack.c.b16 %v336, %v336
      %v341 = vpack.c.b16 %v337, %v337
      %v410 = vunpack.c.l.b16 %v268
      %v411 = vunpack.c.l.b16 %v269
      %v412 = vunpack.c.l.b16 %v270
      %v413 = vunpack.c.l.b16 %v271
      %v414 = vunpack.c.l.b16 %v272
      %v415 = vunpack.c.l.b16 %v273
      %v416 = vunpack.c.l.b16 %v274
      %v417 = vunpack.c.l.b16 %v275
      %v418 = vunpack.c.l.b16 %v276
      %v419 = vunpack.c.l.b16 %v277
      %v420 = vunpack.c.l.b16 %v278
      %v421 = vunpack.c.l.b16 %v279
      %v422 = vunpack.c.l.b16 %v280
      %v423 = vunpack.c.l.b16 %v281
      %v424 = vunpack.c.l.b16 %v282
      %v425 = vunpack.c.l.b16 %v283
      %v426 = vunpack.c.l.b16 %v284
      %v427 = vunpack.c.l.b16 %v285
      %v428 = vunpack.c.l.b16 %v286
      %v429 = vunpack.c.l.b16 %v287
      %v430 = vunpack.c.l.b16 %v288
      %v431 = vunpack.c.l.b16 %v289
      %v432 = vunpack.c.l.b16 %v290
      %v433 = vunpack.c.l.b16 %v291
      %v434 = vunpack.c.l.b16 %v292
      %v435 = vunpack.c.l.b16 %v293
      %v436 = vunpack.c.l.b16 %v294
      %v437 = vunpack.c.l.b16 %v295
      %v438 = vunpack.c.l.b16 %v296
      %v439 = vunpack.c.l.b16 %v297
      %v440 = vunpack.c.l.b16 %v298
      %v441 = vunpack.c.l.b16 %v299
      %v442 = vunpack.c.l.b16 %v300
      %v443 = vunpack.c.l.b16 %v301
      %v444 = vunpack.c.l.b16 %v302
      %v445 = vunpack.c.l.b16 %v303
      %v446 = vunpack.c.l.b16 %v304
      %v447 = vunpack.c.l.b16 %v305
      %v448 = vunpack.c.l.b16 %v306
      %v449 = vunpack.c.l.b16 %v307
      %v450 = vunpack.c.l.b16 %v308
      %v451 = vunpack.c.l.b16 %v309
      %v452 = vunpack.c.l.b16 %v310
      %v453 = vunpack.c.l.b16 %v311
      %v454 = vunpack.c.l.b16 %v312
      %v455 = vunpack.c.l.b16 %v313
      %v456 = vunpack.c.l.b16 %v314
      %v457 = vunpack.c.l.b16 %v315
      %v458 = vunpack.c.l.b16 %v316
      %v459 = vunpack.c.l.b16 %v317
      %v460 = vunpack.c.l.b16 %v318
      %v461 = vunpack.c.l.b16 %v319
      %v462 = vunpack.c.l.b16 %v320
      %v463 = vunpack.c.l.b16 %v321
      %v464 = vunpack.c.l.b16 %v322
      %v465 = vunpack.c.l.b16 %v323
      %v466 = vunpack.c.l.b16 %v324
      %v467 = vunpack.c.l.b16 %v325
      %v468 = vunpack.c.l.b16 %v326
      %v469 = vunpack.c.l.b16 %v327
      %v470 = vunpack.c.l.b16 %v328
      %v471 = vunpack.c.l.b16 %v329
      %v472 = vunpack.c.l.b16 %v330
      %v473 = vunpack.c.l.b16 %v331
      %v474 = vpack.c.b16 %v411, %v410
      %v475 = vpack.c.b16 %v413, %v412
      %v476 = vpack.c.b16 %v415, %v414
      %v477 = vpack.c.b16 %v417, %v416
      %v478 = vpack.c.b16 %v419, %v418
      %v479 = vpack.c.b16 %v421, %v420
      %v480 = vpack.c.b16 %v423, %v422
      %v481 = vpack.c.b16 %v425, %v424
      %v482 = vpack.c.b16 %v427, %v426
      %v483 = vpack.c.b16 %v429, %v428
      %v484 = vpack.c.b16 %v431, %v430
      %v485 = vpack.c.b16 %v433, %v432
      %v486 = vpack.c.b16 %v435, %v434
      %v487 = vpack.c.b16 %v437, %v436
      %v488 = vpack.c.b16 %v439, %v438
      %v489 = vpack.c.b16 %v441, %v440
      %v490 = vpack.c.b16 %v443, %v442
      %v491 = vpack.c.b16 %v445, %v444
      %v492 = vpack.c.b16 %v447, %v446
      %v493 = vpack.c.b16 %v449, %v448
      %v494 = vpack.c.b16 %v451, %v450
      %v495 = vpack.c.b16 %v453, %v452
      %v496 = vpack.c.b16 %v455, %v454
      %v497 = vpack.c.b16 %v457, %v456
      %v498 = vpack.c.b16 %v459, %v458
      %v499 = vpack.c.b16 %v461, %v460
      %v500 = vpack.c.b16 %v463, %v462
      %v501 = vpack.c.b16 %v465, %v464
      %v502 = vpack.c.b16 %v467, %v466
      %v503 = vpack.c.b16 %v469, %v468
      %v504 = vpack.c.b16 %v471, %v470
      %v505 = vpack.c.b16 %v473, %v472
      %538 = vmatprep.subr.bf16.mxu0 0
      %539 = vmatpush1.bf16.msra.mxu0 %v481
      %540 = vmatprep.subr.bf16.mxu0 0
      %541 = vmatpush1.bf16.msra.mxu0 %v480
      %542 = vmatprep.subr.bf16.mxu0 0
      %543 = vmatpush1.bf16.msra.mxu0 %v479
      %544 = vmatprep.subr.bf16.mxu0 0
      %545 = vmatpush1.bf16.msra.mxu0 %v478
      %546 = vmatprep.subr.bf16.mxu0 0
      %547 = vmatpush1.bf16.msra.mxu0 %v477
      %548 = vmatprep.subr.bf16.mxu0 0
      %549 = vmatpush1.bf16.msra.mxu0 %v476
      %550 = vmatprep.subr.bf16.mxu0 0
      %551 = vmatpush1.bf16.msra.mxu0 %v475
      %552 = vmatprep.subr.bf16.mxu0 0
      %553 = vmatpush1.bf16.msra.mxu0 %v474
      %554 = vmatprep.subr.bf16.mxu0 0
      %555 = vmatpush2.bf16.msra.mxu0 %v489
      %556 = vmatprep.subr.bf16.mxu0 0
      %557 = vmatpush2.bf16.msra.mxu0 %v488
      %558 = vmatprep.subr.bf16.mxu0 0
      %559 = vmatpush2.bf16.msra.mxu0 %v487
      %560 = vmatprep.subr.bf16.mxu0 0
      %561 = vmatpush2.bf16.msra.mxu0 %v486
      %562 = vmatprep.subr.bf16.mxu0 0
      %563 = vmatpush2.bf16.msra.mxu0 %v485
      %564 = vmatprep.subr.bf16.mxu0 0
      %565 = vmatpush2.bf16.msra.mxu0 %v484
      %566 = vmatprep.subr.bf16.mxu0 0
      %567 = vmatpush2.bf16.msra.mxu0 %v483
      %568 = vmatprep.subr.bf16.mxu0 0
      %569 = vmatpush2.bf16.msra.mxu0 %v482
      %570 = vmatprep.mubr.bf16.mxu0 %v339
      %571 = vmatmul.mubr.bf16.gmra.mxu0 %v338
      %v572 = vpop.f32.mrf.mxu0
      %v573 = vadd.f32 0.0, %v572
      %v574 = vpop.f32.mrf.mxu0
      %v575 = vpop.f32.mrf.mxu0
      %v576 = vpop.f32.mrf.mxu0
      %577 = vdwg.mxu0
      %578 = vmatprep.subr.bf16.mxu0 0
      %579 = vmatpush1.bf16.msra.mxu0 %v497
      %580 = vmatprep.subr.bf16.mxu0 0
      %581 = vmatpush1.bf16.msra.mxu0 %v496
      %582 = vmatprep.subr.bf16.mxu0 0
      %583 = vmatpush1.bf16.msra.mxu0 %v495
      %584 = vmatprep.subr.bf16.mxu0 0
      %585 = vmatpush1.bf16.msra.mxu0 %v494
      %586 = vmatprep.subr.bf16.mxu0 0
      %587 = vmatpush1.bf16.msra.mxu0 %v493
      %588 = vmatprep.subr.bf16.mxu0 0
      %589 = vmatpush1.bf16.msra.mxu0 %v492
      %590 = vmatprep.subr.bf16.mxu0 0
      %591 = vmatpush1.bf16.msra.mxu0 %v491
      %592 = vmatprep.subr.bf16.mxu0 0
      %593 = vmatpush1.bf16.msra.mxu0 %v490
      %594 = vmatprep.subr.bf16.mxu0 0
      %595 = vmatpush2.bf16.msra.mxu0 %v505
      %596 = vmatprep.subr.bf16.mxu0 0
      %597 = vmatpush2.bf16.msra.mxu0 %v504
      %598 = vmatprep.subr.bf16.mxu0 0
      %599 = vmatpush2.bf16.msra.mxu0 %v503
      %600 = vmatprep.subr.bf16.mxu0 0
      %601 = vmatpush2.bf16.msra.mxu0 %v502
      %602 = vmatprep.subr.bf16.mxu0 0
      %603 = vmatpush2.bf16.msra.mxu0 %v501
      %604 = vmatprep.subr.bf16.mxu0 0
      %605 = vmatpush2.bf16.msra.mxu0 %v500
      %606 = vmatprep.subr.bf16.mxu0 0
      %607 = vmatpush2.bf16.msra.mxu0 %v499
      %608 = vmatprep.subr.bf16.mxu0 0
      %609 = vmatpush2.bf16.msra.mxu0 %v498
      %610 = vmatprep.mubr.bf16.mxu0 %v341
      %611 = vmatmul.mubr.bf16.gmra.mxu0 %v340
      %v612 = vpop.f32.mrf.mxu0
      %v613 = vadd.f32 %v573, %v612
      %v614 = vpop.f32.mrf.mxu0
      %v615 = vpop.f32.mrf.mxu0
      %v616 = vpop.f32.mrf.mxu0
      %617 = vdwg.mxu0
      %v618 = vadd.f32 %v265, %v613
      %619 = vst [vmem:[#allocation2] sm:$0xff] %v618
      %p620 = scmp.eq.s32.totalorder %s21, 1
      // Predicated region
      $region37: #{nlayer_discriminator_forward.15} parent=31 // pred_check
        %p621 = pneg %p620
      $region38: #{nlayer_discriminator_forward.15} parent=31 // pred_check_branch
        %623 = sbr.rel (%p621) target = $region40
      $region39: #{nlayer_discriminator_forward.15} parent=31 // pred_region
        %v624 = vld [vmem:[#allocation2] sm:$0xff]
        %v625 = vld [vmem:[%s251] sm:$0x1]
        %v627 = vlaneseq
        %v628 = vshrl.u32 %v627, 7
        %v629 = vsub.s32 0, %v628
        %v630 = vrot.slane %v625, %v629
        %v632 = vadd.f32 %v624, %v630
        %633 = vst [vmem:[%s258] sm:$0xff] %v632
      $region40: #{nlayer_discriminator_forward.15} parent=31 // pred_fallthru
        _
      %p634 = scmp.lt.s32.totalorder %s19, 0
      %s635 = scalar_select %p634, %s19, 0
      %p636 = scmp.lt.s32.totalorder %s20, 0
      %s637 = scalar_select %p636, %s20, 0
      %s638 = sadd.s32 %s637, %s635
      %s639 = smul.addr %s638, 8
      %s640 = scalar_lea.vmem %s3, %s639
      // Predicated region
      $region41: #{nlayer_discriminator_forward.15} parent=31 // pred_check
        %p641 = pneg %p135
      $region42: #{nlayer_discriminator_forward.15} parent=31 // pred_check_branch
        %643 = sbr.rel (%p641) target = $region44
      $region43: #{nlayer_discriminator_forward.15} parent=31 // pred_region
        _
      $region44: #{nlayer_discriminator_forward.15} parent=31 // pred_fallthru
        _
      // Predicated region
      $region45: #{nlayer_discriminator_forward.15} parent=31 // pred_check
        %p644 = pneg %p135
      $region46: #{nlayer_discriminator_forward.15} parent=31 // pred_check_branch
        %646 = sbr.rel (%p644) target = $region48
      $region47: #{nlayer_discriminator_forward.15} parent=31 // pred_region
        %p647 = scmp.lt.s32.totalorder %s19, 0
        %s648 = scalar_select %p647, %s19, 0
        %p649 = scmp.lt.s32.totalorder %s20, 0
        %s650 = scalar_select %p649, %s20, 0
        %s651 = sadd.s32 %s650, %s648
        %s652 = smul.addr %s651, 8
        %s653 = scalar_lea.vmem %s3, %s652
      $region48: #{nlayer_discriminator_forward.15} parent=31 // pred_fallthru
        _
    $region32: #{nlayer_discriminator_forward.15} parent=5 // pred_fallthru
      _
    %p654 = scmp.le.s32.totalorder 2, %s9
    // Predicated region
    $region49: #{nlayer_discriminator_forward.15} parent=5 // pred_check
      %p655 = pneg %p654
    $region50: #{nlayer_discriminator_forward.15} parent=5 // pred_check_branch
      %657 = sbr.rel (%p655) target = $region52
    $region51: #{nlayer_discriminator_forward.15} parent=5 // pred_region
      %s658 = ssub.s32 %s9, 2
    $region52: #{nlayer_discriminator_forward.15} parent=5 // pred_fallthru
      _
  $region6: #{nlayer_discriminator_forward.15} parent=0 // loop_footer
    %s13 = sadd.s32 1, %s9
  $region7: #{nlayer_discriminator_forward.15} parent=0 // loop_footer_branch
    %8 = sbr.rel target = $region3
  $region8: #{nlayer_discriminator_forward.15} parent=0 // loop_exit
    _

</llo_original>
